<compile_context>
chip_gen: v6e
topology: v6e:2x2x1
jax: 0.10.0
libtpu: 0.0.40
codegen_flags: <defaults>
</compile_context>

<pallas_src>
import functools

import jax
import jax.numpy as jnp
from jax.experimental import pallas as pl
from jax.experimental.pallas import tpu as pltpu


# Padded (lane-aligned) dims used inside the kernel.
H1P = 768    # 684 -> 768  (6 x 128)
H2 = 512
H3 = 256
H4P = 128    # 64  -> 128
LP = 128     # latent padded to one full lane tile
AP = 128     # airfoil output padded to one full lane tile


# ----------------------------------------------------------------------------
# Pallas kernel: full VAE forward (encoder + reparam sample + decoder)
# ----------------------------------------------------------------------------
def vae_forward_kernel(
    # inputs (per batch tile)
    x_ref, eps_ref,
    # encoder params (W as bf16 [in, out], b as f32 [1, out]); heads fused
    ew1, eb1, ew2, eb2, ew3, eb3, ew4, eb4, ewh, ebh,
    # decoder params
    dw1, db1, dw2, db2, dw3, db3, dw4, db4,
    # outputs
    recon_ref, mlv_ref,
):
    def linear(h, w_ref, b_ref):
        # bf16 operands on the MXU, f32 accumulation, f32 bias add.
        return (
            jnp.dot(h.astype(w_ref.dtype), w_ref[...],
                    preferred_element_type=jnp.float32)
            + b_ref[...]
        )

    relu = lambda v: jnp.maximum(v, 0.0)

    x = x_ref[...]                           # [TB, A]

    # ---------------- Encoder ----------------
    h = relu(linear(x, ew1, eb1))            # [TB, 768]
    h = relu(linear(h, ew2, eb2))            # [TB, 512]
    h = relu(linear(h, ew3, eb3))            # [TB, 256]
    h = relu(linear(h, ew4, eb4))            # [TB, 128]

    # Fused M / logvar head: one matmul -> [TB, 2*LP]; each head occupies a
    # full 128-lane tile, so the split below is a free lane-tile slice.
    mlv = linear(h, ewh, ebh)                # [TB, 256]
    lp = mlv.shape[-1] // 2
    m = mlv[:, :lp]                          # [TB, 128] (true latent in [:L])
    logvar = mlv[:, lp:]                     # [TB, 128]

    # ---------------- Reparameterization ----------------
    # z = M + exp(logvar / 2) * eps   (eps ~ N(0,1), host-supplied, zero in
    # the padded lanes so z's padded lanes stay exactly 0).
    std = jnp.exp(logvar * 0.5)
    z = m + std * eps_ref[...]               # [TB, 128]

    # ---------------- Decoder ----------------
    d = relu(linear(z, dw1, db1))            # [TB, 768]
    d = relu(linear(d, dw2, db2))            # [TB, 512]
    d = relu(linear(d, dw3, db3))            # [TB, 256]
    recon = jnp.tanh(linear(d, dw4, db4))    # [TB, 128] (true recon in [:A])

    recon_ref[...] = recon.astype(recon_ref.dtype)
    mlv_ref[...] = mlv.astype(mlv_ref.dtype)


# ----------------------------------------------------------------------------
# Parameter construction (deterministic, PyTorch-style uniform init)
# ----------------------------------------------------------------------------
def _linear_params(key, in_dim, out_dim):
    """Return (W[in,out], b[1,out]) with U(-1/sqrt(in), 1/sqrt(in)) init."""
    kw, kb = jax.random.split(key)
    bound = 1.0 / jnp.sqrt(jnp.float32(in_dim))
    w = jax.random.uniform(kw, (in_dim, out_dim), jnp.float32, -bound, bound)
    b = jax.random.uniform(kb, (1, out_dim), jnp.float32, -bound, bound)
    return w, b


def make_vae_params(key, airfoil_dim, latent_dim):
    """True-dim f32 parameters, same layout as the PyTorch module."""
    dims_enc = [
        (airfoil_dim, 684), (684, 512), (512, 256), (256, 64),
        (64, latent_dim), (64, latent_dim),
    ]
    dims_dec = [(latent_dim, 684), (684, 512), (512, 256), (256, airfoil_dim)]
    keys = jax.random.split(key, len(dims_enc) + len(dims_dec))
    params = []
    for k, (i, o) in zip(keys, dims_enc + dims_dec):
        params.extend(_linear_params(k, i, o))
    return params  # flat list: W, b, W, b, ...


def _pad2(a, rows, cols):
    out = jnp.zeros((rows, cols), a.dtype)
    return out.at[: a.shape[0], : a.shape[1]].set(a)


def prepare_kernel_params(params, airfoil_dim, latent_dim):
    """Zero-pad to lane-aligned shapes, fuse the two heads, cast W to bf16."""
    (ew1, eb1, ew2, eb2, ew3, eb3, ew4, eb4, ewm, ebm, ewv, ebv,
     dw1, db1, dw2, db2, dw3, db3, dw4, db4) = params
    bf16 = jnp.bfloat16

    kp = []
    # encoder
    kp += [_pad2(ew1, airfoil_dim, H1P).astype(bf16), _pad2(eb1, 1, H1P)]
    kp += [_pad2(ew2, H1P, H2).astype(bf16), eb2]
    kp += [ew3.astype(bf16), eb3]
    kp += [_pad2(ew4, H3, H4P).astype(bf16), _pad2(eb4, 1, H4P)]
    # fused heads: [H4P, 2*LP]; M in lanes [0:latent), logvar in [LP:LP+latent)
    wh = jnp.zeros((H4P, 2 * LP), jnp.float32)
    wh = wh.at[:ewm.shape[0], :latent_dim].set(ewm)
    wh = wh.at[:ewv.shape[0], LP:LP + latent_dim].set(ewv)
    bh = jnp.zeros((1, 2 * LP), jnp.float32)
    bh = bh.at[:, :latent_dim].set(ebm[0])
    bh = bh.at[:, LP:LP + latent_dim].set(ebv[0])
    kp += [wh.astype(bf16), bh]
    # decoder
    kp += [_pad2(dw1, LP, H1P).astype(bf16), _pad2(db1, 1, H1P)]
    kp += [_pad2(dw2, H1P, H2).astype(bf16), db2]
    kp += [dw3.astype(bf16), db3]
    kp += [_pad2(dw4, H3, AP).astype(bf16), _pad2(db4, 1, AP)]
    return tuple(kp)


# ----------------------------------------------------------------------------
# Wrapper
# ----------------------------------------------------------------------------
def _round_up(n, m):
    return ((n + m - 1) // m) * m


@functools.partial(
    jax.jit, static_argnames=("airfoil_dim", "latent_dim", "block_batch")
)
def vae_forward(x, eps, kparams, *, airfoil_dim, latent_dim, block_batch=128):
    batch = x.shape[0]
    tb = min(block_batch, _round_up(batch, 8))
    bp = _round_up(batch, tb)
    grid = bp // tb

    # Pad batch rows (zeros) and widen eps to the padded latent lane tile.
    if bp != batch:
        x = jnp.pad(x, ((0, bp - batch), (0, 0)))
    eps_p = jnp.pad(eps, ((0, bp - batch), (0, LP - latent_dim)))

    # Activations/outputs are tiled along batch; weights/biases get a
    # constant index_map so they stay resident in VMEM across grid steps.
    act_spec = lambda d: pl.BlockSpec((tb, d), lambda i: (i, 0))
    in_specs = [act_spec(airfoil_dim), act_spec(LP)] + [
        pl.BlockSpec(p.shape, lambda i: (0, 0)) for p in kparams
    ]
    out_specs = (act_spec(AP), act_spec(2 * LP))
    out_shapes = (
        jax.ShapeDtypeStruct((bp, AP), jnp.float32),      # padded reconstruction
        jax.ShapeDtypeStruct((bp, 2 * LP), jnp.float32),  # padded [M | logvar]
    )

    # Advisory cost estimate (padded matmul dims).
    layer_dims = [
        (airfoil_dim, H1P), (H1P, H2), (H2, H3), (H3, H4P), (H4P, 2 * LP),
        (LP, H1P), (H1P, H2), (H2, H3), (H3, AP),
    ]
    flops = 2 * bp * sum(i * o for i, o in layer_dims)
    transcendentals = bp * (LP + AP)  # exp for std, tanh for recon
    wbytes = sum(int(p.size) * p.dtype.itemsize for p in kparams)
    io_bytes = 4 * bp * (airfoil_dim + LP + AP + 2 * LP)
    cost = pl.CostEstimate(
        flops=flops, transcendentals=transcendentals,
        bytes_accessed=wbytes + io_bytes,
    )

    recon_p, mlv_p = pl.pallas_call(
        vae_forward_kernel,
        out_shape=out_shapes,
        grid_spec=pltpu.PrefetchScalarGridSpec(
            num_scalar_prefetch=0,
            grid=(grid,),
            in_specs=in_specs,
            out_specs=out_specs,
        ),
        compiler_params=pltpu.CompilerParams(
            dimension_semantics=("parallel",),
            vmem_limit_bytes=32 << 20,
        ),
        cost_estimate=cost,
    )(x, eps_p, *kparams)

    recon = recon_p[:batch, :airfoil_dim]
    m = mlv_p[:batch, :latent_dim]
    logvar = mlv_p[:batch, LP:LP + latent_dim]
    return recon, m, logvar


# ----------------------------------------------------------------------------
# Pure-JAX reference (mirrors the kernel math on the padded bf16 params)
# ----------------------------------------------------------------------------
def vae_forward_ref(x, eps, kparams, *, airfoil_dim, latent_dim):
    (ew1, eb1, ew2, eb2, ew3, eb3, ew4, eb4, ewh, ebh,
     dw1, db1, dw2, db2, dw3, db3, dw4, db4) = kparams

    def lin(h, w, b):
        return jnp.dot(h.astype(w.dtype), w,
                       preferred_element_type=jnp.float32) + b

    relu = lambda v: jnp.maximum(v, 0.0)
    eps_p = jnp.pad(eps, ((0, 0), (0, LP - latent_dim)))

    h = relu(lin(x, ew1, eb1))
    h = relu(lin(h, ew2, eb2))
    h = relu(lin(h, ew3, eb3))
    h = relu(lin(h, ew4, eb4))
    mlv = lin(h, ewh, ebh)
    m, logvar = mlv[:, :LP], mlv[:, LP:]
    z = m + jnp.exp(logvar * 0.5) * eps_p
    d = relu(lin(z, dw1, db1))
    d = relu(lin(d, dw2, db2))
    d = relu(lin(d, dw3, db3))
    recon = jnp.tanh(lin(d, dw4, db4))
    return recon[:, :airfoil_dim], m[:, :latent_dim], logvar[:, :latent_dim]


if __name__ == "__main__":
    AIRFOIL_DIM = 32   # flattened airfoil coordinates (kept small for the demo)
    LATENT_DIM = 16
    BATCH = 64
    BLOCK_BATCH = 32   # -> grid of 2 batch tiles, exercises the pipeline

    key = jax.random.PRNGKey(0)
    k_params, k_x, k_eps = jax.random.split(key, 3)

    params = make_vae_params(k_params, AIRFOIL_DIM, LATENT_DIM)
    kparams = prepare_kernel_params(params, AIRFOIL_DIM, LATENT_DIM)

    x = jax.random.normal(k_x, (BATCH, AIRFOIL_DIM), jnp.float32)
    # torch.randn_like(std) equivalent, drawn host-side and fed to the kernel
    # TODO(synk): in-kernel pltpu.prng_* sampling could replace host-side eps.
    eps = jax.random.normal(k_eps, (BATCH, LATENT_DIM), jnp.float32)

    recon, M, logvar = vae_forward(
        x, eps, kparams,
        airfoil_dim=AIRFOIL_DIM, latent_dim=LATENT_DIM, block_batch=BLOCK_BATCH,
    )
    jax.block_until_ready((recon, M, logvar))

    r_ref, m_ref, lv_ref = vae_forward_ref(
        x, eps, kparams, airfoil_dim=AIRFOIL_DIM, latent_dim=LATENT_DIM
    )

    assert recon.shape == (BATCH, AIRFOIL_DIM)
    assert M.shape == (BATCH, LATENT_DIM) and logvar.shape == (BATCH, LATENT_DIM)
    assert jnp.allclose(recon, r_ref, atol=5e-3, rtol=5e-3)
    assert jnp.allclose(M, m_ref, atol=5e-3, rtol=5e-3)
    assert jnp.allclose(logvar, lv_ref, atol=5e-3, rtol=5e-3)

    print("KERNEL_OK")
</pallas_src>

<mosaic_0001>
module attributes {stable_mosaic.version = 11 : i64} {
  func.func @vae_forward_kernel(%arg0: i32, %arg1: memref<32x32xf32, #tpu.memory_space<vmem>>, %arg2: memref<32x128xf32, #tpu.memory_space<vmem>>, %arg3: memref<32x768xbf16, #tpu.memory_space<vmem>>, %arg4: memref<1x768xf32, #tpu.memory_space<vmem>>, %arg5: memref<768x512xbf16, #tpu.memory_space<vmem>>, %arg6: memref<1x512xf32, #tpu.memory_space<vmem>>, %arg7: memref<512x256xbf16, #tpu.memory_space<vmem>>, %arg8: memref<1x256xf32, #tpu.memory_space<vmem>>, %arg9: memref<256x128xbf16, #tpu.memory_space<vmem>>, %arg10: memref<1x128xf32, #tpu.memory_space<vmem>>, %arg11: memref<128x256xbf16, #tpu.memory_space<vmem>>, %arg12: memref<1x256xf32, #tpu.memory_space<vmem>>, %arg13: memref<128x768xbf16, #tpu.memory_space<vmem>>, %arg14: memref<1x768xf32, #tpu.memory_space<vmem>>, %arg15: memref<768x512xbf16, #tpu.memory_space<vmem>>, %arg16: memref<1x512xf32, #tpu.memory_space<vmem>>, %arg17: memref<512x256xbf16, #tpu.memory_space<vmem>>, %arg18: memref<1x256xf32, #tpu.memory_space<vmem>>, %arg19: memref<256x128xbf16, #tpu.memory_space<vmem>>, %arg20: memref<1x128xf32, #tpu.memory_space<vmem>>, %arg21: memref<32x128xf32, #tpu.memory_space<vmem>>, %arg22: memref<32x256xf32, #tpu.memory_space<vmem>>) attributes {dimension_semantics = [#tpu.dimension_semantics<parallel>], iteration_bounds = array<i64: 2>, scalar_prefetch = 0 : i64, scratch_operands = 0 : i64, tpu.core_type = #tpu.core_type<tc>, window_params = [{transform_indices = @transform_0, window_bounds = array<i64: 32, 32>}, {transform_indices = @transform_1, window_bounds = array<i64: 32, 128>}, {pipeline_mode = #tpu.pipeline_mode<synchronous>, transform_indices = @transform_2, window_bounds = array<i64: 32, 768>}, {pipeline_mode = #tpu.pipeline_mode<synchronous>, transform_indices = @transform_3, window_bounds = array<i64: 1, 768>}, {pipeline_mode = #tpu.pipeline_mode<synchronous>, transform_indices = @transform_4, window_bounds = array<i64: 768, 512>}, {pipeline_mode = #tpu.pipeline_mode<synchronous>, transform_indices = @transform_5, window_bounds = array<i64: 1, 512>}, {pipeline_mode = #tpu.pipeline_mode<synchronous>, transform_indices = @transform_6, window_bounds = array<i64: 512, 256>}, {pipeline_mode = #tpu.pipeline_mode<synchronous>, transform_indices = @transform_7, window_bounds = array<i64: 1, 256>}, {pipeline_mode = #tpu.pipeline_mode<synchronous>, transform_indices = @transform_8, window_bounds = array<i64: 256, 128>}, {pipeline_mode = #tpu.pipeline_mode<synchronous>, transform_indices = @transform_9, window_bounds = array<i64: 1, 128>}, {pipeline_mode = #tpu.pipeline_mode<synchronous>, transform_indices = @transform_10, window_bounds = array<i64: 128, 256>}, {pipeline_mode = #tpu.pipeline_mode<synchronous>, transform_indices = @transform_11, window_bounds = array<i64: 1, 256>}, {pipeline_mode = #tpu.pipeline_mode<synchronous>, transform_indices = @transform_12, window_bounds = array<i64: 128, 768>}, {pipeline_mode = #tpu.pipeline_mode<synchronous>, transform_indices = @transform_13, window_bounds = array<i64: 1, 768>}, {pipeline_mode = #tpu.pipeline_mode<synchronous>, transform_indices = @transform_14, window_bounds = array<i64: 768, 512>}, {pipeline_mode = #tpu.pipeline_mode<synchronous>, transform_indices = @transform_15, window_bounds = array<i64: 1, 512>}, {pipeline_mode = #tpu.pipeline_mode<synchronous>, transform_indices = @transform_16, window_bounds = array<i64: 512, 256>}, {pipeline_mode = #tpu.pipeline_mode<synchronous>, transform_indices = @transform_17, window_bounds = array<i64: 1, 256>}, {pipeline_mode = #tpu.pipeline_mode<synchronous>, transform_indices = @transform_18, window_bounds = array<i64: 256, 128>}, {pipeline_mode = #tpu.pipeline_mode<synchronous>, transform_indices = @transform_19, window_bounds = array<i64: 1, 128>}, {transform_indices = @transform_20, window_bounds = array<i64: 32, 128>}, {transform_indices = @transform_21, window_bounds = array<i64: 32, 256>}]} {
    %c0 = arith.constant 0 : index
    %c0_0 = arith.constant 0 : index
    %0 = vector.load %arg1[%c0, %c0_0] : memref<32x32xf32, #tpu.memory_space<vmem>>, vector<32x32xf32>
    %1 = arith.truncf %0 : vector<32x32xf32> to vector<32x32xbf16>
    %c0_1 = arith.constant 0 : index
    %c0_2 = arith.constant 0 : index
    %2 = vector.load %arg3[%c0_1, %c0_2] : memref<32x768xbf16, #tpu.memory_space<vmem>>, vector<32x768xbf16>
    %cst = arith.constant dense<0.000000e+00> : vector<32x768xf32>
    %3 = tpu.matmul %1, %2, %cst {dimension_numbers = #tpu.dot_dimension_numbers<[1], [0], [0], [1], [0, 0, 1, 1], [], []>} : vector<32x32xbf16>, vector<32x768xbf16>, vector<32x768xf32> -> vector<32x768xf32>
    %c0_3 = arith.constant 0 : index
    %c0_4 = arith.constant 0 : index
    %4 = vector.load %arg4[%c0_3, %c0_4] : memref<1x768xf32, #tpu.memory_space<vmem>>, vector<1x768xf32>
    %5 = vector.broadcast %4 : vector<1x768xf32> to vector<32x768xf32>
    %6 = arith.addf %3, %5 : vector<32x768xf32>
    %cst_5 = arith.constant 0.000000e+00 : f32
    %7 = vector.broadcast %cst_5 : f32 to vector<32x768xf32>
    %8 = arith.maximumf %6, %7 : vector<32x768xf32>
    %9 = arith.truncf %8 : vector<32x768xf32> to vector<32x768xbf16>
    %c0_6 = arith.constant 0 : index
    %c0_7 = arith.constant 0 : index
    %10 = vector.load %arg5[%c0_6, %c0_7] : memref<768x512xbf16, #tpu.memory_space<vmem>>, vector<768x512xbf16>
    %cst_8 = arith.constant dense<0.000000e+00> : vector<32x512xf32>
    %11 = tpu.matmul %9, %10, %cst_8 {dimension_numbers = #tpu.dot_dimension_numbers<[1], [0], [0], [1], [0, 0, 1, 1], [], []>} : vector<32x768xbf16>, vector<768x512xbf16>, vector<32x512xf32> -> vector<32x512xf32>
    %c0_9 = arith.constant 0 : index
    %c0_10 = arith.constant 0 : index
    %12 = vector.load %arg6[%c0_9, %c0_10] : memref<1x512xf32, #tpu.memory_space<vmem>>, vector<1x512xf32>
    %13 = vector.broadcast %12 : vector<1x512xf32> to vector<32x512xf32>
    %14 = arith.addf %11, %13 : vector<32x512xf32>
    %cst_11 = arith.constant 0.000000e+00 : f32
    %15 = vector.broadcast %cst_11 : f32 to vector<32x512xf32>
    %16 = arith.maximumf %14, %15 : vector<32x512xf32>
    %17 = arith.truncf %16 : vector<32x512xf32> to vector<32x512xbf16>
    %c0_12 = arith.constant 0 : index
    %c0_13 = arith.constant 0 : index
    %18 = vector.load %arg7[%c0_12, %c0_13] : memref<512x256xbf16, #tpu.memory_space<vmem>>, vector<512x256xbf16>
    %cst_14 = arith.constant dense<0.000000e+00> : vector<32x256xf32>
    %19 = tpu.matmul %17, %18, %cst_14 {dimension_numbers = #tpu.dot_dimension_numbers<[1], [0], [0], [1], [0, 0, 1, 1], [], []>} : vector<32x512xbf16>, vector<512x256xbf16>, vector<32x256xf32> -> vector<32x256xf32>
    %c0_15 = arith.constant 0 : index
    %c0_16 = arith.constant 0 : index
    %20 = vector.load %arg8[%c0_15, %c0_16] : memref<1x256xf32, #tpu.memory_space<vmem>>, vector<1x256xf32>
    %21 = vector.broadcast %20 : vector<1x256xf32> to vector<32x256xf32>
    %22 = arith.addf %19, %21 : vector<32x256xf32>
    %cst_17 = arith.constant 0.000000e+00 : f32
    %23 = vector.broadcast %cst_17 : f32 to vector<32x256xf32>
    %24 = arith.maximumf %22, %23 : vector<32x256xf32>
    %25 = arith.truncf %24 : vector<32x256xf32> to vector<32x256xbf16>
    %c0_18 = arith.constant 0 : index
    %c0_19 = arith.constant 0 : index
    %26 = vector.load %arg9[%c0_18, %c0_19] : memref<256x128xbf16, #tpu.memory_space<vmem>>, vector<256x128xbf16>
    %cst_20 = arith.constant dense<0.000000e+00> : vector<32x128xf32>
    %27 = tpu.matmul %25, %26, %cst_20 {dimension_numbers = #tpu.dot_dimension_numbers<[1], [0], [0], [1], [0, 0, 1, 1], [], []>} : vector<32x256xbf16>, vector<256x128xbf16>, vector<32x128xf32> -> vector<32x128xf32>
    %c0_21 = arith.constant 0 : index
    %c0_22 = arith.constant 0 : index
    %28 = vector.load %arg10[%c0_21, %c0_22] : memref<1x128xf32, #tpu.memory_space<vmem>>, vector<1x128xf32>
    %29 = vector.broadcast %28 : vector<1x128xf32> to vector<32x128xf32>
    %30 = arith.addf %27, %29 : vector<32x128xf32>
    %cst_23 = arith.constant 0.000000e+00 : f32
    %31 = vector.broadcast %cst_23 : f32 to vector<32x128xf32>
    %32 = arith.maximumf %30, %31 : vector<32x128xf32>
    %33 = arith.truncf %32 : vector<32x128xf32> to vector<32x128xbf16>
    %c0_24 = arith.constant 0 : index
    %c0_25 = arith.constant 0 : index
    %34 = vector.load %arg11[%c0_24, %c0_25] : memref<128x256xbf16, #tpu.memory_space<vmem>>, vector<128x256xbf16>
    %cst_26 = arith.constant dense<0.000000e+00> : vector<32x256xf32>
    %35 = tpu.matmul %33, %34, %cst_26 {dimension_numbers = #tpu.dot_dimension_numbers<[1], [0], [0], [1], [0, 0, 1, 1], [], []>} : vector<32x128xbf16>, vector<128x256xbf16>, vector<32x256xf32> -> vector<32x256xf32>
    %c0_27 = arith.constant 0 : index
    %c0_28 = arith.constant 0 : index
    %36 = vector.load %arg12[%c0_27, %c0_28] : memref<1x256xf32, #tpu.memory_space<vmem>>, vector<1x256xf32>
    %37 = vector.broadcast %36 : vector<1x256xf32> to vector<32x256xf32>
    %38 = arith.addf %35, %37 : vector<32x256xf32>
    %39 = vector.extract_strided_slice %38 {offsets = [0, 0], sizes = [32, 128], strides = [1, 1]} : vector<32x256xf32> to vector<32x128xf32>
    %40 = vector.extract_strided_slice %38 {offsets = [0, 128], sizes = [32, 128], strides = [1, 1]} : vector<32x256xf32> to vector<32x128xf32>
    %cst_29 = arith.constant 5.000000e-01 : f32
    %41 = vector.broadcast %cst_29 : f32 to vector<32x128xf32>
    %42 = arith.mulf %40, %41 : vector<32x128xf32>
    %43 = math.exp %42 : vector<32x128xf32>
    %c0_30 = arith.constant 0 : index
    %c0_31 = arith.constant 0 : index
    %44 = vector.load %arg2[%c0_30, %c0_31] : memref<32x128xf32, #tpu.memory_space<vmem>>, vector<32x128xf32>
    %45 = arith.mulf %43, %44 : vector<32x128xf32>
    %46 = arith.addf %39, %45 : vector<32x128xf32>
    %47 = arith.truncf %46 : vector<32x128xf32> to vector<32x128xbf16>
    %c0_32 = arith.constant 0 : index
    %c0_33 = arith.constant 0 : index
    %48 = vector.load %arg13[%c0_32, %c0_33] : memref<128x768xbf16, #tpu.memory_space<vmem>>, vector<128x768xbf16>
    %cst_34 = arith.constant dense<0.000000e+00> : vector<32x768xf32>
    %49 = tpu.matmul %47, %48, %cst_34 {dimension_numbers = #tpu.dot_dimension_numbers<[1], [0], [0], [1], [0, 0, 1, 1], [], []>} : vector<32x128xbf16>, vector<128x768xbf16>, vector<32x768xf32> -> vector<32x768xf32>
    %c0_35 = arith.constant 0 : index
    %c0_36 = arith.constant 0 : index
    %50 = vector.load %arg14[%c0_35, %c0_36] : memref<1x768xf32, #tpu.memory_space<vmem>>, vector<1x768xf32>
    %51 = vector.broadcast %50 : vector<1x768xf32> to vector<32x768xf32>
    %52 = arith.addf %49, %51 : vector<32x768xf32>
    %cst_37 = arith.constant 0.000000e+00 : f32
    %53 = vector.broadcast %cst_37 : f32 to vector<32x768xf32>
    %54 = arith.maximumf %52, %53 : vector<32x768xf32>
    %55 = arith.truncf %54 : vector<32x768xf32> to vector<32x768xbf16>
    %c0_38 = arith.constant 0 : index
    %c0_39 = arith.constant 0 : index
    %56 = vector.load %arg15[%c0_38, %c0_39] : memref<768x512xbf16, #tpu.memory_space<vmem>>, vector<768x512xbf16>
    %cst_40 = arith.constant dense<0.000000e+00> : vector<32x512xf32>
    %57 = tpu.matmul %55, %56, %cst_40 {dimension_numbers = #tpu.dot_dimension_numbers<[1], [0], [0], [1], [0, 0, 1, 1], [], []>} : vector<32x768xbf16>, vector<768x512xbf16>, vector<32x512xf32> -> vector<32x512xf32>
    %c0_41 = arith.constant 0 : index
    %c0_42 = arith.constant 0 : index
    %58 = vector.load %arg16[%c0_41, %c0_42] : memref<1x512xf32, #tpu.memory_space<vmem>>, vector<1x512xf32>
    %59 = vector.broadcast %58 : vector<1x512xf32> to vector<32x512xf32>
    %60 = arith.addf %57, %59 : vector<32x512xf32>
    %cst_43 = arith.constant 0.000000e+00 : f32
    %61 = vector.broadcast %cst_43 : f32 to vector<32x512xf32>
    %62 = arith.maximumf %60, %61 : vector<32x512xf32>
    %63 = arith.truncf %62 : vector<32x512xf32> to vector<32x512xbf16>
    %c0_44 = arith.constant 0 : index
    %c0_45 = arith.constant 0 : index
    %64 = vector.load %arg17[%c0_44, %c0_45] : memref<512x256xbf16, #tpu.memory_space<vmem>>, vector<512x256xbf16>
    %cst_46 = arith.constant dense<0.000000e+00> : vector<32x256xf32>
    %65 = tpu.matmul %63, %64, %cst_46 {dimension_numbers = #tpu.dot_dimension_numbers<[1], [0], [0], [1], [0, 0, 1, 1], [], []>} : vector<32x512xbf16>, vector<512x256xbf16>, vector<32x256xf32> -> vector<32x256xf32>
    %c0_47 = arith.constant 0 : index
    %c0_48 = arith.constant 0 : index
    %66 = vector.load %arg18[%c0_47, %c0_48] : memref<1x256xf32, #tpu.memory_space<vmem>>, vector<1x256xf32>
    %67 = vector.broadcast %66 : vector<1x256xf32> to vector<32x256xf32>
    %68 = arith.addf %65, %67 : vector<32x256xf32>
    %cst_49 = arith.constant 0.000000e+00 : f32
    %69 = vector.broadcast %cst_49 : f32 to vector<32x256xf32>
    %70 = arith.maximumf %68, %69 : vector<32x256xf32>
    %71 = arith.truncf %70 : vector<32x256xf32> to vector<32x256xbf16>
    %c0_50 = arith.constant 0 : index
    %c0_51 = arith.constant 0 : index
    %72 = vector.load %arg19[%c0_50, %c0_51] : memref<256x128xbf16, #tpu.memory_space<vmem>>, vector<256x128xbf16>
    %cst_52 = arith.constant dense<0.000000e+00> : vector<32x128xf32>
    %73 = tpu.matmul %71, %72, %cst_52 {dimension_numbers = #tpu.dot_dimension_numbers<[1], [0], [0], [1], [0, 0, 1, 1], [], []>} : vector<32x256xbf16>, vector<256x128xbf16>, vector<32x128xf32> -> vector<32x128xf32>
    %c0_53 = arith.constant 0 : index
    %c0_54 = arith.constant 0 : index
    %74 = vector.load %arg20[%c0_53, %c0_54] : memref<1x128xf32, #tpu.memory_space<vmem>>, vector<1x128xf32>
    %75 = vector.broadcast %74 : vector<1x128xf32> to vector<32x128xf32>
    %76 = arith.addf %73, %75 : vector<32x128xf32>
    %77 = math.tanh %76 : vector<32x128xf32>
    %c0_55 = arith.constant 0 : index
    %c0_56 = arith.constant 0 : index
    %78 = vector.load %arg21[%c0_55, %c0_56] : memref<32x128xf32, #tpu.memory_space<vmem>>, vector<32x128xf32>
    tpu.vector_store %arg21[%c0_55, %c0_56], %77 {strides = array<i32>} : memref<32x128xf32, #tpu.memory_space<vmem>>, vector<32x128xf32>,
    %c0_57 = arith.constant 0 : index
    %c0_58 = arith.constant 0 : index
    %79 = vector.load %arg22[%c0_57, %c0_58] : memref<32x256xf32, #tpu.memory_space<vmem>>, vector<32x256xf32>
    tpu.vector_store %arg22[%c0_57, %c0_58], %38 {strides = array<i32>} : memref<32x256xf32, #tpu.memory_space<vmem>>, vector<32x256xf32>,
    return
  }
  func.func @transform_0(%arg0: i32) -> (i32, i32) {
    %c0_i32 = arith.constant 0 : i32
    %c0_i32_0 = arith.constant 0 : i32
    return %arg0, %c0_i32 : i32, i32
  }
  func.func @transform_1(%arg0: i32) -> (i32, i32) {
    %c0_i32 = arith.constant 0 : i32
    %c0_i32_0 = arith.constant 0 : i32
    return %arg0, %c0_i32 : i32, i32
  }
  func.func @transform_2(%arg0: i32) -> (i32, i32) {
    %c0_i32 = arith.constant 0 : i32
    %c0_i32_0 = arith.constant 0 : i32
    %c0_i32_1 = arith.constant 0 : i32
    return %c0_i32, %c0_i32_0 : i32, i32
  }
  func.func @transform_3(%arg0: i32) -> (i32, i32) {
    %c0_i32 = arith.constant 0 : i32
    %c0_i32_0 = arith.constant 0 : i32
    %c0_i32_1 = arith.constant 0 : i32
    return %c0_i32, %c0_i32_0 : i32, i32
  }
  func.func @transform_4(%arg0: i32) -> (i32, i32) {
    %c0_i32 = arith.constant 0 : i32
    %c0_i32_0 = arith.constant 0 : i32
    %c0_i32_1 = arith.constant 0 : i32
    return %c0_i32, %c0_i32_0 : i32, i32
  }
  func.func @transform_5(%arg0: i32) -> (i32, i32) {
    %c0_i32 = arith.constant 0 : i32
    %c0_i32_0 = arith.constant 0 : i32
    %c0_i32_1 = arith.constant 0 : i32
    return %c0_i32, %c0_i32_0 : i32, i32
  }
  func.func @transform_6(%arg0: i32) -> (i32, i32) {
    %c0_i32 = arith.constant 0 : i32
    %c0_i32_0 = arith.constant 0 : i32
    %c0_i32_1 = arith.constant 0 : i32
    return %c0_i32, %c0_i32_0 : i32, i32
  }
  func.func @transform_7(%arg0: i32) -> (i32, i32) {
    %c0_i32 = arith.constant 0 : i32
    %c0_i32_0 = arith.constant 0 : i32
    %c0_i32_1 = arith.constant 0 : i32
    return %c0_i32, %c0_i32_0 : i32, i32
  }
  func.func @transform_8(%arg0: i32) -> (i32, i32) {
    %c0_i32 = arith.constant 0 : i32
    %c0_i32_0 = arith.constant 0 : i32
    %c0_i32_1 = arith.constant 0 : i32
    return %c0_i32, %c0_i32_0 : i32, i32
  }
  func.func @transform_9(%arg0: i32) -> (i32, i32) {
    %c0_i32 = arith.constant 0 : i32
    %c0_i32_0 = arith.constant 0 : i32
    %c0_i32_1 = arith.constant 0 : i32
    return %c0_i32, %c0_i32_0 : i32, i32
  }
  func.func @transform_10(%arg0: i32) -> (i32, i32) {
    %c0_i32 = arith.constant 0 : i32
    %c0_i32_0 = arith.constant 0 : i32
    %c0_i32_1 = arith.constant 0 : i32
    return %c0_i32, %c0_i32_0 : i32, i32
  }
  func.func @transform_11(%arg0: i32) -> (i32, i32) {
    %c0_i32 = arith.constant 0 : i32
    %c0_i32_0 = arith.constant 0 : i32
    %c0_i32_1 = arith.constant 0 : i32
    return %c0_i32, %c0_i32_0 : i32, i32
  }
  func.func @transform_12(%arg0: i32) -> (i32, i32) {
    %c0_i32 = arith.constant 0 : i32
    %c0_i32_0 = arith.constant 0 : i32
    %c0_i32_1 = arith.constant 0 : i32
    return %c0_i32, %c0_i32_0 : i32, i32
  }
  func.func @transform_13(%arg0: i32) -> (i32, i32) {
    %c0_i32 = arith.constant 0 : i32
    %c0_i32_0 = arith.constant 0 : i32
    %c0_i32_1 = arith.constant 0 : i32
    return %c0_i32, %c0_i32_0 : i32, i32
  }
  func.func @transform_14(%arg0: i32) -> (i32, i32) {
    %c0_i32 = arith.constant 0 : i32
    %c0_i32_0 = arith.constant 0 : i32
    %c0_i32_1 = arith.constant 0 : i32
    return %c0_i32, %c0_i32_0 : i32, i32
  }
  func.func @transform_15(%arg0: i32) -> (i32, i32) {
    %c0_i32 = arith.constant 0 : i32
    %c0_i32_0 = arith.constant 0 : i32
    %c0_i32_1 = arith.constant 0 : i32
    return %c0_i32, %c0_i32_0 : i32, i32
  }
  func.func @transform_16(%arg0: i32) -> (i32, i32) {
    %c0_i32 = arith.constant 0 : i32
    %c0_i32_0 = arith.constant 0 : i32
    %c0_i32_1 = arith.constant 0 : i32
    return %c0_i32, %c0_i32_0 : i32, i32
  }
  func.func @transform_17(%arg0: i32) -> (i32, i32) {
    %c0_i32 = arith.constant 0 : i32
    %c0_i32_0 = arith.constant 0 : i32
    %c0_i32_1 = arith.constant 0 : i32
    return %c0_i32, %c0_i32_0 : i32, i32
  }
  func.func @transform_18(%arg0: i32) -> (i32, i32) {
    %c0_i32 = arith.constant 0 : i32
    %c0_i32_0 = arith.constant 0 : i32
    %c0_i32_1 = arith.constant 0 : i32
    return %c0_i32, %c0_i32_0 : i32, i32
  }
  func.func @transform_19(%arg0: i32) -> (i32, i32) {
    %c0_i32 = arith.constant 0 : i32
    %c0_i32_0 = arith.constant 0 : i32
    %c0_i32_1 = arith.constant 0 : i32
    return %c0_i32, %c0_i32_0 : i32, i32
  }
  func.func @transform_20(%arg0: i32) -> (i32, i32) {
    %c0_i32 = arith.constant 0 : i32
    %c0_i32_0 = arith.constant 0 : i32
    return %arg0, %c0_i32 : i32, i32
  }
  func.func @transform_21(%arg0: i32) -> (i32, i32) {
    %c0_i32 = arith.constant 0 : i32
    %c0_i32_0 = arith.constant 0 : i32
    return %arg0, %c0_i32 : i32, i32
  }
}

</mosaic_0001>

<llo_original>
// kernel: vae_forward.1
$region0: #{vae_forward.1}
  #allocation0 [shape = 'u32[]', space=smem, size = 0x4, offset = 0x4, fixed_abs, tag = 'smem constant byte address 0x4 - core index']
  #allocation1 [shape = 'u32[144,128]{1,0:T(1,128)}', space=vmem, size = 0x12000, scoped, tag = 'internal scratch']
  %s0 = inlined_call_operand.vmem [shape: f32[64,32], index: 0, kind: input, shape index: {}]
  %s1 = inlined_call_operand.vmem [shape: f32[64,128], index: 1, kind: input, shape index: {}]
  %s2 = inlined_call_operand.hbm [shape: bf16[32,768], index: 2, kind: input, shape index: {}]
  %s3 = inlined_call_operand.vmem [shape: f32[1,768], index: 3, kind: input, shape index: {}]
  %s4 = inlined_call_operand.hbm [shape: bf16[768,512], index: 4, kind: input, shape index: {}]
  %s5 = inlined_call_operand.vmem [shape: f32[1,512], index: 5, kind: input, shape index: {}]
  %s6 = inlined_call_operand.hbm [shape: bf16[512,256], index: 6, kind: input, shape index: {}]
  %s7 = inlined_call_operand.vmem [shape: f32[1,256], index: 7, kind: input, shape index: {}]
  %s8 = inlined_call_operand.vmem [shape: bf16[256,128], index: 8, kind: input, shape index: {}]
  %s9 = inlined_call_operand.vmem [shape: f32[1,128], index: 9, kind: input, shape index: {}]
  %s10 = inlined_call_operand.vmem [shape: bf16[128,256], index: 10, kind: input, shape index: {}]
  %s11 = inlined_call_operand.vmem [shape: f32[1,256], index: 11, kind: input, shape index: {}]
  %s12 = inlined_call_operand.hbm [shape: bf16[128,768], index: 12, kind: input, shape index: {}]
  %s13 = inlined_call_operand.vmem [shape: f32[1,768], index: 13, kind: input, shape index: {}]
  %s14 = inlined_call_operand.hbm [shape: bf16[768,512], index: 14, kind: input, shape index: {}]
  %s15 = inlined_call_operand.vmem [shape: f32[1,512], index: 15, kind: input, shape index: {}]
  %s16 = inlined_call_operand.hbm [shape: bf16[512,256], index: 16, kind: input, shape index: {}]
  %s17 = inlined_call_operand.vmem [shape: f32[1,256], index: 17, kind: input, shape index: {}]
  %s18 = inlined_call_operand.hbm [shape: bf16[256,128], index: 18, kind: input, shape index: {}]
  %s19 = inlined_call_operand.vmem [shape: f32[1,128], index: 19, kind: input, shape index: {}]
  %s20 = inlined_call_operand.vmem [shape: f32[64,128], index: 20, kind: output, shape index: {0}]
  %s21 = inlined_call_operand.vmem [shape: f32[64,256], index: 21, kind: output, shape index: {1}]
  %22 = xla_tuple %s20, %s21
  %s23 = sld [smem:[#allocation0]]
  $region149: #{vae_forward.1} parent=0
    _
  %s25 = ssub.s32 1, %s23
  %s26 = scalar_select 0, %s25, %s23
  $region1: #{vae_forward.1} parent=0
    #allocation2 [shape = 'u8[49152]{0}', space=vmem, size = 0xc000, scoped, tag = 'input window, operand 2, single buffered']
    #allocation3 [shape = 's32[2]{0}', space=sflag, size = 0x8, scoped, tag = 'scoped memory for vae_forward.1']
    #allocation4 [shape = 'u8[786432]{0}', space=vmem, size = 0xc0000, scoped, tag = 'input window, operand 4, single buffered']
    #allocation5 [shape = 's32[1]{0}', space=sflag, size = 0x4, scoped, tag = 'scoped memory for vae_forward.1']
    #allocation6 [shape = 'u8[262144]{0}', space=vmem, size = 0x40000, scoped, tag = 'input window, operand 6, single buffered']
    #allocation7 [shape = 'u8[196608]{0}', space=vmem, size = 0x30000, scoped, tag = 'input window, operand 12, single buffered']
    #allocation8 [shape = 's32[1]{0}', space=sflag, size = 0x4, scoped, tag = 'scoped memory for vae_forward.1']
    #allocation9 [shape = 'u8[786432]{0}', space=vmem, size = 0xc0000, scoped, tag = 'input window, operand 14, single buffered']
    #allocation10 [shape = 'u8[262144]{0}', space=vmem, size = 0x40000, scoped, tag = 'input window, operand 16, single buffered']
    #allocation11 [shape = 's32[1]{0}', space=sflag, size = 0x4, scoped, tag = 'scoped memory for vae_forward.1']
    #allocation12 [shape = 'u8[65536]{0}', space=vmem, size = 0x10000, scoped, tag = 'input window, operand 18, single buffered']
    %27 = vsyncpa [#allocation3], 0
    %28 = vsyncpa [#allocation5], 0
    %29 = vsyncpa [#allocation8], 0
    %30 = vsyncpa [#allocation11], 0
    loop: start=0, step=1, limit=4
    $region2: #{vae_forward.1} parent=1 // loop_pre_header
      _
    $region3: #{vae_forward.1} parent=1 // loop_header
      %s32 = sphi 0, %s36
      %p33 = scmp.ge.s32.totalorder %s32, 4
      %s42 = sphi 0, %s44
      %s45 = sphi 0, %s42
      %s46 = sphi 0, %s45
      %s62 = sphi 0, %s46
      %s68 = sphi 0, %s70
      %s71 = sphi 0, %s68
      %s72 = sphi 0, %s71
      %s88 = sphi 0, %s72
      %s92 = sphi 0, %s92
      %s94 = sphi 0, %s92
      %s95 = sphi 0, %s94
      %s109 = sphi 0, %s95
      %s113 = sphi 0, %s113
      %s115 = sphi 0, %s113
      %s116 = sphi 0, %s115
      %s130 = sphi 0, %s116
      %s134 = sphi 0, %s134
      %s136 = sphi 0, %s134
      %s137 = sphi 0, %s136
      %s151 = sphi 0, %s137
      %s155 = sphi 0, %s155
      %s157 = sphi 0, %s155
      %s158 = sphi 0, %s157
      %s172 = sphi 0, %s158
      %s176 = sphi 0, %s176
      %s178 = sphi 0, %s176
      %s179 = sphi 0, %s178
      %s193 = sphi 0, %s179
      %s197 = sphi 0, %s197
      %s199 = sphi 0, %s197
      %s200 = sphi 0, %s199
      %s214 = sphi 0, %s200
      %s218 = sphi 0, %s218
      %s220 = sphi 0, %s218
      %s221 = sphi 0, %s220
      %s235 = sphi 0, %s221
      %s239 = sphi 0, %s239
      %s241 = sphi 0, %s239
      %s242 = sphi 0, %s241
      %s256 = sphi 0, %s242
      %s260 = sphi 0, %s260
      %s262 = sphi 0, %s260
      %s263 = sphi 0, %s262
      %s277 = sphi 0, %s263
      %s281 = sphi 0, %s281
      %s283 = sphi 0, %s281
      %s284 = sphi 0, %s283
      %s298 = sphi 0, %s284
      %s302 = sphi 0, %s302
      %s304 = sphi 0, %s302
      %s305 = sphi 0, %s304
      %s319 = sphi 0, %s305
      %s323 = sphi 0, %s323
      %s325 = sphi 0, %s323
      %s326 = sphi 0, %s325
      %s340 = sphi 0, %s326
      %s344 = sphi 0, %s344
      %s346 = sphi 0, %s344
      %s347 = sphi 0, %s346
      %s361 = sphi 0, %s347
      %s365 = sphi 0, %s365
      %s367 = sphi 0, %s365
      %s368 = sphi 0, %s367
      %s382 = sphi 0, %s368
      %s386 = sphi 0, %s386
      %s388 = sphi 0, %s386
      %s389 = sphi 0, %s388
      %s403 = sphi 0, %s389
      %s407 = sphi 0, %s407
      %s409 = sphi 0, %s407
      %s410 = sphi 0, %s409
      %s424 = sphi 0, %s410
      %s428 = sphi 0, %s428
      %s430 = sphi 0, %s428
      %s431 = sphi 0, %s430
      %s445 = sphi 0, %s431
      %s449 = sphi 0, %s449
      %s451 = sphi 0, %s449
      %s452 = sphi 0, %s451
      %s466 = sphi 0, %s452
      %s472 = sphi 0, %s474
      %s475 = sphi 0, %s472
      %s476 = sphi 0, %s475
      %s492 = sphi 0, %s476
      %s498 = sphi 0, %s500
      %s501 = sphi 0, %s498
      %s502 = sphi 0, %s501
      %s518 = sphi 0, %s502
    $region4: #{vae_forward.1} parent=1 // loop_header_branch
      %35 = sbr.rel (%p33) target = $region8
    $region5: #{vae_forward.1} parent=1 // loop_body
      %s37 = ssub.s32 %s32, 1
      %s38 = ssub.s32 %s32, 2
      %s39 = sadd.s32 %s32, 1
      %s40 = ssub.s32 %s32, %s39
      %p41 = scmp.eq.s32.totalorder %s40, 0
      %s43 = sadd.s32 %s42, 1
      %s44 = scalar_select %p41, %s42, %s43
      %p47 = pneg %p41
      %p48 = scmp.eq.s32.totalorder %s32, 1
      %p49 = por %p47, %p48
      %p50 = scmp.ne.s32.totalorder %s42, %s45
      %p51 = scmp.eq.s32.totalorder %s32, 0
      %p52 = por %p50, %p51
      %p53 = scmp.ne.s32.totalorder %s42, %s45
      %p54 = scmp.eq.s32.totalorder %s37, 1
      %p55 = por %p53, %p54
      %p56 = scmp.ne.s32.totalorder %s45, %s46
      %p57 = scmp.eq.s32.totalorder %s37, 0
      %p58 = por %p56, %p57
      %p59 = scmp.ne.s32.totalorder %s45, %s46
      %p60 = scmp.eq.s32.totalorder %s38, 1
      %p61 = por %p59, %p60
      %p63 = scmp.ne.s32.totalorder %s46, %s62
      %p64 = scmp.eq.s32.totalorder %s38, 0
      %p65 = por %p63, %p64
      %s66 = ssub.s32 %s32, %s39
      %p67 = scmp.eq.s32.totalorder %s66, 0
      %s69 = sadd.s32 %s68, 1
      %s70 = scalar_select %p67, %s68, %s69
      %p73 = pneg %p67
      %p74 = scmp.eq.s32.totalorder %s32, 1
      %p75 = por %p73, %p74
      %p76 = scmp.ne.s32.totalorder %s68, %s71
      %p77 = scmp.eq.s32.totalorder %s32, 0
      %p78 = por %p76, %p77
      %p79 = scmp.ne.s32.totalorder %s68, %s71
      %p80 = scmp.eq.s32.totalorder %s37, 1
      %p81 = por %p79, %p80
      %p82 = scmp.ne.s32.totalorder %s71, %s72
      %p83 = scmp.eq.s32.totalorder %s37, 0
      %p84 = por %p82, %p83
      %p85 = scmp.ne.s32.totalorder %s71, %s72
      %p86 = scmp.eq.s32.totalorder %s38, 1
      %p87 = por %p85, %p86
      %p89 = scmp.ne.s32.totalorder %s72, %s88
      %p90 = scmp.eq.s32.totalorder %s38, 0
      %p91 = por %p89, %p90
      %s93 = sadd.s32 %s92, 1
      %p96 = scmp.eq.s32.totalorder %s32, 1
      %p97 = scmp.ne.s32.totalorder %s92, %s94
      %p98 = scmp.eq.s32.totalorder %s32, 0
      %p99 = por %p97, %p98
      %p100 = scmp.ne.s32.totalorder %s92, %s94
      %p101 = scmp.eq.s32.totalorder %s37, 1
      %p102 = por %p100, %p101
      %p103 = scmp.ne.s32.totalorder %s94, %s95
      %p104 = scmp.eq.s32.totalorder %s37, 0
      %p105 = por %p103, %p104
      %p106 = scmp.ne.s32.totalorder %s94, %s95
      %p107 = scmp.eq.s32.totalorder %s38, 1
      %p108 = por %p106, %p107
      %p110 = scmp.ne.s32.totalorder %s95, %s109
      %p111 = scmp.eq.s32.totalorder %s38, 0
      %p112 = por %p110, %p111
      %s114 = sadd.s32 %s113, 1
      %p117 = scmp.eq.s32.totalorder %s32, 1
      %p118 = scmp.ne.s32.totalorder %s113, %s115
      %p119 = scmp.eq.s32.totalorder %s32, 0
      %p120 = por %p118, %p119
      %p121 = scmp.ne.s32.totalorder %s113, %s115
      %p122 = scmp.eq.s32.totalorder %s37, 1
      %p123 = por %p121, %p122
      %p124 = scmp.ne.s32.totalorder %s115, %s116
      %p125 = scmp.eq.s32.totalorder %s37, 0
      %p126 = por %p124, %p125
      %p127 = scmp.ne.s32.totalorder %s115, %s116
      %p128 = scmp.eq.s32.totalorder %s38, 1
      %p129 = por %p127, %p128
      %p131 = scmp.ne.s32.totalorder %s116, %s130
      %p132 = scmp.eq.s32.totalorder %s38, 0
      %p133 = por %p131, %p132
      %s135 = sadd.s32 %s134, 1
      %p138 = scmp.eq.s32.totalorder %s32, 1
      %p139 = scmp.ne.s32.totalorder %s134, %s136
      %p140 = scmp.eq.s32.totalorder %s32, 0
      %p141 = por %p139, %p140
      %p142 = scmp.ne.s32.totalorder %s134, %s136
      %p143 = scmp.eq.s32.totalorder %s37, 1
      %p144 = por %p142, %p143
      %p145 = scmp.ne.s32.totalorder %s136, %s137
      %p146 = scmp.eq.s32.totalorder %s37, 0
      %p147 = por %p145, %p146
      %p148 = scmp.ne.s32.totalorder %s136, %s137
      %p149 = scmp.eq.s32.totalorder %s38, 1
      %p150 = por %p148, %p149
      %p152 = scmp.ne.s32.totalorder %s137, %s151
      %p153 = scmp.eq.s32.totalorder %s38, 0
      %p154 = por %p152, %p153
      %s156 = sadd.s32 %s155, 1
      %p159 = scmp.eq.s32.totalorder %s32, 1
      %p160 = scmp.ne.s32.totalorder %s155, %s157
      %p161 = scmp.eq.s32.totalorder %s32, 0
      %p162 = por %p160, %p161
      %p163 = scmp.ne.s32.totalorder %s155, %s157
      %p164 = scmp.eq.s32.totalorder %s37, 1
      %p165 = por %p163, %p164
      %p166 = scmp.ne.s32.totalorder %s157, %s158
      %p167 = scmp.eq.s32.totalorder %s37, 0
      %p168 = por %p166, %p167
      %p169 = scmp.ne.s32.totalorder %s157, %s158
      %p170 = scmp.eq.s32.totalorder %s38, 1
      %p171 = por %p169, %p170
      %p173 = scmp.ne.s32.totalorder %s158, %s172
      %p174 = scmp.eq.s32.totalorder %s38, 0
      %p175 = por %p173, %p174
      %s177 = sadd.s32 %s176, 1
      %p180 = scmp.eq.s32.totalorder %s32, 1
      %p181 = scmp.ne.s32.totalorder %s176, %s178
      %p182 = scmp.eq.s32.totalorder %s32, 0
      %p183 = por %p181, %p182
      %p184 = scmp.ne.s32.totalorder %s176, %s178
      %p185 = scmp.eq.s32.totalorder %s37, 1
      %p186 = por %p184, %p185
      %p187 = scmp.ne.s32.totalorder %s178, %s179
      %p188 = scmp.eq.s32.totalorder %s37, 0
      %p189 = por %p187, %p188
      %p190 = scmp.ne.s32.totalorder %s178, %s179
      %p191 = scmp.eq.s32.totalorder %s38, 1
      %p192 = por %p190, %p191
      %p194 = scmp.ne.s32.totalorder %s179, %s193
      %p195 = scmp.eq.s32.totalorder %s38, 0
      %p196 = por %p194, %p195
      %s198 = sadd.s32 %s197, 1
      %p201 = scmp.eq.s32.totalorder %s32, 1
      %p202 = scmp.ne.s32.totalorder %s197, %s199
      %p203 = scmp.eq.s32.totalorder %s32, 0
      %p204 = por %p202, %p203
      %p205 = scmp.ne.s32.totalorder %s197, %s199
      %p206 = scmp.eq.s32.totalorder %s37, 1
      %p207 = por %p205, %p206
      %p208 = scmp.ne.s32.totalorder %s199, %s200
      %p209 = scmp.eq.s32.totalorder %s37, 0
      %p210 = por %p208, %p209
      %p211 = scmp.ne.s32.totalorder %s199, %s200
      %p212 = scmp.eq.s32.totalorder %s38, 1
      %p213 = por %p211, %p212
      %p215 = scmp.ne.s32.totalorder %s200, %s214
      %p216 = scmp.eq.s32.totalorder %s38, 0
      %p217 = por %p215, %p216
      %s219 = sadd.s32 %s218, 1
      %p222 = scmp.eq.s32.totalorder %s32, 1
      %p223 = scmp.ne.s32.totalorder %s218, %s220
      %p224 = scmp.eq.s32.totalorder %s32, 0
      %p225 = por %p223, %p224
      %p226 = scmp.ne.s32.totalorder %s218, %s220
      %p227 = scmp.eq.s32.totalorder %s37, 1
      %p228 = por %p226, %p227
      %p229 = scmp.ne.s32.totalorder %s220, %s221
      %p230 = scmp.eq.s32.totalorder %s37, 0
      %p231 = por %p229, %p230
      %p232 = scmp.ne.s32.totalorder %s220, %s221
      %p233 = scmp.eq.s32.totalorder %s38, 1
      %p234 = por %p232, %p233
      %p236 = scmp.ne.s32.totalorder %s221, %s235
      %p237 = scmp.eq.s32.totalorder %s38, 0
      %p238 = por %p236, %p237
      %s240 = sadd.s32 %s239, 1
      %p243 = scmp.eq.s32.totalorder %s32, 1
      %p244 = scmp.ne.s32.totalorder %s239, %s241
      %p245 = scmp.eq.s32.totalorder %s32, 0
      %p246 = por %p244, %p245
      %p247 = scmp.ne.s32.totalorder %s239, %s241
      %p248 = scmp.eq.s32.totalorder %s37, 1
      %p249 = por %p247, %p248
      %p250 = scmp.ne.s32.totalorder %s241, %s242
      %p251 = scmp.eq.s32.totalorder %s37, 0
      %p252 = por %p250, %p251
      %p253 = scmp.ne.s32.totalorder %s241, %s242
      %p254 = scmp.eq.s32.totalorder %s38, 1
      %p255 = por %p253, %p254
      %p257 = scmp.ne.s32.totalorder %s242, %s256
      %p258 = scmp.eq.s32.totalorder %s38, 0
      %p259 = por %p257, %p258
      %s261 = sadd.s32 %s260, 1
      %p264 = scmp.eq.s32.totalorder %s32, 1
      %p265 = scmp.ne.s32.totalorder %s260, %s262
      %p266 = scmp.eq.s32.totalorder %s32, 0
      %p267 = por %p265, %p266
      %p268 = scmp.ne.s32.totalorder %s260, %s262
      %p269 = scmp.eq.s32.totalorder %s37, 1
      %p270 = por %p268, %p269
      %p271 = scmp.ne.s32.totalorder %s262, %s263
      %p272 = scmp.eq.s32.totalorder %s37, 0
      %p273 = por %p271, %p272
      %p274 = scmp.ne.s32.totalorder %s262, %s263
      %p275 = scmp.eq.s32.totalorder %s38, 1
      %p276 = por %p274, %p275
      %p278 = scmp.ne.s32.totalorder %s263, %s277
      %p279 = scmp.eq.s32.totalorder %s38, 0
      %p280 = por %p278, %p279
      %s282 = sadd.s32 %s281, 1
      %p285 = scmp.eq.s32.totalorder %s32, 1
      %p286 = scmp.ne.s32.totalorder %s281, %s283
      %p287 = scmp.eq.s32.totalorder %s32, 0
      %p288 = por %p286, %p287
      %p289 = scmp.ne.s32.totalorder %s281, %s283
      %p290 = scmp.eq.s32.totalorder %s37, 1
      %p291 = por %p289, %p290
      %p292 = scmp.ne.s32.totalorder %s283, %s284
      %p293 = scmp.eq.s32.totalorder %s37, 0
      %p294 = por %p292, %p293
      %p295 = scmp.ne.s32.totalorder %s283, %s284
      %p296 = scmp.eq.s32.totalorder %s38, 1
      %p297 = por %p295, %p296
      %p299 = scmp.ne.s32.totalorder %s284, %s298
      %p300 = scmp.eq.s32.totalorder %s38, 0
      %p301 = por %p299, %p300
      %s303 = sadd.s32 %s302, 1
      %p306 = scmp.eq.s32.totalorder %s32, 1
      %p307 = scmp.ne.s32.totalorder %s302, %s304
      %p308 = scmp.eq.s32.totalorder %s32, 0
      %p309 = por %p307, %p308
      %p310 = scmp.ne.s32.totalorder %s302, %s304
      %p311 = scmp.eq.s32.totalorder %s37, 1
      %p312 = por %p310, %p311
      %p313 = scmp.ne.s32.totalorder %s304, %s305
      %p314 = scmp.eq.s32.totalorder %s37, 0
      %p315 = por %p313, %p314
      %p316 = scmp.ne.s32.totalorder %s304, %s305
      %p317 = scmp.eq.s32.totalorder %s38, 1
      %p318 = por %p316, %p317
      %p320 = scmp.ne.s32.totalorder %s305, %s319
      %p321 = scmp.eq.s32.totalorder %s38, 0
      %p322 = por %p320, %p321
      %s324 = sadd.s32 %s323, 1
      %p327 = scmp.eq.s32.totalorder %s32, 1
      %p328 = scmp.ne.s32.totalorder %s323, %s325
      %p329 = scmp.eq.s32.totalorder %s32, 0
      %p330 = por %p328, %p329
      %p331 = scmp.ne.s32.totalorder %s323, %s325
      %p332 = scmp.eq.s32.totalorder %s37, 1
      %p333 = por %p331, %p332
      %p334 = scmp.ne.s32.totalorder %s325, %s326
      %p335 = scmp.eq.s32.totalorder %s37, 0
      %p336 = por %p334, %p335
      %p337 = scmp.ne.s32.totalorder %s325, %s326
      %p338 = scmp.eq.s32.totalorder %s38, 1
      %p339 = por %p337, %p338
      %p341 = scmp.ne.s32.totalorder %s326, %s340
      %p342 = scmp.eq.s32.totalorder %s38, 0
      %p343 = por %p341, %p342
      %s345 = sadd.s32 %s344, 1
      %p348 = scmp.eq.s32.totalorder %s32, 1
      %p349 = scmp.ne.s32.totalorder %s344, %s346
      %p350 = scmp.eq.s32.totalorder %s32, 0
      %p351 = por %p349, %p350
      %p352 = scmp.ne.s32.totalorder %s344, %s346
      %p353 = scmp.eq.s32.totalorder %s37, 1
      %p354 = por %p352, %p353
      %p355 = scmp.ne.s32.totalorder %s346, %s347
      %p356 = scmp.eq.s32.totalorder %s37, 0
      %p357 = por %p355, %p356
      %p358 = scmp.ne.s32.totalorder %s346, %s347
      %p359 = scmp.eq.s32.totalorder %s38, 1
      %p360 = por %p358, %p359
      %p362 = scmp.ne.s32.totalorder %s347, %s361
      %p363 = scmp.eq.s32.totalorder %s38, 0
      %p364 = por %p362, %p363
      %s366 = sadd.s32 %s365, 1
      %p369 = scmp.eq.s32.totalorder %s32, 1
      %p370 = scmp.ne.s32.totalorder %s365, %s367
      %p371 = scmp.eq.s32.totalorder %s32, 0
      %p372 = por %p370, %p371
      %p373 = scmp.ne.s32.totalorder %s365, %s367
      %p374 = scmp.eq.s32.totalorder %s37, 1
      %p375 = por %p373, %p374
      %p376 = scmp.ne.s32.totalorder %s367, %s368
      %p377 = scmp.eq.s32.totalorder %s37, 0
      %p378 = por %p376, %p377
      %p379 = scmp.ne.s32.totalorder %s367, %s368
      %p380 = scmp.eq.s32.totalorder %s38, 1
      %p381 = por %p379, %p380
      %p383 = scmp.ne.s32.totalorder %s368, %s382
      %p384 = scmp.eq.s32.totalorder %s38, 0
      %p385 = por %p383, %p384
      %s387 = sadd.s32 %s386, 1
      %p390 = scmp.eq.s32.totalorder %s32, 1
      %p391 = scmp.ne.s32.totalorder %s386, %s388
      %p392 = scmp.eq.s32.totalorder %s32, 0
      %p393 = por %p391, %p392
      %p394 = scmp.ne.s32.totalorder %s386, %s388
      %p395 = scmp.eq.s32.totalorder %s37, 1
      %p396 = por %p394, %p395
      %p397 = scmp.ne.s32.totalorder %s388, %s389
      %p398 = scmp.eq.s32.totalorder %s37, 0
      %p399 = por %p397, %p398
      %p400 = scmp.ne.s32.totalorder %s388, %s389
      %p401 = scmp.eq.s32.totalorder %s38, 1
      %p402 = por %p400, %p401
      %p404 = scmp.ne.s32.totalorder %s389, %s403
      %p405 = scmp.eq.s32.totalorder %s38, 0
      %p406 = por %p404, %p405
      %s408 = sadd.s32 %s407, 1
      %p411 = scmp.eq.s32.totalorder %s32, 1
      %p412 = scmp.ne.s32.totalorder %s407, %s409
      %p413 = scmp.eq.s32.totalorder %s32, 0
      %p414 = por %p412, %p413
      %p415 = scmp.ne.s32.totalorder %s407, %s409
      %p416 = scmp.eq.s32.totalorder %s37, 1
      %p417 = por %p415, %p416
      %p418 = scmp.ne.s32.totalorder %s409, %s410
      %p419 = scmp.eq.s32.totalorder %s37, 0
      %p420 = por %p418, %p419
      %p421 = scmp.ne.s32.totalorder %s409, %s410
      %p422 = scmp.eq.s32.totalorder %s38, 1
      %p423 = por %p421, %p422
      %p425 = scmp.ne.s32.totalorder %s410, %s424
      %p426 = scmp.eq.s32.totalorder %s38, 0
      %p427 = por %p425, %p426
      %s429 = sadd.s32 %s428, 1
      %p432 = scmp.eq.s32.totalorder %s32, 1
      %p433 = scmp.ne.s32.totalorder %s428, %s430
      %p434 = scmp.eq.s32.totalorder %s32, 0
      %p435 = por %p433, %p434
      %p436 = scmp.ne.s32.totalorder %s428, %s430
      %p437 = scmp.eq.s32.totalorder %s37, 1
      %p438 = por %p436, %p437
      %p439 = scmp.ne.s32.totalorder %s430, %s431
      %p440 = scmp.eq.s32.totalorder %s37, 0
      %p441 = por %p439, %p440
      %p442 = scmp.ne.s32.totalorder %s430, %s431
      %p443 = scmp.eq.s32.totalorder %s38, 1
      %p444 = por %p442, %p443
      %p446 = scmp.ne.s32.totalorder %s431, %s445
      %p447 = scmp.eq.s32.totalorder %s38, 0
      %p448 = por %p446, %p447
      %s450 = sadd.s32 %s449, 1
      %p453 = scmp.eq.s32.totalorder %s32, 1
      %p454 = scmp.ne.s32.totalorder %s449, %s451
      %p455 = scmp.eq.s32.totalorder %s32, 0
      %p456 = por %p454, %p455
      %p457 = scmp.ne.s32.totalorder %s449, %s451
      %p458 = scmp.eq.s32.totalorder %s37, 1
      %p459 = por %p457, %p458
      %p460 = scmp.ne.s32.totalorder %s451, %s452
      %p461 = scmp.eq.s32.totalorder %s37, 0
      %p462 = por %p460, %p461
      %p463 = scmp.ne.s32.totalorder %s451, %s452
      %p464 = scmp.eq.s32.totalorder %s38, 1
      %p465 = por %p463, %p464
      %p467 = scmp.ne.s32.totalorder %s452, %s466
      %p468 = scmp.eq.s32.totalorder %s38, 0
      %p469 = por %p467, %p468
      %s470 = ssub.s32 %s32, %s39
      %p471 = scmp.eq.s32.totalorder %s470, 0
      %s473 = sadd.s32 %s472, 1
      %s474 = scalar_select %p471, %s472, %s473
      %p477 = pneg %p471
      %p478 = scmp.eq.s32.totalorder %s32, 1
      %p479 = por %p477, %p478
      %p480 = scmp.ne.s32.totalorder %s472, %s475
      %p481 = scmp.eq.s32.totalorder %s32, 0
      %p482 = por %p480, %p481
      %p483 = scmp.ne.s32.totalorder %s472, %s475
      %p484 = scmp.eq.s32.totalorder %s37, 1
      %p485 = por %p483, %p484
      %p486 = scmp.ne.s32.totalorder %s475, %s476
      %p487 = scmp.eq.s32.totalorder %s37, 0
      %p488 = por %p486, %p487
      %p489 = scmp.ne.s32.totalorder %s475, %s476
      %p490 = scmp.eq.s32.totalorder %s38, 1
      %p491 = por %p489, %p490
      %p493 = scmp.ne.s32.totalorder %s476, %s492
      %p494 = scmp.eq.s32.totalorder %s38, 0
      %p495 = por %p493, %p494
      %s496 = ssub.s32 %s32, %s39
      %p497 = scmp.eq.s32.totalorder %s496, 0
      %s499 = sadd.s32 %s498, 1
      %s500 = scalar_select %p497, %s498, %s499
      %p503 = pneg %p497
      %p504 = scmp.eq.s32.totalorder %s32, 1
      %p505 = por %p503, %p504
      %p506 = scmp.ne.s32.totalorder %s498, %s501
      %p507 = scmp.eq.s32.totalorder %s32, 0
      %p508 = por %p506, %p507
      %p509 = scmp.ne.s32.totalorder %s498, %s501
      %p510 = scmp.eq.s32.totalorder %s37, 1
      %p511 = por %p509, %p510
      %p512 = scmp.ne.s32.totalorder %s501, %s502
      %p513 = scmp.eq.s32.totalorder %s37, 0
      %p514 = por %p512, %p513
      %p515 = scmp.ne.s32.totalorder %s501, %s502
      %p516 = scmp.eq.s32.totalorder %s38, 1
      %p517 = por %p515, %p516
      %p519 = scmp.ne.s32.totalorder %s502, %s518
      %p520 = scmp.eq.s32.totalorder %s38, 0
      %p521 = por %p519, %p520
      %p522 = scmp.le.s32.totalorder 1, %s32
      %p523 = scmp.lt.s32.totalorder %s32, 3
      %p524 = pnand %p522, %p523
      %p525 = pneg %p524
      // Predicated region
      $region9: #{vae_forward.1} parent=5 // pred_check
        _
      $region10: #{vae_forward.1} parent=5 // pred_check_branch
        %527 = sbr.rel (%p524) target = $region12
      $region11: #{vae_forward.1} parent=5 // pred_region
        %s528 = ssub.s32 %s32, 1
        // Predicated region
        $region13: #{vae_forward.1} parent=11 // pred_check
          %p529 = pneg %p105
        $region14: #{vae_forward.1} parent=11 // pred_check_branch
          %531 = sbr.rel (%p529) target = $region16
        $region15: #{vae_forward.1} parent=11 // pred_region
          %s533 = ssub.s32 1536, 1536
          %534 = vsyncadd [#allocation3], %s533
          %s535 = sshll.u32 [#allocation2], 4
          %s536 = int_to_ptr.vmem [resolvable:$true] %s535
          %541 = dma.hbm_to_vmem [thread:$0]  %s2, 1536, %s536, [#allocation3], 384, 384, 24
        $region16: #{vae_forward.1} parent=11 // pred_fallthru
          _
        // Predicated region
        $region17: #{vae_forward.1} parent=11 // pred_check
          %p542 = pneg %p126
        $region18: #{vae_forward.1} parent=11 // pred_check_branch
          %544 = sbr.rel (%p542) target = $region20
        $region19: #{vae_forward.1} parent=11 // pred_region
          _
        $region20: #{vae_forward.1} parent=11 // pred_fallthru
          _
        // Predicated region
        $region21: #{vae_forward.1} parent=11 // pred_check
          %p545 = pneg %p147
        $region22: #{vae_forward.1} parent=11 // pred_check_branch
          %547 = sbr.rel (%p545) target = $region24
        $region23: #{vae_forward.1} parent=11 // pred_region
          %s549 = ssub.s32 24576, 24576
          %550 = vsyncadd [#allocation5], %s549
          %s551 = sshll.u32 [#allocation4], 4
          %s552 = int_to_ptr.vmem [resolvable:$true] %s551
          %557 = dma.hbm_to_vmem [thread:$0]  %s4, 24576, %s552, [#allocation5], 256, 256, 16
        $region24: #{vae_forward.1} parent=11 // pred_fallthru
          _
        // Predicated region
        $region25: #{vae_forward.1} parent=11 // pred_check
          %p558 = pneg %p168
        $region26: #{vae_forward.1} parent=11 // pred_check_branch
          %560 = sbr.rel (%p558) target = $region28
        $region27: #{vae_forward.1} parent=11 // pred_region
          _
        $region28: #{vae_forward.1} parent=11 // pred_fallthru
          _
        // Predicated region
        $region29: #{vae_forward.1} parent=11 // pred_check
          %p561 = pneg %p189
        $region30: #{vae_forward.1} parent=11 // pred_check_branch
          %563 = sbr.rel (%p561) target = $region32
        $region31: #{vae_forward.1} parent=11 // pred_region
          %s565 = ssub.s32 8192, 8192
          %566 = vsyncadd [#allocation5], %s565
          %s567 = sshll.u32 [#allocation6], 4
          %s568 = int_to_ptr.vmem [resolvable:$true] %s567
          %573 = dma.hbm_to_vmem [thread:$0]  %s6, 8192, %s568, [#allocation5], 128, 128, 8
        $region32: #{vae_forward.1} parent=11 // pred_fallthru
          _
        // Predicated region
        $region33: #{vae_forward.1} parent=11 // pred_check
          %p574 = pneg %p210
        $region34: #{vae_forward.1} parent=11 // pred_check_branch
          %576 = sbr.rel (%p574) target = $region36
        $region35: #{vae_forward.1} parent=11 // pred_region
          _
        $region36: #{vae_forward.1} parent=11 // pred_fallthru
          _
        // Predicated region
        $region37: #{vae_forward.1} parent=11 // pred_check
          %p577 = pneg %p231
        $region38: #{vae_forward.1} parent=11 // pred_check_branch
          %579 = sbr.rel (%p577) target = $region40
        $region39: #{vae_forward.1} parent=11 // pred_region
          _
        $region40: #{vae_forward.1} parent=11 // pred_fallthru
          _
        // Predicated region
        $region41: #{vae_forward.1} parent=11 // pred_check
          %p580 = pneg %p252
        $region42: #{vae_forward.1} parent=11 // pred_check_branch
          %582 = sbr.rel (%p580) target = $region44
        $region43: #{vae_forward.1} parent=11 // pred_region
          _
        $region44: #{vae_forward.1} parent=11 // pred_fallthru
          _
        // Predicated region
        $region45: #{vae_forward.1} parent=11 // pred_check
          %p583 = pneg %p273
        $region46: #{vae_forward.1} parent=11 // pred_check_branch
          %585 = sbr.rel (%p583) target = $region48
        $region47: #{vae_forward.1} parent=11 // pred_region
          _
        $region48: #{vae_forward.1} parent=11 // pred_fallthru
          _
        // Predicated region
        $region49: #{vae_forward.1} parent=11 // pred_check
          %p586 = pneg %p294
        $region50: #{vae_forward.1} parent=11 // pred_check_branch
          %588 = sbr.rel (%p586) target = $region52
        $region51: #{vae_forward.1} parent=11 // pred_region
          _
        $region52: #{vae_forward.1} parent=11 // pred_fallthru
          _
        // Predicated region
        $region53: #{vae_forward.1} parent=11 // pred_check
          %p589 = pneg %p315
        $region54: #{vae_forward.1} parent=11 // pred_check_branch
          %591 = sbr.rel (%p589) target = $region56
        $region55: #{vae_forward.1} parent=11 // pred_region
          %s593 = ssub.s32 6144, 6144
          %594 = vsyncadd [#allocation8], %s593
          %s595 = sshll.u32 [#allocation7], 4
          %s596 = int_to_ptr.vmem [resolvable:$true] %s595
          %601 = dma.hbm_to_vmem [thread:$0]  %s12, 6144, %s596, [#allocation8], 384, 384, 24
        $region56: #{vae_forward.1} parent=11 // pred_fallthru
          _
        // Predicated region
        $region57: #{vae_forward.1} parent=11 // pred_check
          %p602 = pneg %p336
        $region58: #{vae_forward.1} parent=11 // pred_check_branch
          %604 = sbr.rel (%p602) target = $region60
        $region59: #{vae_forward.1} parent=11 // pred_region
          _
        $region60: #{vae_forward.1} parent=11 // pred_fallthru
          _
        // Predicated region
        $region61: #{vae_forward.1} parent=11 // pred_check
          %p605 = pneg %p357
        $region62: #{vae_forward.1} parent=11 // pred_check_branch
          %607 = sbr.rel (%p605) target = $region64
        $region63: #{vae_forward.1} parent=11 // pred_region
          %s609 = ssub.s32 24576, 24576
          %610 = vsyncadd [#allocation8], %s609
          %s611 = sshll.u32 [#allocation9], 4
          %s612 = int_to_ptr.vmem [resolvable:$true] %s611
          %617 = dma.hbm_to_vmem [thread:$0]  %s14, 24576, %s612, [#allocation8], 256, 256, 16
        $region64: #{vae_forward.1} parent=11 // pred_fallthru
          _
        // Predicated region
        $region65: #{vae_forward.1} parent=11 // pred_check
          %p618 = pneg %p378
        $region66: #{vae_forward.1} parent=11 // pred_check_branch
          %620 = sbr.rel (%p618) target = $region68
        $region67: #{vae_forward.1} parent=11 // pred_region
          _
        $region68: #{vae_forward.1} parent=11 // pred_fallthru
          _
        // Predicated region
        $region69: #{vae_forward.1} parent=11 // pred_check
          %p621 = pneg %p399
        $region70: #{vae_forward.1} parent=11 // pred_check_branch
          %623 = sbr.rel (%p621) target = $region72
        $region71: #{vae_forward.1} parent=11 // pred_region
          %s625 = ssub.s32 8192, 8192
          %626 = vsyncadd [#allocation11], %s625
          %s627 = sshll.u32 [#allocation10], 4
          %s628 = int_to_ptr.vmem [resolvable:$true] %s627
          %633 = dma.hbm_to_vmem [thread:$0]  %s16, 8192, %s628, [#allocation11], 128, 128, 8
        $region72: #{vae_forward.1} parent=11 // pred_fallthru
          _
        // Predicated region
        $region73: #{vae_forward.1} parent=11 // pred_check
          %p634 = pneg %p420
        $region74: #{vae_forward.1} parent=11 // pred_check_branch
          %636 = sbr.rel (%p634) target = $region76
        $region75: #{vae_forward.1} parent=11 // pred_region
          _
        $region76: #{vae_forward.1} parent=11 // pred_fallthru
          _
        // Predicated region
        $region77: #{vae_forward.1} parent=11 // pred_check
          %p637 = pneg %p441
        $region78: #{vae_forward.1} parent=11 // pred_check_branch
          %639 = sbr.rel (%p637) target = $region80
        $region79: #{vae_forward.1} parent=11 // pred_region
          %s641 = ssub.s32 2048, 2048
          %642 = vsyncadd [#allocation11], %s641
          %s643 = sshll.u32 [#allocation12], 4
          %s644 = int_to_ptr.vmem [resolvable:$true] %s643
          %649 = dma.hbm_to_vmem [thread:$0]  %s18, 2048, %s644, [#allocation11], 64, 64, 4
        $region80: #{vae_forward.1} parent=11 // pred_fallthru
          _
        // Predicated region
        $region81: #{vae_forward.1} parent=11 // pred_check
          %p650 = pneg %p462
        $region82: #{vae_forward.1} parent=11 // pred_check_branch
          %652 = sbr.rel (%p650) target = $region84
        $region83: #{vae_forward.1} parent=11 // pred_region
          _
        $region84: #{vae_forward.1} parent=11 // pred_fallthru
          _
      $region12: #{vae_forward.1} parent=5 // pred_fallthru
        _
      %p653 = scmp.lt.s32.totalorder %s32, 2
      // Predicated region
      $region85: #{vae_forward.1} parent=5 // pred_check
        %p654 = pneg %p653
      $region86: #{vae_forward.1} parent=5 // pred_check_branch
        %656 = sbr.rel (%p654) target = $region88
      $region87: #{vae_forward.1} parent=5 // pred_region
        // Predicated region
        $region89: #{vae_forward.1} parent=87 // pred_check
          %p657 = pneg %p52
        $region90: #{vae_forward.1} parent=87 // pred_check_branch
          %659 = sbr.rel (%p657) target = $region92
        $region91: #{vae_forward.1} parent=87 // pred_region
          %s660 = smul.u32 4, %s32
          %p661 = scmp.lt.s32.totalorder %s660, 7
          %s662 = scalar_select %p661, %s660, 7
          %s663 = smul.addr %s662, 8
          %s664 = scalar_lea.vmem %s0, %s663
          %s665 = smul.u32 4, %s32
        $region92: #{vae_forward.1} parent=87 // pred_fallthru
          _
        // Predicated region
        $region93: #{vae_forward.1} parent=87 // pred_check
          %p666 = pneg %p78
        $region94: #{vae_forward.1} parent=87 // pred_check_branch
          %668 = sbr.rel (%p666) target = $region96
        $region95: #{vae_forward.1} parent=87 // pred_region
          %s669 = smul.u32 4, %s32
          %p670 = scmp.lt.s32.totalorder %s669, 7
          %s671 = scalar_select %p670, %s669, 7
          %s672 = smul.addr %s671, 8
          %s673 = scalar_lea.vmem %s1, %s672
          %s674 = smul.u32 4, %s32
        $region96: #{vae_forward.1} parent=87 // pred_fallthru
          _
      $region88: #{vae_forward.1} parent=5 // pred_fallthru
        _
      %p675 = scmp.le.s32.totalorder 1, %s32
      %p676 = scmp.lt.s32.totalorder %s32, 3
      %p677 = pnand %p675, %p676
      %p678 = pneg %p677
      // Predicated region
      $region97: #{vae_forward.1} parent=5 // pred_check
        _
      $region98: #{vae_forward.1} parent=5 // pred_check_branch
        %680 = sbr.rel (%p677) target = $region100
      $region99: #{vae_forward.1} parent=5 // pred_region
        %s681 = ssub.s32 %s32, 1
        // Predicated region
        $region101: #{vae_forward.1} parent=99 // pred_check
          %p682 = pneg %p105
        $region102: #{vae_forward.1} parent=99 // pred_check_branch
          %684 = sbr.rel (%p682) target = $region104
        $region103: #{vae_forward.1} parent=99 // pred_region
          %685 = dma.done [#allocation3], 1536
        $region104: #{vae_forward.1} parent=99 // pred_fallthru
          _
        // Predicated region
        $region105: #{vae_forward.1} parent=99 // pred_check
          %p686 = pneg %p147
        $region106: #{vae_forward.1} parent=99 // pred_check_branch
          %688 = sbr.rel (%p686) target = $region108
        $region107: #{vae_forward.1} parent=99 // pred_region
          %689 = dma.done [#allocation5], 24576
        $region108: #{vae_forward.1} parent=99 // pred_fallthru
          _
        // Predicated region
        $region109: #{vae_forward.1} parent=99 // pred_check
          %p690 = pneg %p189
        $region110: #{vae_forward.1} parent=99 // pred_check_branch
          %692 = sbr.rel (%p690) target = $region112
        $region111: #{vae_forward.1} parent=99 // pred_region
          %693 = dma.done [#allocation5], 8192
        $region112: #{vae_forward.1} parent=99 // pred_fallthru
          _
        // Predicated region
        $region113: #{vae_forward.1} parent=99 // pred_check
          %p694 = pneg %p315
        $region114: #{vae_forward.1} parent=99 // pred_check_branch
          %696 = sbr.rel (%p694) target = $region116
        $region115: #{vae_forward.1} parent=99 // pred_region
          %697 = dma.done [#allocation8], 6144
        $region116: #{vae_forward.1} parent=99 // pred_fallthru
          _
        // Predicated region
        $region117: #{vae_forward.1} parent=99 // pred_check
          %p698 = pneg %p357
        $region118: #{vae_forward.1} parent=99 // pred_check_branch
          %700 = sbr.rel (%p698) target = $region120
        $region119: #{vae_forward.1} parent=99 // pred_region
          %701 = dma.done [#allocation8], 24576
        $region120: #{vae_forward.1} parent=99 // pred_fallthru
          _
        // Predicated region
        $region121: #{vae_forward.1} parent=99 // pred_check
          %p702 = pneg %p399
        $region122: #{vae_forward.1} parent=99 // pred_check_branch
          %704 = sbr.rel (%p702) target = $region124
        $region123: #{vae_forward.1} parent=99 // pred_region
          %705 = dma.done [#allocation11], 8192
        $region124: #{vae_forward.1} parent=99 // pred_fallthru
          _
        // Predicated region
        $region125: #{vae_forward.1} parent=99 // pred_check
          %p706 = pneg %p441
        $region126: #{vae_forward.1} parent=99 // pred_check_branch
          %708 = sbr.rel (%p706) target = $region128
        $region127: #{vae_forward.1} parent=99 // pred_region
          %709 = dma.done [#allocation11], 2048
        $region128: #{vae_forward.1} parent=99 // pred_fallthru
          _
        %s710 = smul.u32 4, %s37
        %p711 = scmp.lt.s32.totalorder %s710, 7
        %s712 = scalar_select %p711, %s710, 7
        %s713 = smul.addr %s712, 8
        %s714 = scalar_lea.vmem %s0, %s713
        %p715 = pneg %p58
        %p716 = pneg %p55
        %s717 = smul.u32 4, %s37
        %p718 = scmp.lt.s32.totalorder %s717, 7
        %s719 = scalar_select %p718, %s717, 7
        %s720 = smul.addr %s719, 8
        %s721 = scalar_lea.vmem %s1, %s720
        %p722 = pneg %p84
        %p723 = pneg %p81
        %p724 = pneg %p105
        %p725 = pneg %p102
        %p726 = pneg %p126
        %p727 = pneg %p123
        %p728 = pneg %p147
        %p729 = pneg %p144
        %p730 = pneg %p168
        %p731 = pneg %p165
        %p732 = pneg %p189
        %p733 = pneg %p186
        %p734 = pneg %p210
        %p735 = pneg %p207
        %p736 = pneg %p231
        %p737 = pneg %p228
        %p738 = pneg %p252
        %p739 = pneg %p249
        %p740 = pneg %p273
        %p741 = pneg %p270
        %p742 = pneg %p294
        %p743 = pneg %p291
        %p744 = pneg %p315
        %p745 = pneg %p312
        %p746 = pneg %p336
        %p747 = pneg %p333
        %p748 = pneg %p357
        %p749 = pneg %p354
        %p750 = pneg %p378
        %p751 = pneg %p375
        %p752 = pneg %p399
        %p753 = pneg %p396
        %p754 = pneg %p420
        %p755 = pneg %p417
        %p756 = pneg %p441
        %p757 = pneg %p438
        %p758 = pneg %p462
        %p759 = pneg %p459
        %p760 = pneg %p488
        %p761 = pneg %p485
        %s762 = smul.u32 4, %s37
        %p763 = scmp.lt.s32.totalorder %s762, 7
        %s764 = scalar_select %p763, %s762, 7
        %s765 = smul.addr %s764, 8
        %s766 = scalar_lea.vmem %s20, %s765
        %p767 = pneg %p514
        %p768 = pneg %p511
        %s769 = smul.u32 4, %s37
        %p770 = scmp.lt.s32.totalorder %s769, 7
        %s771 = scalar_select %p770, %s769, 7
        %s772 = smul.addr %s771, 2
        %s773 = smul.addr %s772, 8
        %s774 = scalar_lea.vmem %s21, %s773
        %s775 = smul.u32 4, %s37
        %p776 = scmp.lt.s32.totalorder %s775, 7
        %s777 = scalar_select %p776, %s775, 7
        %s778 = smul.addr %s777, 8
        %s779 = scalar_lea.vmem %s0, %s778
        %s780 = smul.u32 4, %s37
        %s781 = smul.u32 4, %s37
        %p782 = scmp.lt.s32.totalorder %s781, 7
        %s783 = scalar_select %p782, %s781, 7
        %s784 = smul.addr %s783, 8
        %s785 = scalar_lea.vmem %s1, %s784
        %s786 = smul.u32 4, %s37
        %s787 = smul.u32 4, %s37
        %p788 = scmp.lt.s32.totalorder %s787, 7
        %s789 = scalar_select %p788, %s787, 7
        %s790 = smul.addr %s789, 8
        %s791 = scalar_lea.vmem %s20, %s790
        %s792 = smul.u32 4, %s37
        %s793 = smul.u32 4, %s37
        %p794 = scmp.lt.s32.totalorder %s793, 7
        %s795 = scalar_select %p794, %s793, 7
        %s796 = smul.addr %s795, 2
        %s797 = smul.addr %s796, 8
        %s798 = scalar_lea.vmem %s21, %s797
        %s799 = smul.u32 4, %s37
        %v801 = vld [vmem:[%s779] sm:$0xff]
        %v802 = vld [vmem:[%s779 + $0x8] sm:$0xff]
        %v803 = vld [vmem:[%s779 + $0x10] sm:$0xff]
        %v804 = vld [vmem:[%s779 + $0x18] sm:$0xff]
        %v805 = vpack.c.bf16 %v802, %v801
        %v806 = vpack.c.bf16 %v804, %v803
        %v807 = vld [vmem:[#allocation2] sm:$0xff]
        %v808 = vld [vmem:[#allocation2 + $0x8] sm:$0xff]
        %v809 = vld [vmem:[#allocation2 + $0x10] sm:$0xff]
        %v810 = vld [vmem:[#allocation2 + $0x18] sm:$0xff]
        %v811 = vld [vmem:[#allocation2 + $0x20] sm:$0xff]
        %v812 = vld [vmem:[#allocation2 + $0x28] sm:$0xff]
        %v813 = vld [vmem:[#allocation2 + $0x30] sm:$0xff]
        %v814 = vld [vmem:[#allocation2 + $0x38] sm:$0xff]
        %v815 = vld [vmem:[#allocation2 + $0x40] sm:$0xff]
        %v816 = vld [vmem:[#allocation2 + $0x48] sm:$0xff]
        %v817 = vld [vmem:[#allocation2 + $0x50] sm:$0xff]
        %v818 = vld [vmem:[#allocation2 + $0x58] sm:$0xff]
        %v819 = vld [vmem:[%s3] sm:$0x3f]
        %v821 = vlaneseq
        %v822 = vshrl.u32 %v821, 7
        %v823 = vsub.s32 0, %v822
        %v824 = vrot.slane %v819, %v823
        %v825 = vlaneseq
        %v826 = vshrl.u32 %v825, 7
        %v827 = vsub.s32 1, %v826
        %v828 = vrot.slane %v819, %v827
        %v829 = vlaneseq
        %v830 = vshrl.u32 %v829, 7
        %v831 = vsub.s32 2, %v830
        %v832 = vrot.slane %v819, %v831
        %v833 = vlaneseq
        %v834 = vshrl.u32 %v833, 7
        %v835 = vsub.s32 3, %v834
        %v836 = vrot.slane %v819, %v835
        %v837 = vlaneseq
        %v838 = vshrl.u32 %v837, 7
        %v839 = vsub.s32 4, %v838
        %v840 = vrot.slane %v819, %v839
        %v841 = vlaneseq
        %v842 = vshrl.u32 %v841, 7
        %v843 = vsub.s32 5, %v842
        %v844 = vrot.slane %v819, %v843
        %v863 = vunpack.c.l.b16 %v807
        %v864 = vunpack.c.h.b16 %v807
        %v865 = vunpack.c.l.b16 %v808
        %v866 = vunpack.c.h.b16 %v808
        %v867 = vunpack.c.l.b16 %v809
        %v868 = vunpack.c.h.b16 %v809
        %v869 = vunpack.c.l.b16 %v810
        %v870 = vunpack.c.h.b16 %v810
        %v871 = vunpack.c.l.b16 %v811
        %v872 = vunpack.c.h.b16 %v811
        %v873 = vunpack.c.l.b16 %v812
        %v874 = vunpack.c.h.b16 %v812
        %v875 = vunpack.c.l.b16 %v813
        %v876 = vunpack.c.h.b16 %v813
        %v877 = vunpack.c.l.b16 %v814
        %v878 = vunpack.c.h.b16 %v814
        %v879 = vunpack.c.l.b16 %v815
        %v880 = vunpack.c.h.b16 %v815
        %v881 = vunpack.c.l.b16 %v816
        %v882 = vunpack.c.h.b16 %v816
        %v883 = vunpack.c.l.b16 %v817
        %v884 = vunpack.c.h.b16 %v817
        %v885 = vunpack.c.l.b16 %v818
        %v886 = vunpack.c.h.b16 %v818
        %v887 = vpack.c.b16 %v869, %v863
        %v888 = vpack.c.b16 %v870, %v864
        %v889 = vpack.c.b16 %v871, %v865
        %v890 = vpack.c.b16 %v872, %v866
        %v891 = vpack.c.b16 %v873, %v867
        %v892 = vpack.c.b16 %v874, %v868
        %v893 = vpack.c.b16 %v881, %v875
        %v894 = vpack.c.b16 %v882, %v876
        %v895 = vpack.c.b16 %v883, %v877
        %v896 = vpack.c.b16 %v884, %v878
        %v897 = vpack.c.b16 %v885, %v879
        %v898 = vpack.c.b16 %v886, %v880
        %vm911 = vcmask 261120
        %v913 = vsel %vm911, %v805, 0
        %v916 = vsel %vm911, %v806, 0
        %918 = vmatprep.subr.bf16.mxu0 0
        %919 = vmatpush1.bf16.msra.mxu0 0
        %920 = vmatprep.subr.bf16.mxu0 0
        %921 = vmatpush1.bf16.msra.mxu0 0
        %922 = vmatprep.subr.bf16.mxu0 0
        %923 = vmatpush1.bf16.msra.mxu0 0
        %924 = vmatprep.subr.bf16.mxu0 0
        %925 = vmatpush1.bf16.msra.mxu0 0
        %926 = vmatprep.subr.bf16.mxu0 0
        %927 = vmatpush1.bf16.msra.mxu0 0
        %928 = vmatprep.subr.bf16.mxu0 0
        %929 = vmatpush1.bf16.msra.mxu0 0
        %930 = vmatprep.subr.bf16.mxu0 %v894
        %931 = vmatpush1.bf16.msra.mxu0 %v893
        %932 = vmatprep.subr.bf16.mxu0 %v888
        %933 = vmatpush1.bf16.msra.mxu0 %v887
        %934 = vmatprep.subr.bf16.mxu0 0
        %935 = vmatpush2.bf16.msra.mxu0 0
        %936 = vmatprep.subr.bf16.mxu0 0
        %937 = vmatpush2.bf16.msra.mxu0 0
        %938 = vmatprep.subr.bf16.mxu0 0
        %939 = vmatpush2.bf16.msra.mxu0 0
        %940 = vmatprep.subr.bf16.mxu0 0
        %941 = vmatpush2.bf16.msra.mxu0 0
        %942 = vmatprep.subr.bf16.mxu0 0
        %943 = vmatpush2.bf16.msra.mxu0 0
        %944 = vmatprep.subr.bf16.mxu0 0
        %945 = vmatpush2.bf16.msra.mxu0 0
        %946 = vmatprep.subr.bf16.mxu0 0
        %947 = vmatpush2.bf16.msra.mxu0 0
        %948 = vmatprep.subr.bf16.mxu0 0
        %949 = vmatpush2.bf16.msra.mxu0 0
        %950 = vmatprep.mubr.bf16.mxu0 0
        %951 = vmatmul.mubr.bf16.gmra.mxu0 %v913
        %v952 = vpop.f32.mrf.mxu0
        %v953 = vadd.f32 %v824, %v952
        %v954 = vpop.f32.mrf.mxu0
        %v955 = vadd.f32 %v828, %v954
        %v956 = vpop.f32.mrf.mxu0
        %v957 = vadd.f32 %v824, %v956
        %v958 = vpop.f32.mrf.mxu0
        %v959 = vadd.f32 %v828, %v958
        %960 = vmatprep.mubr.bf16.mxu0 0
        %961 = vmatmul.mubr.bf16.gmra.mxu0 %v916
        %v962 = vpop.f32.mrf.mxu0
        %v963 = vadd.f32 %v824, %v962
        %v964 = vpop.f32.mrf.mxu0
        %v965 = vadd.f32 %v828, %v964
        %v966 = vpop.f32.mrf.mxu0
        %v967 = vadd.f32 %v824, %v966
        %v968 = vpop.f32.mrf.mxu0
        %v969 = vadd.f32 %v828, %v968
        %970 = vdwg.mxu0
        %971 = vmatprep.subr.bf16.mxu0 0
        %972 = vmatpush1.bf16.msra.mxu0 0
        %973 = vmatprep.subr.bf16.mxu0 0
        %974 = vmatpush1.bf16.msra.mxu0 0
        %975 = vmatprep.subr.bf16.mxu0 0
        %976 = vmatpush1.bf16.msra.mxu0 0
        %977 = vmatprep.subr.bf16.mxu0 0
        %978 = vmatpush1.bf16.msra.mxu0 0
        %979 = vmatprep.subr.bf16.mxu0 0
        %980 = vmatpush1.bf16.msra.mxu0 0
        %981 = vmatprep.subr.bf16.mxu0 0
        %982 = vmatpush1.bf16.msra.mxu0 0
        %983 = vmatprep.subr.bf16.mxu0 %v896
        %984 = vmatpush1.bf16.msra.mxu0 %v895
        %985 = vmatprep.subr.bf16.mxu0 %v890
        %986 = vmatpush1.bf16.msra.mxu0 %v889
        %987 = vmatprep.subr.bf16.mxu0 0
        %988 = vmatpush2.bf16.msra.mxu0 0
        %989 = vmatprep.subr.bf16.mxu0 0
        %990 = vmatpush2.bf16.msra.mxu0 0
        %991 = vmatprep.subr.bf16.mxu0 0
        %992 = vmatpush2.bf16.msra.mxu0 0
        %993 = vmatprep.subr.bf16.mxu0 0
        %994 = vmatpush2.bf16.msra.mxu0 0
        %995 = vmatprep.subr.bf16.mxu0 0
        %996 = vmatpush2.bf16.msra.mxu0 0
        %997 = vmatprep.subr.bf16.mxu0 0
        %998 = vmatpush2.bf16.msra.mxu0 0
        %999 = vmatprep.subr.bf16.mxu0 0
        %1000 = vmatpush2.bf16.msra.mxu0 0
        %1001 = vmatprep.subr.bf16.mxu0 0
        %1002 = vmatpush2.bf16.msra.mxu0 0
        %1003 = vmatprep.mubr.bf16.mxu0 0
        %1004 = vmatmul.mubr.bf16.gmra.mxu0 %v913
        %v1005 = vpop.f32.mrf.mxu0
        %v1006 = vadd.f32 %v832, %v1005
        %v1007 = vpop.f32.mrf.mxu0
        %v1008 = vadd.f32 %v836, %v1007
        %v1009 = vpop.f32.mrf.mxu0
        %v1010 = vadd.f32 %v832, %v1009
        %v1011 = vpop.f32.mrf.mxu0
        %v1012 = vadd.f32 %v836, %v1011
        %1013 = vmatprep.mubr.bf16.mxu0 0
        %1014 = vmatmul.mubr.bf16.gmra.mxu0 %v916
        %v1015 = vpop.f32.mrf.mxu0
        %v1016 = vadd.f32 %v832, %v1015
        %v1017 = vpop.f32.mrf.mxu0
        %v1018 = vadd.f32 %v836, %v1017
        %v1019 = vpop.f32.mrf.mxu0
        %v1020 = vadd.f32 %v832, %v1019
        %v1021 = vpop.f32.mrf.mxu0
        %v1022 = vadd.f32 %v836, %v1021
        %1023 = vdwg.mxu0
        %1024 = vmatprep.subr.bf16.mxu0 0
        %1025 = vmatpush1.bf16.msra.mxu0 0
        %1026 = vmatprep.subr.bf16.mxu0 0
        %1027 = vmatpush1.bf16.msra.mxu0 0
        %1028 = vmatprep.subr.bf16.mxu0 0
        %1029 = vmatpush1.bf16.msra.mxu0 0
        %1030 = vmatprep.subr.bf16.mxu0 0
        %1031 = vmatpush1.bf16.msra.mxu0 0
        %1032 = vmatprep.subr.bf16.mxu0 0
        %1033 = vmatpush1.bf16.msra.mxu0 0
        %1034 = vmatprep.subr.bf16.mxu0 0
        %1035 = vmatpush1.bf16.msra.mxu0 0
        %1036 = vmatprep.subr.bf16.mxu0 %v898
        %1037 = vmatpush1.bf16.msra.mxu0 %v897
        %1038 = vmatprep.subr.bf16.mxu0 %v892
        %1039 = vmatpush1.bf16.msra.mxu0 %v891
        %1040 = vmatprep.subr.bf16.mxu0 0
        %1041 = vmatpush2.bf16.msra.mxu0 0
        %1042 = vmatprep.subr.bf16.mxu0 0
        %1043 = vmatpush2.bf16.msra.mxu0 0
        %1044 = vmatprep.subr.bf16.mxu0 0
        %1045 = vmatpush2.bf16.msra.mxu0 0
        %1046 = vmatprep.subr.bf16.mxu0 0
        %1047 = vmatpush2.bf16.msra.mxu0 0
        %1048 = vmatprep.subr.bf16.mxu0 0
        %1049 = vmatpush2.bf16.msra.mxu0 0
        %1050 = vmatprep.subr.bf16.mxu0 0
        %1051 = vmatpush2.bf16.msra.mxu0 0
        %1052 = vmatprep.subr.bf16.mxu0 0
        %1053 = vmatpush2.bf16.msra.mxu0 0
        %1054 = vmatprep.subr.bf16.mxu0 0
        %1055 = vmatpush2.bf16.msra.mxu0 0
        %1056 = vmatprep.mubr.bf16.mxu0 0
        %1057 = vmatmul.mubr.bf16.gmra.mxu0 %v913
        %v1058 = vpop.f32.mrf.mxu0
        %v1059 = vadd.f32 %v840, %v1058
        %v1060 = vpop.f32.mrf.mxu0
        %v1061 = vadd.f32 %v844, %v1060
        %v1062 = vpop.f32.mrf.mxu0
        %v1063 = vadd.f32 %v840, %v1062
        %v1064 = vpop.f32.mrf.mxu0
        %v1065 = vadd.f32 %v844, %v1064
        %1066 = vmatprep.mubr.bf16.mxu0 0
        %1067 = vmatmul.mubr.bf16.gmra.mxu0 %v916
        %v1068 = vpop.f32.mrf.mxu0
        %v1069 = vadd.f32 %v840, %v1068
        %v1070 = vpop.f32.mrf.mxu0
        %v1071 = vadd.f32 %v844, %v1070
        %v1072 = vpop.f32.mrf.mxu0
        %v1073 = vadd.f32 %v840, %v1072
        %v1074 = vpop.f32.mrf.mxu0
        %v1075 = vadd.f32 %v844, %v1074
        %1076 = vdwg.mxu0
        %v1077 = vmax.f32 %v953, 0.0
        %v1078 = vmax.f32 %v955, 0.0
        %v1079 = vmax.f32 %v1006, 0.0
        %v1080 = vmax.f32 %v1008, 0.0
        %v1081 = vmax.f32 %v1059, 0.0
        %v1082 = vmax.f32 %v1061, 0.0
        %v1083 = vmax.f32 %v957, 0.0
        %v1084 = vmax.f32 %v959, 0.0
        %v1085 = vmax.f32 %v1010, 0.0
        %v1086 = vmax.f32 %v1012, 0.0
        %v1087 = vmax.f32 %v1063, 0.0
        %v1088 = vmax.f32 %v1065, 0.0
        %v1089 = vmax.f32 %v963, 0.0
        %v1090 = vmax.f32 %v965, 0.0
        %v1091 = vmax.f32 %v1016, 0.0
        %v1092 = vmax.f32 %v1018, 0.0
        %v1093 = vmax.f32 %v1069, 0.0
        %v1094 = vmax.f32 %v1071, 0.0
        %v1095 = vmax.f32 %v967, 0.0
        %v1096 = vmax.f32 %v969, 0.0
        %v1097 = vmax.f32 %v1020, 0.0
        %v1098 = vmax.f32 %v1022, 0.0
        %v1099 = vmax.f32 %v1073, 0.0
        %v1100 = vmax.f32 %v1075, 0.0
        %v1101 = vpack.c.bf16 %v1083, %v1077
        %v1102 = vpack.c.bf16 %v1084, %v1078
        %v1103 = vpack.c.bf16 %v1085, %v1079
        %v1104 = vpack.c.bf16 %v1086, %v1080
        %v1105 = vpack.c.bf16 %v1087, %v1081
        %v1106 = vpack.c.bf16 %v1088, %v1082
        %v1107 = vpack.c.bf16 %v1095, %v1089
        %v1108 = vpack.c.bf16 %v1096, %v1090
        %v1109 = vpack.c.bf16 %v1097, %v1091
        %v1110 = vpack.c.bf16 %v1098, %v1092
        %v1111 = vpack.c.bf16 %v1099, %v1093
        %v1112 = vpack.c.bf16 %v1100, %v1094
        %v1113 = vld [vmem:[#allocation4] sm:$0xff]
        %v1114 = vld [vmem:[#allocation4 + $0x8] sm:$0xff]
        %v1115 = vld [vmem:[#allocation4 + $0x10] sm:$0xff]
        %v1116 = vld [vmem:[#allocation4 + $0x18] sm:$0xff]
        %v1117 = vld [vmem:[#allocation4 + $0x20] sm:$0xff]
        %v1118 = vld [vmem:[#allocation4 + $0x28] sm:$0xff]
        %v1119 = vld [vmem:[#allocation4 + $0x30] sm:$0xff]
        %v1120 = vld [vmem:[#allocation4 + $0x38] sm:$0xff]
        %v1121 = vld [vmem:[#allocation4 + $0x40] sm:$0xff]
        %v1122 = vld [vmem:[#allocation4 + $0x48] sm:$0xff]
        %v1123 = vld [vmem:[#allocation4 + $0x50] sm:$0xff]
        %v1124 = vld [vmem:[#allocation4 + $0x58] sm:$0xff]
        %v1125 = vld [vmem:[#allocation4 + $0x60] sm:$0xff]
        %v1126 = vld [vmem:[#allocation4 + $0x68] sm:$0xff]
        %v1127 = vld [vmem:[#allocation4 + $0x70] sm:$0xff]
        %v1128 = vld [vmem:[#allocation4 + $0x78] sm:$0xff]
        %v1129 = vld [vmem:[#allocation4 + $0x80] sm:$0xff]
        %v1130 = vld [vmem:[#allocation4 + $0x88] sm:$0xff]
        %v1131 = vld [vmem:[#allocation4 + $0x90] sm:$0xff]
        %v1132 = vld [vmem:[#allocation4 + $0x98] sm:$0xff]
        %v1133 = vld [vmem:[#allocation4 + $0xa0] sm:$0xff]
        %v1134 = vld [vmem:[#allocation4 + $0xa8] sm:$0xff]
        %v1135 = vld [vmem:[#allocation4 + $0xb0] sm:$0xff]
        %v1136 = vld [vmem:[#allocation4 + $0xb8] sm:$0xff]
        %v1137 = vld [vmem:[#allocation4 + $0xc0] sm:$0xff]
        %v1138 = vld [vmem:[#allocation4 + $0xc8] sm:$0xff]
        %v1139 = vld [vmem:[#allocation4 + $0xd0] sm:$0xff]
        %v1140 = vld [vmem:[#allocation4 + $0xd8] sm:$0xff]
        %v1141 = vld [vmem:[#allocation4 + $0xe0] sm:$0xff]
        %v1142 = vld [vmem:[#allocation4 + $0xe8] sm:$0xff]
        %v1143 = vld [vmem:[#allocation4 + $0xf0] sm:$0xff]
        %v1144 = vld [vmem:[#allocation4 + $0xf8] sm:$0xff]
        %v1145 = vld [vmem:[#allocation4 + $0x100] sm:$0xff]
        %v1146 = vld [vmem:[#allocation4 + $0x108] sm:$0xff]
        %v1147 = vld [vmem:[#allocation4 + $0x110] sm:$0xff]
        %v1148 = vld [vmem:[#allocation4 + $0x118] sm:$0xff]
        %v1149 = vld [vmem:[#allocation4 + $0x120] sm:$0xff]
        %v1150 = vld [vmem:[#allocation4 + $0x128] sm:$0xff]
        %v1151 = vld [vmem:[#allocation4 + $0x130] sm:$0xff]
        %v1152 = vld [vmem:[#allocation4 + $0x138] sm:$0xff]
        %v1153 = vld [vmem:[#allocation4 + $0x140] sm:$0xff]
        %v1154 = vld [vmem:[#allocation4 + $0x148] sm:$0xff]
        %v1155 = vld [vmem:[#allocation4 + $0x150] sm:$0xff]
        %v1156 = vld [vmem:[#allocation4 + $0x158] sm:$0xff]
        %v1157 = vld [vmem:[#allocation4 + $0x160] sm:$0xff]
        %v1158 = vld [vmem:[#allocation4 + $0x168] sm:$0xff]
        %v1159 = vld [vmem:[#allocation4 + $0x170] sm:$0xff]
        %v1160 = vld [vmem:[#allocation4 + $0x178] sm:$0xff]
        %v1161 = vld [vmem:[#allocation4 + $0x180] sm:$0xff]
        %v1162 = vld [vmem:[#allocation4 + $0x188] sm:$0xff]
        %v1163 = vld [vmem:[#allocation4 + $0x190] sm:$0xff]
        %v1164 = vld [vmem:[#allocation4 + $0x198] sm:$0xff]
        %v1165 = vld [vmem:[#allocation4 + $0x1a0] sm:$0xff]
        %v1166 = vld [vmem:[#allocation4 + $0x1a8] sm:$0xff]
        %v1167 = vld [vmem:[#allocation4 + $0x1b0] sm:$0xff]
        %v1168 = vld [vmem:[#allocation4 + $0x1b8] sm:$0xff]
        %v1169 = vld [vmem:[#allocation4 + $0x1c0] sm:$0xff]
        %v1170 = vld [vmem:[#allocation4 + $0x1c8] sm:$0xff]
        %v1171 = vld [vmem:[#allocation4 + $0x1d0] sm:$0xff]
        %v1172 = vld [vmem:[#allocation4 + $0x1d8] sm:$0xff]
        %v1173 = vld [vmem:[#allocation4 + $0x1e0] sm:$0xff]
        %v1174 = vld [vmem:[#allocation4 + $0x1e8] sm:$0xff]
        %v1175 = vld [vmem:[#allocation4 + $0x1f0] sm:$0xff]
        %v1176 = vld [vmem:[#allocation4 + $0x1f8] sm:$0xff]
        %v1177 = vld [vmem:[#allocation4 + $0x200] sm:$0xff]
        %v1178 = vld [vmem:[#allocation4 + $0x208] sm:$0xff]
        %v1179 = vld [vmem:[#allocation4 + $0x210] sm:$0xff]
        %v1180 = vld [vmem:[#allocation4 + $0x218] sm:$0xff]
        %v1181 = vld [vmem:[#allocation4 + $0x220] sm:$0xff]
        %v1182 = vld [vmem:[#allocation4 + $0x228] sm:$0xff]
        %v1183 = vld [vmem:[#allocation4 + $0x230] sm:$0xff]
        %v1184 = vld [vmem:[#allocation4 + $0x238] sm:$0xff]
        %v1185 = vld [vmem:[#allocation4 + $0x240] sm:$0xff]
        %v1186 = vld [vmem:[#allocation4 + $0x248] sm:$0xff]
        %v1187 = vld [vmem:[#allocation4 + $0x250] sm:$0xff]
        %v1188 = vld [vmem:[#allocation4 + $0x258] sm:$0xff]
        %v1189 = vld [vmem:[#allocation4 + $0x260] sm:$0xff]
        %v1190 = vld [vmem:[#allocation4 + $0x268] sm:$0xff]
        %v1191 = vld [vmem:[#allocation4 + $0x270] sm:$0xff]
        %v1192 = vld [vmem:[#allocation4 + $0x278] sm:$0xff]
        %v1193 = vld [vmem:[#allocation4 + $0x280] sm:$0xff]
        %v1194 = vld [vmem:[#allocation4 + $0x288] sm:$0xff]
        %v1195 = vld [vmem:[#allocation4 + $0x290] sm:$0xff]
        %v1196 = vld [vmem:[#allocation4 + $0x298] sm:$0xff]
        %v1197 = vld [vmem:[#allocation4 + $0x2a0] sm:$0xff]
        %v1198 = vld [vmem:[#allocation4 + $0x2a8] sm:$0xff]
        %v1199 = vld [vmem:[#allocation4 + $0x2b0] sm:$0xff]
        %v1200 = vld [vmem:[#allocation4 + $0x2b8] sm:$0xff]
        %v1201 = vld [vmem:[#allocation4 + $0x2c0] sm:$0xff]
        %v1202 = vld [vmem:[#allocation4 + $0x2c8] sm:$0xff]
        %v1203 = vld [vmem:[#allocation4 + $0x2d0] sm:$0xff]
        %v1204 = vld [vmem:[#allocation4 + $0x2d8] sm:$0xff]
        %v1205 = vld [vmem:[#allocation4 + $0x2e0] sm:$0xff]
        %v1206 = vld [vmem:[#allocation4 + $0x2e8] sm:$0xff]
        %v1207 = vld [vmem:[#allocation4 + $0x2f0] sm:$0xff]
        %v1208 = vld [vmem:[#allocation4 + $0x2f8] sm:$0xff]
        %v1209 = vld [vmem:[#allocation4 + $0x300] sm:$0xff]
        %v1210 = vld [vmem:[#allocation4 + $0x308] sm:$0xff]
        %v1211 = vld [vmem:[#allocation4 + $0x310] sm:$0xff]
        %v1212 = vld [vmem:[#allocation4 + $0x318] sm:$0xff]
        %v1213 = vld [vmem:[#allocation4 + $0x320] sm:$0xff]
        %v1214 = vld [vmem:[#allocation4 + $0x328] sm:$0xff]
        %v1215 = vld [vmem:[#allocation4 + $0x330] sm:$0xff]
        %v1216 = vld [vmem:[#allocation4 + $0x338] sm:$0xff]
        %v1217 = vld [vmem:[#allocation4 + $0x340] sm:$0xff]
        %v1218 = vld [vmem:[#allocation4 + $0x348] sm:$0xff]
        %v1219 = vld [vmem:[#allocation4 + $0x350] sm:$0xff]
        %v1220 = vld [vmem:[#allocation4 + $0x358] sm:$0xff]
        %v1221 = vld [vmem:[#allocation4 + $0x360] sm:$0xff]
        %v1222 = vld [vmem:[#allocation4 + $0x368] sm:$0xff]
        %v1223 = vld [vmem:[#allocation4 + $0x370] sm:$0xff]
        %v1224 = vld [vmem:[#allocation4 + $0x378] sm:$0xff]
        %v1225 = vld [vmem:[#allocation4 + $0x380] sm:$0xff]
        %v1226 = vld [vmem:[#allocation4 + $0x388] sm:$0xff]
        %v1227 = vld [vmem:[#allocation4 + $0x390] sm:$0xff]
        %v1228 = vld [vmem:[#allocation4 + $0x398] sm:$0xff]
        %v1229 = vld [vmem:[#allocation4 + $0x3a0] sm:$0xff]
        %v1230 = vld [vmem:[#allocation4 + $0x3a8] sm:$0xff]
        %v1231 = vld [vmem:[#allocation4 + $0x3b0] sm:$0xff]
        %v1232 = vld [vmem:[#allocation4 + $0x3b8] sm:$0xff]
        %v1233 = vld [vmem:[#allocation4 + $0x3c0] sm:$0xff]
        %v1234 = vld [vmem:[#allocation4 + $0x3c8] sm:$0xff]
        %v1235 = vld [vmem:[#allocation4 + $0x3d0] sm:$0xff]
        %v1236 = vld [vmem:[#allocation4 + $0x3d8] sm:$0xff]
        %v1237 = vld [vmem:[#allocation4 + $0x3e0] sm:$0xff]
        %v1238 = vld [vmem:[#allocation4 + $0x3e8] sm:$0xff]
        %v1239 = vld [vmem:[#allocation4 + $0x3f0] sm:$0xff]
        %v1240 = vld [vmem:[#allocation4 + $0x3f8] sm:$0xff]
        %v1241 = vld [vmem:[#allocation4 + $0x400] sm:$0xff]
        %v1242 = vld [vmem:[#allocation4 + $0x408] sm:$0xff]
        %v1243 = vld [vmem:[#allocation4 + $0x410] sm:$0xff]
        %v1244 = vld [vmem:[#allocation4 + $0x418] sm:$0xff]
        %v1245 = vld [vmem:[#allocation4 + $0x420] sm:$0xff]
        %v1246 = vld [vmem:[#allocation4 + $0x428] sm:$0xff]
        %v1247 = vld [vmem:[#allocation4 + $0x430] sm:$0xff]
        %v1248 = vld [vmem:[#allocation4 + $0x438] sm:$0xff]
        %v1249 = vld [vmem:[#allocation4 + $0x440] sm:$0xff]
        %v1250 = vld [vmem:[#allocation4 + $0x448] sm:$0xff]
        %v1251 = vld [vmem:[#allocation4 + $0x450] sm:$0xff]
        %v1252 = vld [vmem:[#allocation4 + $0x458] sm:$0xff]
        %v1253 = vld [vmem:[#allocation4 + $0x460] sm:$0xff]
        %v1254 = vld [vmem:[#allocation4 + $0x468] sm:$0xff]
        %v1255 = vld [vmem:[#allocation4 + $0x470] sm:$0xff]
        %v1256 = vld [vmem:[#allocation4 + $0x478] sm:$0xff]
        %v1257 = vld [vmem:[#allocation4 + $0x480] sm:$0xff]
        %v1258 = vld [vmem:[#allocation4 + $0x488] sm:$0xff]
        %v1259 = vld [vmem:[#allocation4 + $0x490] sm:$0xff]
        %v1260 = vld [vmem:[#allocation4 + $0x498] sm:$0xff]
        %v1261 = vld [vmem:[#allocation4 + $0x4a0] sm:$0xff]
        %v1262 = vld [vmem:[#allocation4 + $0x4a8] sm:$0xff]
        %v1263 = vld [vmem:[#allocation4 + $0x4b0] sm:$0xff]
        %v1264 = vld [vmem:[#allocation4 + $0x4b8] sm:$0xff]
        %v1265 = vld [vmem:[#allocation4 + $0x4c0] sm:$0xff]
        %v1266 = vld [vmem:[#allocation4 + $0x4c8] sm:$0xff]
        %v1267 = vld [vmem:[#allocation4 + $0x4d0] sm:$0xff]
        %v1268 = vld [vmem:[#allocation4 + $0x4d8] sm:$0xff]
        %v1269 = vld [vmem:[#allocation4 + $0x4e0] sm:$0xff]
        %v1270 = vld [vmem:[#allocation4 + $0x4e8] sm:$0xff]
        %v1271 = vld [vmem:[#allocation4 + $0x4f0] sm:$0xff]
        %v1272 = vld [vmem:[#allocation4 + $0x4f8] sm:$0xff]
        %v1273 = vld [vmem:[#allocation4 + $0x500] sm:$0xff]
        %v1274 = vld [vmem:[#allocation4 + $0x508] sm:$0xff]
        %v1275 = vld [vmem:[#allocation4 + $0x510] sm:$0xff]
        %v1276 = vld [vmem:[#allocation4 + $0x518] sm:$0xff]
        %v1277 = vld [vmem:[#allocation4 + $0x520] sm:$0xff]
        %v1278 = vld [vmem:[#allocation4 + $0x528] sm:$0xff]
        %v1279 = vld [vmem:[#allocation4 + $0x530] sm:$0xff]
        %v1280 = vld [vmem:[#allocation4 + $0x538] sm:$0xff]
        %v1281 = vld [vmem:[#allocation4 + $0x540] sm:$0xff]
        %v1282 = vld [vmem:[#allocation4 + $0x548] sm:$0xff]
        %v1283 = vld [vmem:[#allocation4 + $0x550] sm:$0xff]
        %v1284 = vld [vmem:[#allocation4 + $0x558] sm:$0xff]
        %v1285 = vld [vmem:[#allocation4 + $0x560] sm:$0xff]
        %v1286 = vld [vmem:[#allocation4 + $0x568] sm:$0xff]
        %v1287 = vld [vmem:[#allocation4 + $0x570] sm:$0xff]
        %v1288 = vld [vmem:[#allocation4 + $0x578] sm:$0xff]
        %v1289 = vld [vmem:[#allocation4 + $0x580] sm:$0xff]
        %v1290 = vld [vmem:[#allocation4 + $0x588] sm:$0xff]
        %v1291 = vld [vmem:[#allocation4 + $0x590] sm:$0xff]
        %v1292 = vld [vmem:[#allocation4 + $0x598] sm:$0xff]
        %v1293 = vld [vmem:[#allocation4 + $0x5a0] sm:$0xff]
        %v1294 = vld [vmem:[#allocation4 + $0x5a8] sm:$0xff]
        %v1295 = vld [vmem:[#allocation4 + $0x5b0] sm:$0xff]
        %v1296 = vld [vmem:[#allocation4 + $0x5b8] sm:$0xff]
        %v1297 = vld [vmem:[#allocation4 + $0x5c0] sm:$0xff]
        %v1298 = vld [vmem:[#allocation4 + $0x5c8] sm:$0xff]
        %v1299 = vld [vmem:[#allocation4 + $0x5d0] sm:$0xff]
        %v1300 = vld [vmem:[#allocation4 + $0x5d8] sm:$0xff]
        %v1301 = vld [vmem:[#allocation4 + $0x5e0] sm:$0xff]
        %v1302 = vld [vmem:[#allocation4 + $0x5e8] sm:$0xff]
        %v1303 = vld [vmem:[#allocation4 + $0x5f0] sm:$0xff]
        %v1304 = vld [vmem:[#allocation4 + $0x5f8] sm:$0xff]
        %v1305 = vld [vmem:[%s5] sm:$0xf]
        %v1307 = vlaneseq
        %v1308 = vshrl.u32 %v1307, 7
        %v1309 = vsub.s32 0, %v1308
        %v1310 = vrot.slane %v1305, %v1309
        %v1311 = vlaneseq
        %v1312 = vshrl.u32 %v1311, 7
        %v1313 = vsub.s32 1, %v1312
        %v1314 = vrot.slane %v1305, %v1313
        %v1315 = vlaneseq
        %v1316 = vshrl.u32 %v1315, 7
        %v1317 = vsub.s32 2, %v1316
        %v1318 = vrot.slane %v1305, %v1317
        %v1319 = vlaneseq
        %v1320 = vshrl.u32 %v1319, 7
        %v1321 = vsub.s32 3, %v1320
        %v1322 = vrot.slane %v1305, %v1321
        %v1519 = vunpack.c.l.b16 %v1113
        %v1520 = vunpack.c.h.b16 %v1113
        %v1521 = vunpack.c.l.b16 %v1114
        %v1522 = vunpack.c.h.b16 %v1114
        %v1523 = vunpack.c.l.b16 %v1115
        %v1524 = vunpack.c.h.b16 %v1115
        %v1525 = vunpack.c.l.b16 %v1116
        %v1526 = vunpack.c.h.b16 %v1116
        %v1527 = vunpack.c.l.b16 %v1117
        %v1528 = vunpack.c.h.b16 %v1117
        %v1529 = vunpack.c.l.b16 %v1118
        %v1530 = vunpack.c.h.b16 %v1118
        %v1531 = vunpack.c.l.b16 %v1119
        %v1532 = vunpack.c.h.b16 %v1119
        %v1533 = vunpack.c.l.b16 %v1120
        %v1534 = vunpack.c.h.b16 %v1120
        %v1535 = vunpack.c.l.b16 %v1121
        %v1536 = vunpack.c.h.b16 %v1121
        %v1537 = vunpack.c.l.b16 %v1122
        %v1538 = vunpack.c.h.b16 %v1122
        %v1539 = vunpack.c.l.b16 %v1123
        %v1540 = vunpack.c.h.b16 %v1123
        %v1541 = vunpack.c.l.b16 %v1124
        %v1542 = vunpack.c.h.b16 %v1124
        %v1543 = vunpack.c.l.b16 %v1125
        %v1544 = vunpack.c.h.b16 %v1125
        %v1545 = vunpack.c.l.b16 %v1126
        %v1546 = vunpack.c.h.b16 %v1126
        %v1547 = vunpack.c.l.b16 %v1127
        %v1548 = vunpack.c.h.b16 %v1127
        %v1549 = vunpack.c.l.b16 %v1128
        %v1550 = vunpack.c.h.b16 %v1128
        %v1551 = vunpack.c.l.b16 %v1129
        %v1552 = vunpack.c.h.b16 %v1129
        %v1553 = vunpack.c.l.b16 %v1130
        %v1554 = vunpack.c.h.b16 %v1130
        %v1555 = vunpack.c.l.b16 %v1131
        %v1556 = vunpack.c.h.b16 %v1131
        %v1557 = vunpack.c.l.b16 %v1132
        %v1558 = vunpack.c.h.b16 %v1132
        %v1559 = vunpack.c.l.b16 %v1133
        %v1560 = vunpack.c.h.b16 %v1133
        %v1561 = vunpack.c.l.b16 %v1134
        %v1562 = vunpack.c.h.b16 %v1134
        %v1563 = vunpack.c.l.b16 %v1135
        %v1564 = vunpack.c.h.b16 %v1135
        %v1565 = vunpack.c.l.b16 %v1136
        %v1566 = vunpack.c.h.b16 %v1136
        %v1567 = vunpack.c.l.b16 %v1137
        %v1568 = vunpack.c.h.b16 %v1137
        %v1569 = vunpack.c.l.b16 %v1138
        %v1570 = vunpack.c.h.b16 %v1138
        %v1571 = vunpack.c.l.b16 %v1139
        %v1572 = vunpack.c.h.b16 %v1139
        %v1573 = vunpack.c.l.b16 %v1140
        %v1574 = vunpack.c.h.b16 %v1140
        %v1575 = vunpack.c.l.b16 %v1141
        %v1576 = vunpack.c.h.b16 %v1141
        %v1577 = vunpack.c.l.b16 %v1142
        %v1578 = vunpack.c.h.b16 %v1142
        %v1579 = vunpack.c.l.b16 %v1143
        %v1580 = vunpack.c.h.b16 %v1143
        %v1581 = vunpack.c.l.b16 %v1144
        %v1582 = vunpack.c.h.b16 %v1144
        %v1583 = vunpack.c.l.b16 %v1145
        %v1584 = vunpack.c.h.b16 %v1145
        %v1585 = vunpack.c.l.b16 %v1146
        %v1586 = vunpack.c.h.b16 %v1146
        %v1587 = vunpack.c.l.b16 %v1147
        %v1588 = vunpack.c.h.b16 %v1147
        %v1589 = vunpack.c.l.b16 %v1148
        %v1590 = vunpack.c.h.b16 %v1148
        %v1591 = vunpack.c.l.b16 %v1149
        %v1592 = vunpack.c.h.b16 %v1149
        %v1593 = vunpack.c.l.b16 %v1150
        %v1594 = vunpack.c.h.b16 %v1150
        %v1595 = vunpack.c.l.b16 %v1151
        %v1596 = vunpack.c.h.b16 %v1151
        %v1597 = vunpack.c.l.b16 %v1152
        %v1598 = vunpack.c.h.b16 %v1152
        %v1599 = vunpack.c.l.b16 %v1153
        %v1600 = vunpack.c.h.b16 %v1153
        %v1601 = vunpack.c.l.b16 %v1154
        %v1602 = vunpack.c.h.b16 %v1154
        %v1603 = vunpack.c.l.b16 %v1155
        %v1604 = vunpack.c.h.b16 %v1155
        %v1605 = vunpack.c.l.b16 %v1156
        %v1606 = vunpack.c.h.b16 %v1156
        %v1607 = vunpack.c.l.b16 %v1157
        %v1608 = vunpack.c.h.b16 %v1157
        %v1609 = vunpack.c.l.b16 %v1158
        %v1610 = vunpack.c.h.b16 %v1158
        %v1611 = vunpack.c.l.b16 %v1159
        %v1612 = vunpack.c.h.b16 %v1159
        %v1613 = vunpack.c.l.b16 %v1160
        %v1614 = vunpack.c.h.b16 %v1160
        %v1615 = vunpack.c.l.b16 %v1161
        %v1616 = vunpack.c.h.b16 %v1161
        %v1617 = vunpack.c.l.b16 %v1162
        %v1618 = vunpack.c.h.b16 %v1162
        %v1619 = vunpack.c.l.b16 %v1163
        %v1620 = vunpack.c.h.b16 %v1163
        %v1621 = vunpack.c.l.b16 %v1164
        %v1622 = vunpack.c.h.b16 %v1164
        %v1623 = vunpack.c.l.b16 %v1165
        %v1624 = vunpack.c.h.b16 %v1165
        %v1625 = vunpack.c.l.b16 %v1166
        %v1626 = vunpack.c.h.b16 %v1166
        %v1627 = vunpack.c.l.b16 %v1167
        %v1628 = vunpack.c.h.b16 %v1167
        %v1629 = vunpack.c.l.b16 %v1168
        %v1630 = vunpack.c.h.b16 %v1168
        %v1631 = vunpack.c.l.b16 %v1169
        %v1632 = vunpack.c.h.b16 %v1169
        %v1633 = vunpack.c.l.b16 %v1170
        %v1634 = vunpack.c.h.b16 %v1170
        %v1635 = vunpack.c.l.b16 %v1171
        %v1636 = vunpack.c.h.b16 %v1171
        %v1637 = vunpack.c.l.b16 %v1172
        %v1638 = vunpack.c.h.b16 %v1172
        %v1639 = vunpack.c.l.b16 %v1173
        %v1640 = vunpack.c.h.b16 %v1173
        %v1641 = vunpack.c.l.b16 %v1174
        %v1642 = vunpack.c.h.b16 %v1174
        %v1643 = vunpack.c.l.b16 %v1175
        %v1644 = vunpack.c.h.b16 %v1175
        %v1645 = vunpack.c.l.b16 %v1176
        %v1646 = vunpack.c.h.b16 %v1176
        %v1647 = vunpack.c.l.b16 %v1177
        %v1648 = vunpack.c.h.b16 %v1177
        %v1649 = vunpack.c.l.b16 %v1178
        %v1650 = vunpack.c.h.b16 %v1178
        %v1651 = vunpack.c.l.b16 %v1179
        %v1652 = vunpack.c.h.b16 %v1179
        %v1653 = vunpack.c.l.b16 %v1180
        %v1654 = vunpack.c.h.b16 %v1180
        %v1655 = vunpack.c.l.b16 %v1181
        %v1656 = vunpack.c.h.b16 %v1181
        %v1657 = vunpack.c.l.b16 %v1182
        %v1658 = vunpack.c.h.b16 %v1182
        %v1659 = vunpack.c.l.b16 %v1183
        %v1660 = vunpack.c.h.b16 %v1183
        %v1661 = vunpack.c.l.b16 %v1184
        %v1662 = vunpack.c.h.b16 %v1184
        %v1663 = vunpack.c.l.b16 %v1185
        %v1664 = vunpack.c.h.b16 %v1185
        %v1665 = vunpack.c.l.b16 %v1186
        %v1666 = vunpack.c.h.b16 %v1186
        %v1667 = vunpack.c.l.b16 %v1187
        %v1668 = vunpack.c.h.b16 %v1187
        %v1669 = vunpack.c.l.b16 %v1188
        %v1670 = vunpack.c.h.b16 %v1188
        %v1671 = vunpack.c.l.b16 %v1189
        %v1672 = vunpack.c.h.b16 %v1189
        %v1673 = vunpack.c.l.b16 %v1190
        %v1674 = vunpack.c.h.b16 %v1190
        %v1675 = vunpack.c.l.b16 %v1191
        %v1676 = vunpack.c.h.b16 %v1191
        %v1677 = vunpack.c.l.b16 %v1192
        %v1678 = vunpack.c.h.b16 %v1192
        %v1679 = vunpack.c.l.b16 %v1193
        %v1680 = vunpack.c.h.b16 %v1193
        %v1681 = vunpack.c.l.b16 %v1194
        %v1682 = vunpack.c.h.b16 %v1194
        %v1683 = vunpack.c.l.b16 %v1195
        %v1684 = vunpack.c.h.b16 %v1195
        %v1685 = vunpack.c.l.b16 %v1196
        %v1686 = vunpack.c.h.b16 %v1196
        %v1687 = vunpack.c.l.b16 %v1197
        %v1688 = vunpack.c.h.b16 %v1197
        %v1689 = vunpack.c.l.b16 %v1198
        %v1690 = vunpack.c.h.b16 %v1198
        %v1691 = vunpack.c.l.b16 %v1199
        %v1692 = vunpack.c.h.b16 %v1199
        %v1693 = vunpack.c.l.b16 %v1200
        %v1694 = vunpack.c.h.b16 %v1200
        %v1695 = vunpack.c.l.b16 %v1201
        %v1696 = vunpack.c.h.b16 %v1201
        %v1697 = vunpack.c.l.b16 %v1202
        %v1698 = vunpack.c.h.b16 %v1202
        %v1699 = vunpack.c.l.b16 %v1203
        %v1700 = vunpack.c.h.b16 %v1203
        %v1701 = vunpack.c.l.b16 %v1204
        %v1702 = vunpack.c.h.b16 %v1204
        %v1703 = vunpack.c.l.b16 %v1205
        %v1704 = vunpack.c.h.b16 %v1205
        %v1705 = vunpack.c.l.b16 %v1206
        %v1706 = vunpack.c.h.b16 %v1206
        %v1707 = vunpack.c.l.b16 %v1207
        %v1708 = vunpack.c.h.b16 %v1207
        %v1709 = vunpack.c.l.b16 %v1208
        %v1710 = vunpack.c.h.b16 %v1208
        %v1711 = vunpack.c.l.b16 %v1209
        %v1712 = vunpack.c.h.b16 %v1209
        %v1713 = vunpack.c.l.b16 %v1210
        %v1714 = vunpack.c.h.b16 %v1210
        %v1715 = vunpack.c.l.b16 %v1211
        %v1716 = vunpack.c.h.b16 %v1211
        %v1717 = vunpack.c.l.b16 %v1212
        %v1718 = vunpack.c.h.b16 %v1212
        %v1719 = vunpack.c.l.b16 %v1213
        %v1720 = vunpack.c.h.b16 %v1213
        %v1721 = vunpack.c.l.b16 %v1214
        %v1722 = vunpack.c.h.b16 %v1214
        %v1723 = vunpack.c.l.b16 %v1215
        %v1724 = vunpack.c.h.b16 %v1215
        %v1725 = vunpack.c.l.b16 %v1216
        %v1726 = vunpack.c.h.b16 %v1216
        %v1727 = vunpack.c.l.b16 %v1217
        %v1728 = vunpack.c.h.b16 %v1217
        %v1729 = vunpack.c.l.b16 %v1218
        %v1730 = vunpack.c.h.b16 %v1218
        %v1731 = vunpack.c.l.b16 %v1219
        %v1732 = vunpack.c.h.b16 %v1219
        %v1733 = vunpack.c.l.b16 %v1220
        %v1734 = vunpack.c.h.b16 %v1220
        %v1735 = vunpack.c.l.b16 %v1221
        %v1736 = vunpack.c.h.b16 %v1221
        %v1737 = vunpack.c.l.b16 %v1222
        %v1738 = vunpack.c.h.b16 %v1222
        %v1739 = vunpack.c.l.b16 %v1223
        %v1740 = vunpack.c.h.b16 %v1223
        %v1741 = vunpack.c.l.b16 %v1224
        %v1742 = vunpack.c.h.b16 %v1224
        %v1743 = vunpack.c.l.b16 %v1225
        %v1744 = vunpack.c.h.b16 %v1225
        %v1745 = vunpack.c.l.b16 %v1226
        %v1746 = vunpack.c.h.b16 %v1226
        %v1747 = vunpack.c.l.b16 %v1227
        %v1748 = vunpack.c.h.b16 %v1227
        %v1749 = vunpack.c.l.b16 %v1228
        %v1750 = vunpack.c.h.b16 %v1228
        %v1751 = vunpack.c.l.b16 %v1229
        %v1752 = vunpack.c.h.b16 %v1229
        %v1753 = vunpack.c.l.b16 %v1230
        %v1754 = vunpack.c.h.b16 %v1230
        %v1755 = vunpack.c.l.b16 %v1231
        %v1756 = vunpack.c.h.b16 %v1231
        %v1757 = vunpack.c.l.b16 %v1232
        %v1758 = vunpack.c.h.b16 %v1232
        %v1759 = vunpack.c.l.b16 %v1233
        %v1760 = vunpack.c.h.b16 %v1233
        %v1761 = vunpack.c.l.b16 %v1234
        %v1762 = vunpack.c.h.b16 %v1234
        %v1763 = vunpack.c.l.b16 %v1235
        %v1764 = vunpack.c.h.b16 %v1235
        %v1765 = vunpack.c.l.b16 %v1236
        %v1766 = vunpack.c.h.b16 %v1236
        %v1767 = vunpack.c.l.b16 %v1237
        %v1768 = vunpack.c.h.b16 %v1237
        %v1769 = vunpack.c.l.b16 %v1238
        %v1770 = vunpack.c.h.b16 %v1238
        %v1771 = vunpack.c.l.b16 %v1239
        %v1772 = vunpack.c.h.b16 %v1239
        %v1773 = vunpack.c.l.b16 %v1240
        %v1774 = vunpack.c.h.b16 %v1240
        %v1775 = vunpack.c.l.b16 %v1241
        %v1776 = vunpack.c.h.b16 %v1241
        %v1777 = vunpack.c.l.b16 %v1242
        %v1778 = vunpack.c.h.b16 %v1242
        %v1779 = vunpack.c.l.b16 %v1243
        %v1780 = vunpack.c.h.b16 %v1243
        %v1781 = vunpack.c.l.b16 %v1244
        %v1782 = vunpack.c.h.b16 %v1244
        %v1783 = vunpack.c.l.b16 %v1245
        %v1784 = vunpack.c.h.b16 %v1245
        %v1785 = vunpack.c.l.b16 %v1246
        %v1786 = vunpack.c.h.b16 %v1246
        %v1787 = vunpack.c.l.b16 %v1247
        %v1788 = vunpack.c.h.b16 %v1247
        %v1789 = vunpack.c.l.b16 %v1248
        %v1790 = vunpack.c.h.b16 %v1248
        %v1791 = vunpack.c.l.b16 %v1249
        %v1792 = vunpack.c.h.b16 %v1249
        %v1793 = vunpack.c.l.b16 %v1250
        %v1794 = vunpack.c.h.b16 %v1250
        %v1795 = vunpack.c.l.b16 %v1251
        %v1796 = vunpack.c.h.b16 %v1251
        %v1797 = vunpack.c.l.b16 %v1252
        %v1798 = vunpack.c.h.b16 %v1252
        %v1799 = vunpack.c.l.b16 %v1253
        %v1800 = vunpack.c.h.b16 %v1253
        %v1801 = vunpack.c.l.b16 %v1254
        %v1802 = vunpack.c.h.b16 %v1254
        %v1803 = vunpack.c.l.b16 %v1255
        %v1804 = vunpack.c.h.b16 %v1255
        %v1805 = vunpack.c.l.b16 %v1256
        %v1806 = vunpack.c.h.b16 %v1256
        %v1807 = vunpack.c.l.b16 %v1257
        %v1808 = vunpack.c.h.b16 %v1257
        %v1809 = vunpack.c.l.b16 %v1258
        %v1810 = vunpack.c.h.b16 %v1258
        %v1811 = vunpack.c.l.b16 %v1259
        %v1812 = vunpack.c.h.b16 %v1259
        %v1813 = vunpack.c.l.b16 %v1260
        %v1814 = vunpack.c.h.b16 %v1260
        %v1815 = vunpack.c.l.b16 %v1261
        %v1816 = vunpack.c.h.b16 %v1261
        %v1817 = vunpack.c.l.b16 %v1262
        %v1818 = vunpack.c.h.b16 %v1262
        %v1819 = vunpack.c.l.b16 %v1263
        %v1820 = vunpack.c.h.b16 %v1263
        %v1821 = vunpack.c.l.b16 %v1264
        %v1822 = vunpack.c.h.b16 %v1264
        %v1823 = vunpack.c.l.b16 %v1265
        %v1824 = vunpack.c.h.b16 %v1265
        %v1825 = vunpack.c.l.b16 %v1266
        %v1826 = vunpack.c.h.b16 %v1266
        %v1827 = vunpack.c.l.b16 %v1267
        %v1828 = vunpack.c.h.b16 %v1267
        %v1829 = vunpack.c.l.b16 %v1268
        %v1830 = vunpack.c.h.b16 %v1268
        %v1831 = vunpack.c.l.b16 %v1269
        %v1832 = vunpack.c.h.b16 %v1269
        %v1833 = vunpack.c.l.b16 %v1270
        %v1834 = vunpack.c.h.b16 %v1270
        %v1835 = vunpack.c.l.b16 %v1271
        %v1836 = vunpack.c.h.b16 %v1271
        %v1837 = vunpack.c.l.b16 %v1272
        %v1838 = vunpack.c.h.b16 %v1272
        %v1839 = vunpack.c.l.b16 %v1273
        %v1840 = vunpack.c.h.b16 %v1273
        %v1841 = vunpack.c.l.b16 %v1274
        %v1842 = vunpack.c.h.b16 %v1274
        %v1843 = vunpack.c.l.b16 %v1275
        %v1844 = vunpack.c.h.b16 %v1275
        %v1845 = vunpack.c.l.b16 %v1276
        %v1846 = vunpack.c.h.b16 %v1276
        %v1847 = vunpack.c.l.b16 %v1277
        %v1848 = vunpack.c.h.b16 %v1277
        %v1849 = vunpack.c.l.b16 %v1278
        %v1850 = vunpack.c.h.b16 %v1278
        %v1851 = vunpack.c.l.b16 %v1279
        %v1852 = vunpack.c.h.b16 %v1279
        %v1853 = vunpack.c.l.b16 %v1280
        %v1854 = vunpack.c.h.b16 %v1280
        %v1855 = vunpack.c.l.b16 %v1281
        %v1856 = vunpack.c.h.b16 %v1281
        %v1857 = vunpack.c.l.b16 %v1282
        %v1858 = vunpack.c.h.b16 %v1282
        %v1859 = vunpack.c.l.b16 %v1283
        %v1860 = vunpack.c.h.b16 %v1283
        %v1861 = vunpack.c.l.b16 %v1284
        %v1862 = vunpack.c.h.b16 %v1284
        %v1863 = vunpack.c.l.b16 %v1285
        %v1864 = vunpack.c.h.b16 %v1285
        %v1865 = vunpack.c.l.b16 %v1286
        %v1866 = vunpack.c.h.b16 %v1286
        %v1867 = vunpack.c.l.b16 %v1287
        %v1868 = vunpack.c.h.b16 %v1287
        %v1869 = vunpack.c.l.b16 %v1288
        %v1870 = vunpack.c.h.b16 %v1288
        %v1871 = vunpack.c.l.b16 %v1289
        %v1872 = vunpack.c.h.b16 %v1289
        %v1873 = vunpack.c.l.b16 %v1290
        %v1874 = vunpack.c.h.b16 %v1290
        %v1875 = vunpack.c.l.b16 %v1291
        %v1876 = vunpack.c.h.b16 %v1291
        %v1877 = vunpack.c.l.b16 %v1292
        %v1878 = vunpack.c.h.b16 %v1292
        %v1879 = vunpack.c.l.b16 %v1293
        %v1880 = vunpack.c.h.b16 %v1293
        %v1881 = vunpack.c.l.b16 %v1294
        %v1882 = vunpack.c.h.b16 %v1294
        %v1883 = vunpack.c.l.b16 %v1295
        %v1884 = vunpack.c.h.b16 %v1295
        %v1885 = vunpack.c.l.b16 %v1296
        %v1886 = vunpack.c.h.b16 %v1296
        %v1887 = vunpack.c.l.b16 %v1297
        %v1888 = vunpack.c.h.b16 %v1297
        %v1889 = vunpack.c.l.b16 %v1298
        %v1890 = vunpack.c.h.b16 %v1298
        %v1891 = vunpack.c.l.b16 %v1299
        %v1892 = vunpack.c.h.b16 %v1299
        %v1893 = vunpack.c.l.b16 %v1300
        %v1894 = vunpack.c.h.b16 %v1300
        %v1895 = vunpack.c.l.b16 %v1301
        %v1896 = vunpack.c.h.b16 %v1301
        %v1897 = vunpack.c.l.b16 %v1302
        %v1898 = vunpack.c.h.b16 %v1302
        %v1899 = vunpack.c.l.b16 %v1303
        %v1900 = vunpack.c.h.b16 %v1303
        %v1901 = vunpack.c.l.b16 %v1304
        %v1902 = vunpack.c.h.b16 %v1304
        %v1903 = vpack.c.b16 %v1523, %v1519
        %v1904 = vpack.c.b16 %v1524, %v1520
        %v1905 = vpack.c.b16 %v1525, %v1521
        %v1906 = vpack.c.b16 %v1526, %v1522
        %v1907 = vpack.c.b16 %v1531, %v1527
        %v1908 = vpack.c.b16 %v1532, %v1528
        %v1909 = vpack.c.b16 %v1533, %v1529
        %v1910 = vpack.c.b16 %v1534, %v1530
        %v1911 = vpack.c.b16 %v1539, %v1535
        %v1912 = vpack.c.b16 %v1540, %v1536
        %v1913 = vpack.c.b16 %v1541, %v1537
        %v1914 = vpack.c.b16 %v1542, %v1538
        %v1915 = vpack.c.b16 %v1547, %v1543
        %v1916 = vpack.c.b16 %v1548, %v1544
        %v1917 = vpack.c.b16 %v1549, %v1545
        %v1918 = vpack.c.b16 %v1550, %v1546
        %v1919 = vpack.c.b16 %v1555, %v1551
        %v1920 = vpack.c.b16 %v1556, %v1552
        %v1921 = vpack.c.b16 %v1557, %v1553
        %v1922 = vpack.c.b16 %v1558, %v1554
        %v1923 = vpack.c.b16 %v1563, %v1559
        %v1924 = vpack.c.b16 %v1564, %v1560
        %v1925 = vpack.c.b16 %v1565, %v1561
        %v1926 = vpack.c.b16 %v1566, %v1562
        %v1927 = vpack.c.b16 %v1571, %v1567
        %v1928 = vpack.c.b16 %v1572, %v1568
        %v1929 = vpack.c.b16 %v1573, %v1569
        %v1930 = vpack.c.b16 %v1574, %v1570
        %v1931 = vpack.c.b16 %v1579, %v1575
        %v1932 = vpack.c.b16 %v1580, %v1576
        %v1933 = vpack.c.b16 %v1581, %v1577
        %v1934 = vpack.c.b16 %v1582, %v1578
        %v1935 = vpack.c.b16 %v1587, %v1583
        %v1936 = vpack.c.b16 %v1588, %v1584
        %v1937 = vpack.c.b16 %v1589, %v1585
        %v1938 = vpack.c.b16 %v1590, %v1586
        %v1939 = vpack.c.b16 %v1595, %v1591
        %v1940 = vpack.c.b16 %v1596, %v1592
        %v1941 = vpack.c.b16 %v1597, %v1593
        %v1942 = vpack.c.b16 %v1598, %v1594
        %v1943 = vpack.c.b16 %v1603, %v1599
        %v1944 = vpack.c.b16 %v1604, %v1600
        %v1945 = vpack.c.b16 %v1605, %v1601
        %v1946 = vpack.c.b16 %v1606, %v1602
        %v1947 = vpack.c.b16 %v1611, %v1607
        %v1948 = vpack.c.b16 %v1612, %v1608
        %v1949 = vpack.c.b16 %v1613, %v1609
        %v1950 = vpack.c.b16 %v1614, %v1610
        %v1951 = vpack.c.b16 %v1619, %v1615
        %v1952 = vpack.c.b16 %v1620, %v1616
        %v1953 = vpack.c.b16 %v1621, %v1617
        %v1954 = vpack.c.b16 %v1622, %v1618
        %v1955 = vpack.c.b16 %v1627, %v1623
        %v1956 = vpack.c.b16 %v1628, %v1624
        %v1957 = vpack.c.b16 %v1629, %v1625
        %v1958 = vpack.c.b16 %v1630, %v1626
        %v1959 = vpack.c.b16 %v1635, %v1631
        %v1960 = vpack.c.b16 %v1636, %v1632
        %v1961 = vpack.c.b16 %v1637, %v1633
        %v1962 = vpack.c.b16 %v1638, %v1634
        %v1963 = vpack.c.b16 %v1643, %v1639
        %v1964 = vpack.c.b16 %v1644, %v1640
        %v1965 = vpack.c.b16 %v1645, %v1641
        %v1966 = vpack.c.b16 %v1646, %v1642
        %v1967 = vpack.c.b16 %v1651, %v1647
        %v1968 = vpack.c.b16 %v1652, %v1648
        %v1969 = vpack.c.b16 %v1653, %v1649
        %v1970 = vpack.c.b16 %v1654, %v1650
        %v1971 = vpack.c.b16 %v1659, %v1655
        %v1972 = vpack.c.b16 %v1660, %v1656
        %v1973 = vpack.c.b16 %v1661, %v1657
        %v1974 = vpack.c.b16 %v1662, %v1658
        %v1975 = vpack.c.b16 %v1667, %v1663
        %v1976 = vpack.c.b16 %v1668, %v1664
        %v1977 = vpack.c.b16 %v1669, %v1665
        %v1978 = vpack.c.b16 %v1670, %v1666
        %v1979 = vpack.c.b16 %v1675, %v1671
        %v1980 = vpack.c.b16 %v1676, %v1672
        %v1981 = vpack.c.b16 %v1677, %v1673
        %v1982 = vpack.c.b16 %v1678, %v1674
        %v1983 = vpack.c.b16 %v1683, %v1679
        %v1984 = vpack.c.b16 %v1684, %v1680
        %v1985 = vpack.c.b16 %v1685, %v1681
        %v1986 = vpack.c.b16 %v1686, %v1682
        %v1987 = vpack.c.b16 %v1691, %v1687
        %v1988 = vpack.c.b16 %v1692, %v1688
        %v1989 = vpack.c.b16 %v1693, %v1689
        %v1990 = vpack.c.b16 %v1694, %v1690
        %v1991 = vpack.c.b16 %v1699, %v1695
        %v1992 = vpack.c.b16 %v1700, %v1696
        %v1993 = vpack.c.b16 %v1701, %v1697
        %v1994 = vpack.c.b16 %v1702, %v1698
        %v1995 = vpack.c.b16 %v1707, %v1703
        %v1996 = vpack.c.b16 %v1708, %v1704
        %v1997 = vpack.c.b16 %v1709, %v1705
        %v1998 = vpack.c.b16 %v1710, %v1706
        %v1999 = vpack.c.b16 %v1715, %v1711
        %v2000 = vpack.c.b16 %v1716, %v1712
        %v2001 = vpack.c.b16 %v1717, %v1713
        %v2002 = vpack.c.b16 %v1718, %v1714
        %v2003 = vpack.c.b16 %v1723, %v1719
        %v2004 = vpack.c.b16 %v1724, %v1720
        %v2005 = vpack.c.b16 %v1725, %v1721
        %v2006 = vpack.c.b16 %v1726, %v1722
        %v2007 = vpack.c.b16 %v1731, %v1727
        %v2008 = vpack.c.b16 %v1732, %v1728
        %v2009 = vpack.c.b16 %v1733, %v1729
        %v2010 = vpack.c.b16 %v1734, %v1730
        %v2011 = vpack.c.b16 %v1739, %v1735
        %v2012 = vpack.c.b16 %v1740, %v1736
        %v2013 = vpack.c.b16 %v1741, %v1737
        %v2014 = vpack.c.b16 %v1742, %v1738
        %v2015 = vpack.c.b16 %v1747, %v1743
        %v2016 = vpack.c.b16 %v1748, %v1744
        %v2017 = vpack.c.b16 %v1749, %v1745
        %v2018 = vpack.c.b16 %v1750, %v1746
        %v2019 = vpack.c.b16 %v1755, %v1751
        %v2020 = vpack.c.b16 %v1756, %v1752
        %v2021 = vpack.c.b16 %v1757, %v1753
        %v2022 = vpack.c.b16 %v1758, %v1754
        %v2023 = vpack.c.b16 %v1763, %v1759
        %v2024 = vpack.c.b16 %v1764, %v1760
        %v2025 = vpack.c.b16 %v1765, %v1761
        %v2026 = vpack.c.b16 %v1766, %v1762
        %v2027 = vpack.c.b16 %v1771, %v1767
        %v2028 = vpack.c.b16 %v1772, %v1768
        %v2029 = vpack.c.b16 %v1773, %v1769
        %v2030 = vpack.c.b16 %v1774, %v1770
        %v2031 = vpack.c.b16 %v1779, %v1775
        %v2032 = vpack.c.b16 %v1780, %v1776
        %v2033 = vpack.c.b16 %v1781, %v1777
        %v2034 = vpack.c.b16 %v1782, %v1778
        %v2035 = vpack.c.b16 %v1787, %v1783
        %v2036 = vpack.c.b16 %v1788, %v1784
        %v2037 = vpack.c.b16 %v1789, %v1785
        %v2038 = vpack.c.b16 %v1790, %v1786
        %v2039 = vpack.c.b16 %v1795, %v1791
        %v2040 = vpack.c.b16 %v1796, %v1792
        %v2041 = vpack.c.b16 %v1797, %v1793
        %v2042 = vpack.c.b16 %v1798, %v1794
        %v2043 = vpack.c.b16 %v1803, %v1799
        %v2044 = vpack.c.b16 %v1804, %v1800
        %v2045 = vpack.c.b16 %v1805, %v1801
        %v2046 = vpack.c.b16 %v1806, %v1802
        %v2047 = vpack.c.b16 %v1811, %v1807
        %v2048 = vpack.c.b16 %v1812, %v1808
        %v2049 = vpack.c.b16 %v1813, %v1809
        %v2050 = vpack.c.b16 %v1814, %v1810
        %v2051 = vpack.c.b16 %v1819, %v1815
        %v2052 = vpack.c.b16 %v1820, %v1816
        %v2053 = vpack.c.b16 %v1821, %v1817
        %v2054 = vpack.c.b16 %v1822, %v1818
        %v2055 = vpack.c.b16 %v1827, %v1823
        %v2056 = vpack.c.b16 %v1828, %v1824
        %v2057 = vpack.c.b16 %v1829, %v1825
        %v2058 = vpack.c.b16 %v1830, %v1826
        %v2059 = vpack.c.b16 %v1835, %v1831
        %v2060 = vpack.c.b16 %v1836, %v1832
        %v2061 = vpack.c.b16 %v1837, %v1833
        %v2062 = vpack.c.b16 %v1838, %v1834
        %v2063 = vpack.c.b16 %v1843, %v1839
        %v2064 = vpack.c.b16 %v1844, %v1840
        %v2065 = vpack.c.b16 %v1845, %v1841
        %v2066 = vpack.c.b16 %v1846, %v1842
        %v2067 = vpack.c.b16 %v1851, %v1847
        %v2068 = vpack.c.b16 %v1852, %v1848
        %v2069 = vpack.c.b16 %v1853, %v1849
        %v2070 = vpack.c.b16 %v1854, %v1850
        %v2071 = vpack.c.b16 %v1859, %v1855
        %v2072 = vpack.c.b16 %v1860, %v1856
        %v2073 = vpack.c.b16 %v1861, %v1857
        %v2074 = vpack.c.b16 %v1862, %v1858
        %v2075 = vpack.c.b16 %v1867, %v1863
        %v2076 = vpack.c.b16 %v1868, %v1864
        %v2077 = vpack.c.b16 %v1869, %v1865
        %v2078 = vpack.c.b16 %v1870, %v1866
        %v2079 = vpack.c.b16 %v1875, %v1871
        %v2080 = vpack.c.b16 %v1876, %v1872
        %v2081 = vpack.c.b16 %v1877, %v1873
        %v2082 = vpack.c.b16 %v1878, %v1874
        %v2083 = vpack.c.b16 %v1883, %v1879
        %v2084 = vpack.c.b16 %v1884, %v1880
        %v2085 = vpack.c.b16 %v1885, %v1881
        %v2086 = vpack.c.b16 %v1886, %v1882
        %v2087 = vpack.c.b16 %v1891, %v1887
        %v2088 = vpack.c.b16 %v1892, %v1888
        %v2089 = vpack.c.b16 %v1893, %v1889
        %v2090 = vpack.c.b16 %v1894, %v1890
        %v2091 = vpack.c.b16 %v1899, %v1895
        %v2092 = vpack.c.b16 %v1900, %v1896
        %v2093 = vpack.c.b16 %v1901, %v1897
        %v2094 = vpack.c.b16 %v1902, %v1898
        %2287 = vmatprep.subr.bf16.mxu0 %v1932
        %2288 = vmatpush1.bf16.msra.mxu0 %v1931
        %2289 = vmatprep.subr.bf16.mxu0 %v1928
        %2290 = vmatpush1.bf16.msra.mxu0 %v1927
        %2291 = vmatprep.subr.bf16.mxu0 %v1924
        %2292 = vmatpush1.bf16.msra.mxu0 %v1923
        %2293 = vmatprep.subr.bf16.mxu0 %v1920
        %2294 = vmatpush1.bf16.msra.mxu0 %v1919
        %2295 = vmatprep.subr.bf16.mxu0 %v1916
        %2296 = vmatpush1.bf16.msra.mxu0 %v1915
        %2297 = vmatprep.subr.bf16.mxu0 %v1912
        %2298 = vmatpush1.bf16.msra.mxu0 %v1911
        %2299 = vmatprep.subr.bf16.mxu0 %v1908
        %2300 = vmatpush1.bf16.msra.mxu0 %v1907
        %2301 = vmatprep.subr.bf16.mxu0 %v1904
        %2302 = vmatpush1.bf16.msra.mxu0 %v1903
        %2303 = vmatprep.subr.bf16.mxu0 %v1964
        %2304 = vmatpush2.bf16.msra.mxu0 %v1963
        %2305 = vmatprep.subr.bf16.mxu0 %v1960
        %2306 = vmatpush2.bf16.msra.mxu0 %v1959
        %2307 = vmatprep.subr.bf16.mxu0 %v1956
        %2308 = vmatpush2.bf16.msra.mxu0 %v1955
        %2309 = vmatprep.subr.bf16.mxu0 %v1952
        %2310 = vmatpush2.bf16.msra.mxu0 %v1951
        %2311 = vmatprep.subr.bf16.mxu0 %v1948
        %2312 = vmatpush2.bf16.msra.mxu0 %v1947
        %2313 = vmatprep.subr.bf16.mxu0 %v1944
        %2314 = vmatpush2.bf16.msra.mxu0 %v1943
        %2315 = vmatprep.subr.bf16.mxu0 %v1940
        %2316 = vmatpush2.bf16.msra.mxu0 %v1939
        %2317 = vmatprep.subr.bf16.mxu0 %v1936
        %2318 = vmatpush2.bf16.msra.mxu0 %v1935
        %2319 = vmatprep.mubr.bf16.mxu0 %v1102
        %2320 = vmatmul.mubr.bf16.gmra.mxu0 %v1101
        %v2321 = vpop.f32.mrf.mxu0
        %v2322 = vadd.f32 %v1310, %v2321
        %v2323 = vpop.f32.mrf.mxu0
        %v2324 = vadd.f32 %v1314, %v2323
        %v2325 = vpop.f32.mrf.mxu0
        %v2326 = vadd.f32 %v1310, %v2325
        %v2327 = vpop.f32.mrf.mxu0
        %v2328 = vadd.f32 %v1314, %v2327
        %2329 = vmatprep.mubr.bf16.mxu0 %v1108
        %2330 = vmatmul.mubr.bf16.gmra.mxu0 %v1107
        %v2331 = vpop.f32.mrf.mxu0
        %v2332 = vadd.f32 %v1310, %v2331
        %v2333 = vpop.f32.mrf.mxu0
        %v2334 = vadd.f32 %v1314, %v2333
        %v2335 = vpop.f32.mrf.mxu0
        %v2336 = vadd.f32 %v1310, %v2335
        %v2337 = vpop.f32.mrf.mxu0
        %v2338 = vadd.f32 %v1314, %v2337
        %2339 = vdwg.mxu0
        %2340 = vmatprep.subr.bf16.mxu0 %v1996
        %2341 = vmatpush1.bf16.msra.mxu0 %v1995
        %2342 = vmatprep.subr.bf16.mxu0 %v1992
        %2343 = vmatpush1.bf16.msra.mxu0 %v1991
        %2344 = vmatprep.subr.bf16.mxu0 %v1988
        %2345 = vmatpush1.bf16.msra.mxu0 %v1987
        %2346 = vmatprep.subr.bf16.mxu0 %v1984
        %2347 = vmatpush1.bf16.msra.mxu0 %v1983
        %2348 = vmatprep.subr.bf16.mxu0 %v1980
        %2349 = vmatpush1.bf16.msra.mxu0 %v1979
        %2350 = vmatprep.subr.bf16.mxu0 %v1976
        %2351 = vmatpush1.bf16.msra.mxu0 %v1975
        %2352 = vmatprep.subr.bf16.mxu0 %v1972
        %2353 = vmatpush1.bf16.msra.mxu0 %v1971
        %2354 = vmatprep.subr.bf16.mxu0 %v1968
        %2355 = vmatpush1.bf16.msra.mxu0 %v1967
        %2356 = vmatprep.subr.bf16.mxu0 %v2028
        %2357 = vmatpush2.bf16.msra.mxu0 %v2027
        %2358 = vmatprep.subr.bf16.mxu0 %v2024
        %2359 = vmatpush2.bf16.msra.mxu0 %v2023
        %2360 = vmatprep.subr.bf16.mxu0 %v2020
        %2361 = vmatpush2.bf16.msra.mxu0 %v2019
        %2362 = vmatprep.subr.bf16.mxu0 %v2016
        %2363 = vmatpush2.bf16.msra.mxu0 %v2015
        %2364 = vmatprep.subr.bf16.mxu0 %v2012
        %2365 = vmatpush2.bf16.msra.mxu0 %v2011
        %2366 = vmatprep.subr.bf16.mxu0 %v2008
        %2367 = vmatpush2.bf16.msra.mxu0 %v2007
        %2368 = vmatprep.subr.bf16.mxu0 %v2004
        %2369 = vmatpush2.bf16.msra.mxu0 %v2003
        %2370 = vmatprep.subr.bf16.mxu0 %v2000
        %2371 = vmatpush2.bf16.msra.mxu0 %v1999
        %2372 = vmatprep.mubr.bf16.mxu0 %v1104
        %2373 = vmatmul.mubr.bf16.gmra.mxu0 %v1103
        %v2374 = vpop.f32.mrf.mxu0
        %v2375 = vadd.f32 %v2322, %v2374
        %v2376 = vpop.f32.mrf.mxu0
        %v2377 = vadd.f32 %v2324, %v2376
        %v2378 = vpop.f32.mrf.mxu0
        %v2379 = vadd.f32 %v2326, %v2378
        %v2380 = vpop.f32.mrf.mxu0
        %v2381 = vadd.f32 %v2328, %v2380
        %2382 = vmatprep.mubr.bf16.mxu0 %v1110
        %2383 = vmatmul.mubr.bf16.gmra.mxu0 %v1109
        %v2384 = vpop.f32.mrf.mxu0
        %v2385 = vadd.f32 %v2332, %v2384
        %v2386 = vpop.f32.mrf.mxu0
        %v2387 = vadd.f32 %v2334, %v2386
        %v2388 = vpop.f32.mrf.mxu0
        %v2389 = vadd.f32 %v2336, %v2388
        %v2390 = vpop.f32.mrf.mxu0
        %v2391 = vadd.f32 %v2338, %v2390
        %2392 = vdwg.mxu0
        %2393 = vmatprep.subr.bf16.mxu0 %v2060
        %2394 = vmatpush1.bf16.msra.mxu0 %v2059
        %2395 = vmatprep.subr.bf16.mxu0 %v2056
        %2396 = vmatpush1.bf16.msra.mxu0 %v2055
        %2397 = vmatprep.subr.bf16.mxu0 %v2052
        %2398 = vmatpush1.bf16.msra.mxu0 %v2051
        %2399 = vmatprep.subr.bf16.mxu0 %v2048
        %2400 = vmatpush1.bf16.msra.mxu0 %v2047
        %2401 = vmatprep.subr.bf16.mxu0 %v2044
        %2402 = vmatpush1.bf16.msra.mxu0 %v2043
        %2403 = vmatprep.subr.bf16.mxu0 %v2040
        %2404 = vmatpush1.bf16.msra.mxu0 %v2039
        %2405 = vmatprep.subr.bf16.mxu0 %v2036
        %2406 = vmatpush1.bf16.msra.mxu0 %v2035
        %2407 = vmatprep.subr.bf16.mxu0 %v2032
        %2408 = vmatpush1.bf16.msra.mxu0 %v2031
        %2409 = vmatprep.subr.bf16.mxu0 %v2092
        %2410 = vmatpush2.bf16.msra.mxu0 %v2091
        %2411 = vmatprep.subr.bf16.mxu0 %v2088
        %2412 = vmatpush2.bf16.msra.mxu0 %v2087
        %2413 = vmatprep.subr.bf16.mxu0 %v2084
        %2414 = vmatpush2.bf16.msra.mxu0 %v2083
        %2415 = vmatprep.subr.bf16.mxu0 %v2080
        %2416 = vmatpush2.bf16.msra.mxu0 %v2079
        %2417 = vmatprep.subr.bf16.mxu0 %v2076
        %2418 = vmatpush2.bf16.msra.mxu0 %v2075
        %2419 = vmatprep.subr.bf16.mxu0 %v2072
        %2420 = vmatpush2.bf16.msra.mxu0 %v2071
        %2421 = vmatprep.subr.bf16.mxu0 %v2068
        %2422 = vmatpush2.bf16.msra.mxu0 %v2067
        %2423 = vmatprep.subr.bf16.mxu0 %v2064
        %2424 = vmatpush2.bf16.msra.mxu0 %v2063
        %2425 = vmatprep.mubr.bf16.mxu0 %v1106
        %2426 = vmatmul.mubr.bf16.gmra.mxu0 %v1105
        %v2427 = vpop.f32.mrf.mxu0
        %v2428 = vadd.f32 %v2375, %v2427
        %v2429 = vpop.f32.mrf.mxu0
        %v2430 = vadd.f32 %v2377, %v2429
        %v2431 = vpop.f32.mrf.mxu0
        %v2432 = vadd.f32 %v2379, %v2431
        %v2433 = vpop.f32.mrf.mxu0
        %v2434 = vadd.f32 %v2381, %v2433
        %2435 = vmatprep.mubr.bf16.mxu0 %v1112
        %2436 = vmatmul.mubr.bf16.gmra.mxu0 %v1111
        %v2437 = vpop.f32.mrf.mxu0
        %v2438 = vadd.f32 %v2385, %v2437
        %v2439 = vpop.f32.mrf.mxu0
        %v2440 = vadd.f32 %v2387, %v2439
        %v2441 = vpop.f32.mrf.mxu0
        %v2442 = vadd.f32 %v2389, %v2441
        %v2443 = vpop.f32.mrf.mxu0
        %v2444 = vadd.f32 %v2391, %v2443
        %2445 = vdwg.mxu0
        %2446 = vmatprep.subr.bf16.mxu0 %v1934
        %2447 = vmatpush1.bf16.msra.mxu0 %v1933
        %2448 = vmatprep.subr.bf16.mxu0 %v1930
        %2449 = vmatpush1.bf16.msra.mxu0 %v1929
        %2450 = vmatprep.subr.bf16.mxu0 %v1926
        %2451 = vmatpush1.bf16.msra.mxu0 %v1925
        %2452 = vmatprep.subr.bf16.mxu0 %v1922
        %2453 = vmatpush1.bf16.msra.mxu0 %v1921
        %2454 = vmatprep.subr.bf16.mxu0 %v1918
        %2455 = vmatpush1.bf16.msra.mxu0 %v1917
        %2456 = vmatprep.subr.bf16.mxu0 %v1914
        %2457 = vmatpush1.bf16.msra.mxu0 %v1913
        %2458 = vmatprep.subr.bf16.mxu0 %v1910
        %2459 = vmatpush1.bf16.msra.mxu0 %v1909
        %2460 = vmatprep.subr.bf16.mxu0 %v1906
        %2461 = vmatpush1.bf16.msra.mxu0 %v1905
        %2462 = vmatprep.subr.bf16.mxu0 %v1966
        %2463 = vmatpush2.bf16.msra.mxu0 %v1965
        %2464 = vmatprep.subr.bf16.mxu0 %v1962
        %2465 = vmatpush2.bf16.msra.mxu0 %v1961
        %2466 = vmatprep.subr.bf16.mxu0 %v1958
        %2467 = vmatpush2.bf16.msra.mxu0 %v1957
        %2468 = vmatprep.subr.bf16.mxu0 %v1954
        %2469 = vmatpush2.bf16.msra.mxu0 %v1953
        %2470 = vmatprep.subr.bf16.mxu0 %v1950
        %2471 = vmatpush2.bf16.msra.mxu0 %v1949
        %2472 = vmatprep.subr.bf16.mxu0 %v1946
        %2473 = vmatpush2.bf16.msra.mxu0 %v1945
        %2474 = vmatprep.subr.bf16.mxu0 %v1942
        %2475 = vmatpush2.bf16.msra.mxu0 %v1941
        %2476 = vmatprep.subr.bf16.mxu0 %v1938
        %2477 = vmatpush2.bf16.msra.mxu0 %v1937
        %2478 = vmatprep.mubr.bf16.mxu0 %v1102
        %2479 = vmatmul.mubr.bf16.gmra.mxu0 %v1101
        %v2480 = vpop.f32.mrf.mxu0
        %v2481 = vadd.f32 %v1318, %v2480
        %v2482 = vpop.f32.mrf.mxu0
        %v2483 = vadd.f32 %v1322, %v2482
        %v2484 = vpop.f32.mrf.mxu0
        %v2485 = vadd.f32 %v1318, %v2484
        %v2486 = vpop.f32.mrf.mxu0
        %v2487 = vadd.f32 %v1322, %v2486
        %2488 = vmatprep.mubr.bf16.mxu0 %v1108
        %2489 = vmatmul.mubr.bf16.gmra.mxu0 %v1107
        %v2490 = vpop.f32.mrf.mxu0
        %v2491 = vadd.f32 %v1318, %v2490
        %v2492 = vpop.f32.mrf.mxu0
        %v2493 = vadd.f32 %v1322, %v2492
        %v2494 = vpop.f32.mrf.mxu0
        %v2495 = vadd.f32 %v1318, %v2494
        %v2496 = vpop.f32.mrf.mxu0
        %v2497 = vadd.f32 %v1322, %v2496
        %2498 = vdwg.mxu0
        %2499 = vmatprep.subr.bf16.mxu0 %v1998
        %2500 = vmatpush1.bf16.msra.mxu0 %v1997
        %2501 = vmatprep.subr.bf16.mxu0 %v1994
        %2502 = vmatpush1.bf16.msra.mxu0 %v1993
        %2503 = vmatprep.subr.bf16.mxu0 %v1990
        %2504 = vmatpush1.bf16.msra.mxu0 %v1989
        %2505 = vmatprep.subr.bf16.mxu0 %v1986
        %2506 = vmatpush1.bf16.msra.mxu0 %v1985
        %2507 = vmatprep.subr.bf16.mxu0 %v1982
        %2508 = vmatpush1.bf16.msra.mxu0 %v1981
        %2509 = vmatprep.subr.bf16.mxu0 %v1978
        %2510 = vmatpush1.bf16.msra.mxu0 %v1977
        %2511 = vmatprep.subr.bf16.mxu0 %v1974
        %2512 = vmatpush1.bf16.msra.mxu0 %v1973
        %2513 = vmatprep.subr.bf16.mxu0 %v1970
        %2514 = vmatpush1.bf16.msra.mxu0 %v1969
        %2515 = vmatprep.subr.bf16.mxu0 %v2030
        %2516 = vmatpush2.bf16.msra.mxu0 %v2029
        %2517 = vmatprep.subr.bf16.mxu0 %v2026
        %2518 = vmatpush2.bf16.msra.mxu0 %v2025
        %2519 = vmatprep.subr.bf16.mxu0 %v2022
        %2520 = vmatpush2.bf16.msra.mxu0 %v2021
        %2521 = vmatprep.subr.bf16.mxu0 %v2018
        %2522 = vmatpush2.bf16.msra.mxu0 %v2017
        %2523 = vmatprep.subr.bf16.mxu0 %v2014
        %2524 = vmatpush2.bf16.msra.mxu0 %v2013
        %2525 = vmatprep.subr.bf16.mxu0 %v2010
        %2526 = vmatpush2.bf16.msra.mxu0 %v2009
        %2527 = vmatprep.subr.bf16.mxu0 %v2006
        %2528 = vmatpush2.bf16.msra.mxu0 %v2005
        %2529 = vmatprep.subr.bf16.mxu0 %v2002
        %2530 = vmatpush2.bf16.msra.mxu0 %v2001
        %2531 = vmatprep.mubr.bf16.mxu0 %v1104
        %2532 = vmatmul.mubr.bf16.gmra.mxu0 %v1103
        %v2533 = vpop.f32.mrf.mxu0
        %v2534 = vadd.f32 %v2481, %v2533
        %v2535 = vpop.f32.mrf.mxu0
        %v2536 = vadd.f32 %v2483, %v2535
        %v2537 = vpop.f32.mrf.mxu0
        %v2538 = vadd.f32 %v2485, %v2537
        %v2539 = vpop.f32.mrf.mxu0
        %v2540 = vadd.f32 %v2487, %v2539
        %2541 = vmatprep.mubr.bf16.mxu0 %v1110
        %2542 = vmatmul.mubr.bf16.gmra.mxu0 %v1109
        %v2543 = vpop.f32.mrf.mxu0
        %v2544 = vadd.f32 %v2491, %v2543
        %v2545 = vpop.f32.mrf.mxu0
        %v2546 = vadd.f32 %v2493, %v2545
        %v2547 = vpop.f32.mrf.mxu0
        %v2548 = vadd.f32 %v2495, %v2547
        %v2549 = vpop.f32.mrf.mxu0
        %v2550 = vadd.f32 %v2497, %v2549
        %2551 = vdwg.mxu0
        %2552 = vmatprep.subr.bf16.mxu0 %v2062
        %2553 = vmatpush1.bf16.msra.mxu0 %v2061
        %2554 = vmatprep.subr.bf16.mxu0 %v2058
        %2555 = vmatpush1.bf16.msra.mxu0 %v2057
        %2556 = vmatprep.subr.bf16.mxu0 %v2054
        %2557 = vmatpush1.bf16.msra.mxu0 %v2053
        %2558 = vmatprep.subr.bf16.mxu0 %v2050
        %2559 = vmatpush1.bf16.msra.mxu0 %v2049
        %2560 = vmatprep.subr.bf16.mxu0 %v2046
        %2561 = vmatpush1.bf16.msra.mxu0 %v2045
        %2562 = vmatprep.subr.bf16.mxu0 %v2042
        %2563 = vmatpush1.bf16.msra.mxu0 %v2041
        %2564 = vmatprep.subr.bf16.mxu0 %v2038
        %2565 = vmatpush1.bf16.msra.mxu0 %v2037
        %2566 = vmatprep.subr.bf16.mxu0 %v2034
        %2567 = vmatpush1.bf16.msra.mxu0 %v2033
        %2568 = vmatprep.subr.bf16.mxu0 %v2094
        %2569 = vmatpush2.bf16.msra.mxu0 %v2093
        %2570 = vmatprep.subr.bf16.mxu0 %v2090
        %2571 = vmatpush2.bf16.msra.mxu0 %v2089
        %2572 = vmatprep.subr.bf16.mxu0 %v2086
        %2573 = vmatpush2.bf16.msra.mxu0 %v2085
        %2574 = vmatprep.subr.bf16.mxu0 %v2082
        %2575 = vmatpush2.bf16.msra.mxu0 %v2081
        %2576 = vmatprep.subr.bf16.mxu0 %v2078
        %2577 = vmatpush2.bf16.msra.mxu0 %v2077
        %2578 = vmatprep.subr.bf16.mxu0 %v2074
        %2579 = vmatpush2.bf16.msra.mxu0 %v2073
        %2580 = vmatprep.subr.bf16.mxu0 %v2070
        %2581 = vmatpush2.bf16.msra.mxu0 %v2069
        %2582 = vmatprep.subr.bf16.mxu0 %v2066
        %2583 = vmatpush2.bf16.msra.mxu0 %v2065
        %2584 = vmatprep.mubr.bf16.mxu0 %v1106
        %2585 = vmatmul.mubr.bf16.gmra.mxu0 %v1105
        %v2586 = vpop.f32.mrf.mxu0
        %v2587 = vadd.f32 %v2534, %v2586
        %v2588 = vpop.f32.mrf.mxu0
        %v2589 = vadd.f32 %v2536, %v2588
        %v2590 = vpop.f32.mrf.mxu0
        %v2591 = vadd.f32 %v2538, %v2590
        %v2592 = vpop.f32.mrf.mxu0
        %v2593 = vadd.f32 %v2540, %v2592
        %2594 = vmatprep.mubr.bf16.mxu0 %v1112
        %2595 = vmatmul.mubr.bf16.gmra.mxu0 %v1111
        %v2596 = vpop.f32.mrf.mxu0
        %v2597 = vadd.f32 %v2544, %v2596
        %v2598 = vpop.f32.mrf.mxu0
        %v2599 = vadd.f32 %v2546, %v2598
        %v2600 = vpop.f32.mrf.mxu0
        %v2601 = vadd.f32 %v2548, %v2600
        %v2602 = vpop.f32.mrf.mxu0
        %v2603 = vadd.f32 %v2550, %v2602
        %2604 = vdwg.mxu0
        %v2605 = vmax.f32 %v2428, 0.0
        %v2606 = vmax.f32 %v2430, 0.0
        %v2607 = vmax.f32 %v2587, 0.0
        %v2608 = vmax.f32 %v2589, 0.0
        %v2609 = vmax.f32 %v2432, 0.0
        %v2610 = vmax.f32 %v2434, 0.0
        %v2611 = vmax.f32 %v2591, 0.0
        %v2612 = vmax.f32 %v2593, 0.0
        %v2613 = vmax.f32 %v2438, 0.0
        %v2614 = vmax.f32 %v2440, 0.0
        %v2615 = vmax.f32 %v2597, 0.0
        %v2616 = vmax.f32 %v2599, 0.0
        %v2617 = vmax.f32 %v2442, 0.0
        %v2618 = vmax.f32 %v2444, 0.0
        %v2619 = vmax.f32 %v2601, 0.0
        %v2620 = vmax.f32 %v2603, 0.0
        %v2621 = vpack.c.bf16 %v2609, %v2605
        %v2622 = vpack.c.bf16 %v2610, %v2606
        %v2623 = vpack.c.bf16 %v2611, %v2607
        %v2624 = vpack.c.bf16 %v2612, %v2608
        %v2625 = vpack.c.bf16 %v2617, %v2613
        %v2626 = vpack.c.bf16 %v2618, %v2614
        %v2627 = vpack.c.bf16 %v2619, %v2615
        %v2628 = vpack.c.bf16 %v2620, %v2616
        %v2629 = vld [vmem:[#allocation6] sm:$0xff]
        %v2630 = vld [vmem:[#allocation6 + $0x8] sm:$0xff]
        %v2631 = vld [vmem:[#allocation6 + $0x10] sm:$0xff]
        %v2632 = vld [vmem:[#allocation6 + $0x18] sm:$0xff]
        %v2633 = vld [vmem:[#allocation6 + $0x20] sm:$0xff]
        %v2634 = vld [vmem:[#allocation6 + $0x28] sm:$0xff]
        %v2635 = vld [vmem:[#allocation6 + $0x30] sm:$0xff]
        %v2636 = vld [vmem:[#allocation6 + $0x38] sm:$0xff]
        %v2637 = vld [vmem:[#allocation6 + $0x40] sm:$0xff]
        %v2638 = vld [vmem:[#allocation6 + $0x48] sm:$0xff]
        %v2639 = vld [vmem:[#allocation6 + $0x50] sm:$0xff]
        %v2640 = vld [vmem:[#allocation6 + $0x58] sm:$0xff]
        %v2641 = vld [vmem:[#allocation6 + $0x60] sm:$0xff]
        %v2642 = vld [vmem:[#allocation6 + $0x68] sm:$0xff]
        %v2643 = vld [vmem:[#allocation6 + $0x70] sm:$0xff]
        %v2644 = vld [vmem:[#allocation6 + $0x78] sm:$0xff]
        %v2645 = vld [vmem:[#allocation6 + $0x80] sm:$0xff]
        %v2646 = vld [vmem:[#allocation6 + $0x88] sm:$0xff]
        %v2647 = vld [vmem:[#allocation6 + $0x90] sm:$0xff]
        %v2648 = vld [vmem:[#allocation6 + $0x98] sm:$0xff]
        %v2649 = vld [vmem:[#allocation6 + $0xa0] sm:$0xff]
        %v2650 = vld [vmem:[#allocation6 + $0xa8] sm:$0xff]
        %v2651 = vld [vmem:[#allocation6 + $0xb0] sm:$0xff]
        %v2652 = vld [vmem:[#allocation6 + $0xb8] sm:$0xff]
        %v2653 = vld [vmem:[#allocation6 + $0xc0] sm:$0xff]
        %v2654 = vld [vmem:[#allocation6 + $0xc8] sm:$0xff]
        %v2655 = vld [vmem:[#allocation6 + $0xd0] sm:$0xff]
        %v2656 = vld [vmem:[#allocation6 + $0xd8] sm:$0xff]
        %v2657 = vld [vmem:[#allocation6 + $0xe0] sm:$0xff]
        %v2658 = vld [vmem:[#allocation6 + $0xe8] sm:$0xff]
        %v2659 = vld [vmem:[#allocation6 + $0xf0] sm:$0xff]
        %v2660 = vld [vmem:[#allocation6 + $0xf8] sm:$0xff]
        %v2661 = vld [vmem:[#allocation6 + $0x100] sm:$0xff]
        %v2662 = vld [vmem:[#allocation6 + $0x108] sm:$0xff]
        %v2663 = vld [vmem:[#allocation6 + $0x110] sm:$0xff]
        %v2664 = vld [vmem:[#allocation6 + $0x118] sm:$0xff]
        %v2665 = vld [vmem:[#allocation6 + $0x120] sm:$0xff]
        %v2666 = vld [vmem:[#allocation6 + $0x128] sm:$0xff]
        %v2667 = vld [vmem:[#allocation6 + $0x130] sm:$0xff]
        %v2668 = vld [vmem:[#allocation6 + $0x138] sm:$0xff]
        %v2669 = vld [vmem:[#allocation6 + $0x140] sm:$0xff]
        %v2670 = vld [vmem:[#allocation6 + $0x148] sm:$0xff]
        %v2671 = vld [vmem:[#allocation6 + $0x150] sm:$0xff]
        %v2672 = vld [vmem:[#allocation6 + $0x158] sm:$0xff]
        %v2673 = vld [vmem:[#allocation6 + $0x160] sm:$0xff]
        %v2674 = vld [vmem:[#allocation6 + $0x168] sm:$0xff]
        %v2675 = vld [vmem:[#allocation6 + $0x170] sm:$0xff]
        %v2676 = vld [vmem:[#allocation6 + $0x178] sm:$0xff]
        %v2677 = vld [vmem:[#allocation6 + $0x180] sm:$0xff]
        %v2678 = vld [vmem:[#allocation6 + $0x188] sm:$0xff]
        %v2679 = vld [vmem:[#allocation6 + $0x190] sm:$0xff]
        %v2680 = vld [vmem:[#allocation6 + $0x198] sm:$0xff]
        %v2681 = vld [vmem:[#allocation6 + $0x1a0] sm:$0xff]
        %v2682 = vld [vmem:[#allocation6 + $0x1a8] sm:$0xff]
        %v2683 = vld [vmem:[#allocation6 + $0x1b0] sm:$0xff]
        %v2684 = vld [vmem:[#allocation6 + $0x1b8] sm:$0xff]
        %v2685 = vld [vmem:[#allocation6 + $0x1c0] sm:$0xff]
        %v2686 = vld [vmem:[#allocation6 + $0x1c8] sm:$0xff]
        %v2687 = vld [vmem:[#allocation6 + $0x1d0] sm:$0xff]
        %v2688 = vld [vmem:[#allocation6 + $0x1d8] sm:$0xff]
        %v2689 = vld [vmem:[#allocation6 + $0x1e0] sm:$0xff]
        %v2690 = vld [vmem:[#allocation6 + $0x1e8] sm:$0xff]
        %v2691 = vld [vmem:[#allocation6 + $0x1f0] sm:$0xff]
        %v2692 = vld [vmem:[#allocation6 + $0x1f8] sm:$0xff]
        %v2693 = vld [vmem:[%s7] sm:$0x3]
        %v2695 = vlaneseq
        %v2696 = vshrl.u32 %v2695, 7
        %v2697 = vsub.s32 0, %v2696
        %v2698 = vrot.slane %v2693, %v2697
        %v2699 = vlaneseq
        %v2700 = vshrl.u32 %v2699, 7
        %v2701 = vsub.s32 1, %v2700
        %v2702 = vrot.slane %v2693, %v2701
        %v2769 = vunpack.c.l.b16 %v2629
        %v2770 = vunpack.c.h.b16 %v2629
        %v2771 = vunpack.c.l.b16 %v2630
        %v2772 = vunpack.c.h.b16 %v2630
        %v2773 = vunpack.c.l.b16 %v2631
        %v2774 = vunpack.c.h.b16 %v2631
        %v2775 = vunpack.c.l.b16 %v2632
        %v2776 = vunpack.c.h.b16 %v2632
        %v2777 = vunpack.c.l.b16 %v2633
        %v2778 = vunpack.c.h.b16 %v2633
        %v2779 = vunpack.c.l.b16 %v2634
        %v2780 = vunpack.c.h.b16 %v2634
        %v2781 = vunpack.c.l.b16 %v2635
        %v2782 = vunpack.c.h.b16 %v2635
        %v2783 = vunpack.c.l.b16 %v2636
        %v2784 = vunpack.c.h.b16 %v2636
        %v2785 = vunpack.c.l.b16 %v2637
        %v2786 = vunpack.c.h.b16 %v2637
        %v2787 = vunpack.c.l.b16 %v2638
        %v2788 = vunpack.c.h.b16 %v2638
        %v2789 = vunpack.c.l.b16 %v2639
        %v2790 = vunpack.c.h.b16 %v2639
        %v2791 = vunpack.c.l.b16 %v2640
        %v2792 = vunpack.c.h.b16 %v2640
        %v2793 = vunpack.c.l.b16 %v2641
        %v2794 = vunpack.c.h.b16 %v2641
        %v2795 = vunpack.c.l.b16 %v2642
        %v2796 = vunpack.c.h.b16 %v2642
        %v2797 = vunpack.c.l.b16 %v2643
        %v2798 = vunpack.c.h.b16 %v2643
        %v2799 = vunpack.c.l.b16 %v2644
        %v2800 = vunpack.c.h.b16 %v2644
        %v2801 = vunpack.c.l.b16 %v2645
        %v2802 = vunpack.c.h.b16 %v2645
        %v2803 = vunpack.c.l.b16 %v2646
        %v2804 = vunpack.c.h.b16 %v2646
        %v2805 = vunpack.c.l.b16 %v2647
        %v2806 = vunpack.c.h.b16 %v2647
        %v2807 = vunpack.c.l.b16 %v2648
        %v2808 = vunpack.c.h.b16 %v2648
        %v2809 = vunpack.c.l.b16 %v2649
        %v2810 = vunpack.c.h.b16 %v2649
        %v2811 = vunpack.c.l.b16 %v2650
        %v2812 = vunpack.c.h.b16 %v2650
        %v2813 = vunpack.c.l.b16 %v2651
        %v2814 = vunpack.c.h.b16 %v2651
        %v2815 = vunpack.c.l.b16 %v2652
        %v2816 = vunpack.c.h.b16 %v2652
        %v2817 = vunpack.c.l.b16 %v2653
        %v2818 = vunpack.c.h.b16 %v2653
        %v2819 = vunpack.c.l.b16 %v2654
        %v2820 = vunpack.c.h.b16 %v2654
        %v2821 = vunpack.c.l.b16 %v2655
        %v2822 = vunpack.c.h.b16 %v2655
        %v2823 = vunpack.c.l.b16 %v2656
        %v2824 = vunpack.c.h.b16 %v2656
        %v2825 = vunpack.c.l.b16 %v2657
        %v2826 = vunpack.c.h.b16 %v2657
        %v2827 = vunpack.c.l.b16 %v2658
        %v2828 = vunpack.c.h.b16 %v2658
        %v2829 = vunpack.c.l.b16 %v2659
        %v2830 = vunpack.c.h.b16 %v2659
        %v2831 = vunpack.c.l.b16 %v2660
        %v2832 = vunpack.c.h.b16 %v2660
        %v2833 = vunpack.c.l.b16 %v2661
        %v2834 = vunpack.c.h.b16 %v2661
        %v2835 = vunpack.c.l.b16 %v2662
        %v2836 = vunpack.c.h.b16 %v2662
        %v2837 = vunpack.c.l.b16 %v2663
        %v2838 = vunpack.c.h.b16 %v2663
        %v2839 = vunpack.c.l.b16 %v2664
        %v2840 = vunpack.c.h.b16 %v2664
        %v2841 = vunpack.c.l.b16 %v2665
        %v2842 = vunpack.c.h.b16 %v2665
        %v2843 = vunpack.c.l.b16 %v2666
        %v2844 = vunpack.c.h.b16 %v2666
        %v2845 = vunpack.c.l.b16 %v2667
        %v2846 = vunpack.c.h.b16 %v2667
        %v2847 = vunpack.c.l.b16 %v2668
        %v2848 = vunpack.c.h.b16 %v2668
        %v2849 = vunpack.c.l.b16 %v2669
        %v2850 = vunpack.c.h.b16 %v2669
        %v2851 = vunpack.c.l.b16 %v2670
        %v2852 = vunpack.c.h.b16 %v2670
        %v2853 = vunpack.c.l.b16 %v2671
        %v2854 = vunpack.c.h.b16 %v2671
        %v2855 = vunpack.c.l.b16 %v2672
        %v2856 = vunpack.c.h.b16 %v2672
        %v2857 = vunpack.c.l.b16 %v2673
        %v2858 = vunpack.c.h.b16 %v2673
        %v2859 = vunpack.c.l.b16 %v2674
        %v2860 = vunpack.c.h.b16 %v2674
        %v2861 = vunpack.c.l.b16 %v2675
        %v2862 = vunpack.c.h.b16 %v2675
        %v2863 = vunpack.c.l.b16 %v2676
        %v2864 = vunpack.c.h.b16 %v2676
        %v2865 = vunpack.c.l.b16 %v2677
        %v2866 = vunpack.c.h.b16 %v2677
        %v2867 = vunpack.c.l.b16 %v2678
        %v2868 = vunpack.c.h.b16 %v2678
        %v2869 = vunpack.c.l.b16 %v2679
        %v2870 = vunpack.c.h.b16 %v2679
        %v2871 = vunpack.c.l.b16 %v2680
        %v2872 = vunpack.c.h.b16 %v2680
        %v2873 = vunpack.c.l.b16 %v2681
        %v2874 = vunpack.c.h.b16 %v2681
        %v2875 = vunpack.c.l.b16 %v2682
        %v2876 = vunpack.c.h.b16 %v2682
        %v2877 = vunpack.c.l.b16 %v2683
        %v2878 = vunpack.c.h.b16 %v2683
        %v2879 = vunpack.c.l.b16 %v2684
        %v2880 = vunpack.c.h.b16 %v2684
        %v2881 = vunpack.c.l.b16 %v2685
        %v2882 = vunpack.c.h.b16 %v2685
        %v2883 = vunpack.c.l.b16 %v2686
        %v2884 = vunpack.c.h.b16 %v2686
        %v2885 = vunpack.c.l.b16 %v2687
        %v2886 = vunpack.c.h.b16 %v2687
        %v2887 = vunpack.c.l.b16 %v2688
        %v2888 = vunpack.c.h.b16 %v2688
        %v2889 = vunpack.c.l.b16 %v2689
        %v2890 = vunpack.c.h.b16 %v2689
        %v2891 = vunpack.c.l.b16 %v2690
        %v2892 = vunpack.c.h.b16 %v2690
        %v2893 = vunpack.c.l.b16 %v2691
        %v2894 = vunpack.c.h.b16 %v2691
        %v2895 = vunpack.c.l.b16 %v2692
        %v2896 = vunpack.c.h.b16 %v2692
        %v2897 = vpack.c.b16 %v2771, %v2769
        %v2898 = vpack.c.b16 %v2772, %v2770
        %v2899 = vpack.c.b16 %v2775, %v2773
        %v2900 = vpack.c.b16 %v2776, %v2774
        %v2901 = vpack.c.b16 %v2779, %v2777
        %v2902 = vpack.c.b16 %v2780, %v2778
        %v2903 = vpack.c.b16 %v2783, %v2781
        %v2904 = vpack.c.b16 %v2784, %v2782
        %v2905 = vpack.c.b16 %v2787, %v2785
        %v2906 = vpack.c.b16 %v2788, %v2786
        %v2907 = vpack.c.b16 %v2791, %v2789
        %v2908 = vpack.c.b16 %v2792, %v2790
        %v2909 = vpack.c.b16 %v2795, %v2793
        %v2910 = vpack.c.b16 %v2796, %v2794
        %v2911 = vpack.c.b16 %v2799, %v2797
        %v2912 = vpack.c.b16 %v2800, %v2798
        %v2913 = vpack.c.b16 %v2803, %v2801
        %v2914 = vpack.c.b16 %v2804, %v2802
        %v2915 = vpack.c.b16 %v2807, %v2805
        %v2916 = vpack.c.b16 %v2808, %v2806
        %v2917 = vpack.c.b16 %v2811, %v2809
        %v2918 = vpack.c.b16 %v2812, %v2810
        %v2919 = vpack.c.b16 %v2815, %v2813
        %v2920 = vpack.c.b16 %v2816, %v2814
        %v2921 = vpack.c.b16 %v2819, %v2817
        %v2922 = vpack.c.b16 %v2820, %v2818
        %v2923 = vpack.c.b16 %v2823, %v2821
        %v2924 = vpack.c.b16 %v2824, %v2822
        %v2925 = vpack.c.b16 %v2827, %v2825
        %v2926 = vpack.c.b16 %v2828, %v2826
        %v2927 = vpack.c.b16 %v2831, %v2829
        %v2928 = vpack.c.b16 %v2832, %v2830
        %v2929 = vpack.c.b16 %v2835, %v2833
        %v2930 = vpack.c.b16 %v2836, %v2834
        %v2931 = vpack.c.b16 %v2839, %v2837
        %v2932 = vpack.c.b16 %v2840, %v2838
        %v2933 = vpack.c.b16 %v2843, %v2841
        %v2934 = vpack.c.b16 %v2844, %v2842
        %v2935 = vpack.c.b16 %v2847, %v2845
        %v2936 = vpack.c.b16 %v2848, %v2846
        %v2937 = vpack.c.b16 %v2851, %v2849
        %v2938 = vpack.c.b16 %v2852, %v2850
        %v2939 = vpack.c.b16 %v2855, %v2853
        %v2940 = vpack.c.b16 %v2856, %v2854
        %v2941 = vpack.c.b16 %v2859, %v2857
        %v2942 = vpack.c.b16 %v2860, %v2858
        %v2943 = vpack.c.b16 %v2863, %v2861
        %v2944 = vpack.c.b16 %v2864, %v2862
        %v2945 = vpack.c.b16 %v2867, %v2865
        %v2946 = vpack.c.b16 %v2868, %v2866
        %v2947 = vpack.c.b16 %v2871, %v2869
        %v2948 = vpack.c.b16 %v2872, %v2870
        %v2949 = vpack.c.b16 %v2875, %v2873
        %v2950 = vpack.c.b16 %v2876, %v2874
        %v2951 = vpack.c.b16 %v2879, %v2877
        %v2952 = vpack.c.b16 %v2880, %v2878
        %v2953 = vpack.c.b16 %v2883, %v2881
        %v2954 = vpack.c.b16 %v2884, %v2882
        %v2955 = vpack.c.b16 %v2887, %v2885
        %v2956 = vpack.c.b16 %v2888, %v2886
        %v2957 = vpack.c.b16 %v2891, %v2889
        %v2958 = vpack.c.b16 %v2892, %v2890
        %v2959 = vpack.c.b16 %v2895, %v2893
        %v2960 = vpack.c.b16 %v2896, %v2894
        %3025 = vmatprep.subr.bf16.mxu0 %v2912
        %3026 = vmatpush1.bf16.msra.mxu0 %v2911
        %3027 = vmatprep.subr.bf16.mxu0 %v2910
        %3028 = vmatpush1.bf16.msra.mxu0 %v2909
        %3029 = vmatprep.subr.bf16.mxu0 %v2908
        %3030 = vmatpush1.bf16.msra.mxu0 %v2907
        %3031 = vmatprep.subr.bf16.mxu0 %v2906
        %3032 = vmatpush1.bf16.msra.mxu0 %v2905
        %3033 = vmatprep.subr.bf16.mxu0 %v2904
        %3034 = vmatpush1.bf16.msra.mxu0 %v2903
        %3035 = vmatprep.subr.bf16.mxu0 %v2902
        %3036 = vmatpush1.bf16.msra.mxu0 %v2901
        %3037 = vmatprep.subr.bf16.mxu0 %v2900
        %3038 = vmatpush1.bf16.msra.mxu0 %v2899
        %3039 = vmatprep.subr.bf16.mxu0 %v2898
        %3040 = vmatpush1.bf16.msra.mxu0 %v2897
        %3041 = vmatprep.subr.bf16.mxu0 %v2928
        %3042 = vmatpush2.bf16.msra.mxu0 %v2927
        %3043 = vmatprep.subr.bf16.mxu0 %v2926
        %3044 = vmatpush2.bf16.msra.mxu0 %v2925
        %3045 = vmatprep.subr.bf16.mxu0 %v2924
        %3046 = vmatpush2.bf16.msra.mxu0 %v2923
        %3047 = vmatprep.subr.bf16.mxu0 %v2922
        %3048 = vmatpush2.bf16.msra.mxu0 %v2921
        %3049 = vmatprep.subr.bf16.mxu0 %v2920
        %3050 = vmatpush2.bf16.msra.mxu0 %v2919
        %3051 = vmatprep.subr.bf16.mxu0 %v2918
        %3052 = vmatpush2.bf16.msra.mxu0 %v2917
        %3053 = vmatprep.subr.bf16.mxu0 %v2916
        %3054 = vmatpush2.bf16.msra.mxu0 %v2915
        %3055 = vmatprep.subr.bf16.mxu0 %v2914
        %3056 = vmatpush2.bf16.msra.mxu0 %v2913
        %3057 = vmatprep.mubr.bf16.mxu0 %v2622
        %3058 = vmatmul.mubr.bf16.gmra.mxu0 %v2621
        %v3059 = vpop.f32.mrf.mxu0
        %v3060 = vadd.f32 %v2698, %v3059
        %v3061 = vpop.f32.mrf.mxu0
        %v3062 = vadd.f32 %v2702, %v3061
        %v3063 = vpop.f32.mrf.mxu0
        %v3064 = vadd.f32 %v2698, %v3063
        %v3065 = vpop.f32.mrf.mxu0
        %v3066 = vadd.f32 %v2702, %v3065
        %3067 = vmatprep.mubr.bf16.mxu0 %v2626
        %3068 = vmatmul.mubr.bf16.gmra.mxu0 %v2625
        %v3069 = vpop.f32.mrf.mxu0
        %v3070 = vadd.f32 %v2698, %v3069
        %v3071 = vpop.f32.mrf.mxu0
        %v3072 = vadd.f32 %v2702, %v3071
        %v3073 = vpop.f32.mrf.mxu0
        %v3074 = vadd.f32 %v2698, %v3073
        %v3075 = vpop.f32.mrf.mxu0
        %v3076 = vadd.f32 %v2702, %v3075
        %3077 = vdwg.mxu0
        %3078 = vmatprep.subr.bf16.mxu0 %v2944
        %3079 = vmatpush1.bf16.msra.mxu0 %v2943
        %3080 = vmatprep.subr.bf16.mxu0 %v2942
        %3081 = vmatpush1.bf16.msra.mxu0 %v2941
        %3082 = vmatprep.subr.bf16.mxu0 %v2940
        %3083 = vmatpush1.bf16.msra.mxu0 %v2939
        %3084 = vmatprep.subr.bf16.mxu0 %v2938
        %3085 = vmatpush1.bf16.msra.mxu0 %v2937
        %3086 = vmatprep.subr.bf16.mxu0 %v2936
        %3087 = vmatpush1.bf16.msra.mxu0 %v2935
        %3088 = vmatprep.subr.bf16.mxu0 %v2934
        %3089 = vmatpush1.bf16.msra.mxu0 %v2933
        %3090 = vmatprep.subr.bf16.mxu0 %v2932
        %3091 = vmatpush1.bf16.msra.mxu0 %v2931
        %3092 = vmatprep.subr.bf16.mxu0 %v2930
        %3093 = vmatpush1.bf16.msra.mxu0 %v2929
        %3094 = vmatprep.subr.bf16.mxu0 %v2960
        %3095 = vmatpush2.bf16.msra.mxu0 %v2959
        %3096 = vmatprep.subr.bf16.mxu0 %v2958
        %3097 = vmatpush2.bf16.msra.mxu0 %v2957
        %3098 = vmatprep.subr.bf16.mxu0 %v2956
        %3099 = vmatpush2.bf16.msra.mxu0 %v2955
        %3100 = vmatprep.subr.bf16.mxu0 %v2954
        %3101 = vmatpush2.bf16.msra.mxu0 %v2953
        %3102 = vmatprep.subr.bf16.mxu0 %v2952
        %3103 = vmatpush2.bf16.msra.mxu0 %v2951
        %3104 = vmatprep.subr.bf16.mxu0 %v2950
        %3105 = vmatpush2.bf16.msra.mxu0 %v2949
        %3106 = vmatprep.subr.bf16.mxu0 %v2948
        %3107 = vmatpush2.bf16.msra.mxu0 %v2947
        %3108 = vmatprep.subr.bf16.mxu0 %v2946
        %3109 = vmatpush2.bf16.msra.mxu0 %v2945
        %3110 = vmatprep.mubr.bf16.mxu0 %v2624
        %3111 = vmatmul.mubr.bf16.gmra.mxu0 %v2623
        %v3112 = vpop.f32.mrf.mxu0
        %v3113 = vadd.f32 %v3060, %v3112
        %v3114 = vpop.f32.mrf.mxu0
        %v3115 = vadd.f32 %v3062, %v3114
        %v3116 = vpop.f32.mrf.mxu0
        %v3117 = vadd.f32 %v3064, %v3116
        %v3118 = vpop.f32.mrf.mxu0
        %v3119 = vadd.f32 %v3066, %v3118
        %3120 = vmatprep.mubr.bf16.mxu0 %v2628
        %3121 = vmatmul.mubr.bf16.gmra.mxu0 %v2627
        %v3122 = vpop.f32.mrf.mxu0
        %v3123 = vadd.f32 %v3070, %v3122
        %v3124 = vpop.f32.mrf.mxu0
        %v3125 = vadd.f32 %v3072, %v3124
        %v3126 = vpop.f32.mrf.mxu0
        %v3127 = vadd.f32 %v3074, %v3126
        %v3128 = vpop.f32.mrf.mxu0
        %v3129 = vadd.f32 %v3076, %v3128
        %3130 = vdwg.mxu0
        %v3131 = vmax.f32 %v3113, 0.0
        %v3132 = vmax.f32 %v3115, 0.0
        %v3133 = vmax.f32 %v3117, 0.0
        %v3134 = vmax.f32 %v3119, 0.0
        %v3135 = vmax.f32 %v3123, 0.0
        %v3136 = vmax.f32 %v3125, 0.0
        %v3137 = vmax.f32 %v3127, 0.0
        %v3138 = vmax.f32 %v3129, 0.0
        %v3139 = vpack.c.bf16 %v3133, %v3131
        %v3140 = vpack.c.bf16 %v3134, %v3132
        %v3141 = vpack.c.bf16 %v3137, %v3135
        %v3142 = vpack.c.bf16 %v3138, %v3136
        %v3143 = vld [vmem:[%s8] sm:$0xf]
        %v3144 = vld [vmem:[%s8 + $0x4] sm:$0xf]
        %v3145 = vld [vmem:[%s8 + $0x8] sm:$0xf]
        %v3146 = vld [vmem:[%s8 + $0xc] sm:$0xf]
        %v3147 = vld [vmem:[%s8 + $0x10] sm:$0xf]
        %v3148 = vld [vmem:[%s8 + $0x14] sm:$0xf]
        %v3149 = vld [vmem:[%s8 + $0x18] sm:$0xf]
        %v3150 = vld [vmem:[%s8 + $0x1c] sm:$0xf]
        %v3151 = vld [vmem:[%s8 + $0x20] sm:$0xf]
        %v3152 = vld [vmem:[%s8 + $0x24] sm:$0xf]
        %v3153 = vld [vmem:[%s8 + $0x28] sm:$0xf]
        %v3154 = vld [vmem:[%s8 + $0x2c] sm:$0xf]
        %v3155 = vld [vmem:[%s8 + $0x30] sm:$0xf]
        %v3156 = vld [vmem:[%s8 + $0x34] sm:$0xf]
        %v3157 = vld [vmem:[%s8 + $0x38] sm:$0xf]
        %v3158 = vld [vmem:[%s8 + $0x3c] sm:$0xf]
        %v3159 = vld [vmem:[%s8 + $0x40] sm:$0xf]
        %v3160 = vld [vmem:[%s8 + $0x44] sm:$0xf]
        %v3161 = vld [vmem:[%s8 + $0x48] sm:$0xf]
        %v3162 = vld [vmem:[%s8 + $0x4c] sm:$0xf]
        %v3163 = vld [vmem:[%s8 + $0x50] sm:$0xf]
        %v3164 = vld [vmem:[%s8 + $0x54] sm:$0xf]
        %v3165 = vld [vmem:[%s8 + $0x58] sm:$0xf]
        %v3166 = vld [vmem:[%s8 + $0x5c] sm:$0xf]
        %v3167 = vld [vmem:[%s8 + $0x60] sm:$0xf]
        %v3168 = vld [vmem:[%s8 + $0x64] sm:$0xf]
        %v3169 = vld [vmem:[%s8 + $0x68] sm:$0xf]
        %v3170 = vld [vmem:[%s8 + $0x6c] sm:$0xf]
        %v3171 = vld [vmem:[%s8 + $0x70] sm:$0xf]
        %v3172 = vld [vmem:[%s8 + $0x74] sm:$0xf]
        %v3173 = vld [vmem:[%s8 + $0x78] sm:$0xf]
        %v3174 = vld [vmem:[%s8 + $0x7c] sm:$0xf]
        %v3175 = vld [vmem:[%s9] sm:$0x1]
        %v3177 = vlaneseq
        %v3178 = vshrl.u32 %v3177, 7
        %v3179 = vsub.s32 0, %v3178
        %v3180 = vrot.slane %v3175, %v3179
        %v3214 = vunpack.c.l.b16 %v3143
        %v3215 = vunpack.c.l.b16 %v3144
        %v3216 = vunpack.c.l.b16 %v3145
        %v3217 = vunpack.c.l.b16 %v3146
        %v3218 = vunpack.c.l.b16 %v3147
        %v3219 = vunpack.c.l.b16 %v3148
        %v3220 = vunpack.c.l.b16 %v3149
        %v3221 = vunpack.c.l.b16 %v3150
        %v3222 = vunpack.c.l.b16 %v3151
        %v3223 = vunpack.c.l.b16 %v3152
        %v3224 = vunpack.c.l.b16 %v3153
        %v3225 = vunpack.c.l.b16 %v3154
        %v3226 = vunpack.c.l.b16 %v3155
        %v3227 = vunpack.c.l.b16 %v3156
        %v3228 = vunpack.c.l.b16 %v3157
        %v3229 = vunpack.c.l.b16 %v3158
        %v3230 = vunpack.c.l.b16 %v3159
        %v3231 = vunpack.c.l.b16 %v3160
        %v3232 = vunpack.c.l.b16 %v3161
        %v3233 = vunpack.c.l.b16 %v3162
        %v3234 = vunpack.c.l.b16 %v3163
        %v3235 = vunpack.c.l.b16 %v3164
        %v3236 = vunpack.c.l.b16 %v3165
        %v3237 = vunpack.c.l.b16 %v3166
        %v3238 = vunpack.c.l.b16 %v3167
        %v3239 = vunpack.c.l.b16 %v3168
        %v3240 = vunpack.c.l.b16 %v3169
        %v3241 = vunpack.c.l.b16 %v3170
        %v3242 = vunpack.c.l.b16 %v3171
        %v3243 = vunpack.c.l.b16 %v3172
        %v3244 = vunpack.c.l.b16 %v3173
        %v3245 = vunpack.c.l.b16 %v3174
        %v3246 = vpack.c.b16 %v3215, %v3214
        %v3247 = vpack.c.b16 %v3217, %v3216
        %v3248 = vpack.c.b16 %v3219, %v3218
        %v3249 = vpack.c.b16 %v3221, %v3220
        %v3250 = vpack.c.b16 %v3223, %v3222
        %v3251 = vpack.c.b16 %v3225, %v3224
        %v3252 = vpack.c.b16 %v3227, %v3226
        %v3253 = vpack.c.b16 %v3229, %v3228
        %v3254 = vpack.c.b16 %v3231, %v3230
        %v3255 = vpack.c.b16 %v3233, %v3232
        %v3256 = vpack.c.b16 %v3235, %v3234
        %v3257 = vpack.c.b16 %v3237, %v3236
        %v3258 = vpack.c.b16 %v3239, %v3238
        %v3259 = vpack.c.b16 %v3241, %v3240
        %v3260 = vpack.c.b16 %v3243, %v3242
        %v3261 = vpack.c.b16 %v3245, %v3244
        %3278 = vmatprep.subr.bf16.mxu0 0
        %3279 = vmatpush1.bf16.msra.mxu0 %v3253
        %3280 = vmatprep.subr.bf16.mxu0 0
        %3281 = vmatpush1.bf16.msra.mxu0 %v3252
        %3282 = vmatprep.subr.bf16.mxu0 0
        %3283 = vmatpush1.bf16.msra.mxu0 %v3251
        %3284 = vmatprep.subr.bf16.mxu0 0
        %3285 = vmatpush1.bf16.msra.mxu0 %v3250
        %3286 = vmatprep.subr.bf16.mxu0 0
        %3287 = vmatpush1.bf16.msra.mxu0 %v3249
        %3288 = vmatprep.subr.bf16.mxu0 0
        %3289 = vmatpush1.bf16.msra.mxu0 %v3248
        %3290 = vmatprep.subr.bf16.mxu0 0
        %3291 = vmatpush1.bf16.msra.mxu0 %v3247
        %3292 = vmatprep.subr.bf16.mxu0 0
        %3293 = vmatpush1.bf16.msra.mxu0 %v3246
        %3294 = vmatprep.subr.bf16.mxu0 0
        %3295 = vmatpush2.bf16.msra.mxu0 %v3261
        %3296 = vmatprep.subr.bf16.mxu0 0
        %3297 = vmatpush2.bf16.msra.mxu0 %v3260
        %3298 = vmatprep.subr.bf16.mxu0 0
        %3299 = vmatpush2.bf16.msra.mxu0 %v3259
        %3300 = vmatprep.subr.bf16.mxu0 0
        %3301 = vmatpush2.bf16.msra.mxu0 %v3258
        %3302 = vmatprep.subr.bf16.mxu0 0
        %3303 = vmatpush2.bf16.msra.mxu0 %v3257
        %3304 = vmatprep.subr.bf16.mxu0 0
        %3305 = vmatpush2.bf16.msra.mxu0 %v3256
        %3306 = vmatprep.subr.bf16.mxu0 0
        %3307 = vmatpush2.bf16.msra.mxu0 %v3255
        %3308 = vmatprep.subr.bf16.mxu0 0
        %3309 = vmatpush2.bf16.msra.mxu0 %v3254
        %3310 = vmatprep.mubr.bf16.mxu0 %v3140
        %3311 = vmatmul.mubr.bf16.gmra.mxu0 %v3139
        %v3312 = vpop.f32.mrf.mxu0
        %v3313 = vadd.f32 %v3180, %v3312
        %v3314 = vpop.f32.mrf.mxu0
        %v3315 = vpop.f32.mrf.mxu0
        %v3316 = vadd.f32 %v3180, %v3315
        %v3317 = vpop.f32.mrf.mxu0
        %3318 = vmatprep.mubr.bf16.mxu0 %v3142
        %3319 = vmatmul.mubr.bf16.gmra.mxu0 %v3141
        %v3320 = vpop.f32.mrf.mxu0
        %v3321 = vadd.f32 %v3180, %v3320
        %v3322 = vpop.f32.mrf.mxu0
        %v3323 = vpop.f32.mrf.mxu0
        %v3324 = vadd.f32 %v3180, %v3323
        %v3325 = vpop.f32.mrf.mxu0
        %3326 = vdwg.mxu0
        %v3327 = vmax.f32 %v3313, 0.0
        %v3328 = vmax.f32 %v3316, 0.0
        %v3329 = vmax.f32 %v3321, 0.0
        %v3330 = vmax.f32 %v3324, 0.0
        %v3331 = vpack.c.bf16 %v3328, %v3327
        %v3332 = vpack.c.bf16 %v3330, %v3329
        %v3333 = vld [vmem:[%s10] sm:$0xff]
        %v3334 = vld [vmem:[%s10 + $0x8] sm:$0xff]
        %v3335 = vld [vmem:[%s10 + $0x10] sm:$0xff]
        %v3336 = vld [vmem:[%s10 + $0x18] sm:$0xff]
        %v3337 = vld [vmem:[%s10 + $0x20] sm:$0xff]
        %v3338 = vld [vmem:[%s10 + $0x28] sm:$0xff]
        %v3339 = vld [vmem:[%s10 + $0x30] sm:$0xff]
        %v3340 = vld [vmem:[%s10 + $0x38] sm:$0xff]
        %v3341 = vld [vmem:[%s10 + $0x40] sm:$0xff]
        %v3342 = vld [vmem:[%s10 + $0x48] sm:$0xff]
        %v3343 = vld [vmem:[%s10 + $0x50] sm:$0xff]
        %v3344 = vld [vmem:[%s10 + $0x58] sm:$0xff]
        %v3345 = vld [vmem:[%s10 + $0x60] sm:$0xff]
        %v3346 = vld [vmem:[%s10 + $0x68] sm:$0xff]
        %v3347 = vld [vmem:[%s10 + $0x70] sm:$0xff]
        %v3348 = vld [vmem:[%s10 + $0x78] sm:$0xff]
        %v3349 = vld [vmem:[%s11] sm:$0x3]
        %v3351 = vlaneseq
        %v3352 = vshrl.u32 %v3351, 7
        %v3353 = vsub.s32 0, %v3352
        %v3354 = vrot.slane %v3349, %v3353
        %v3355 = vlaneseq
        %v3356 = vshrl.u32 %v3355, 7
        %v3357 = vsub.s32 1, %v3356
        %v3358 = vrot.slane %v3349, %v3357
        %v3377 = vunpack.c.l.b16 %v3333
        %v3378 = vunpack.c.h.b16 %v3333
        %v3379 = vunpack.c.l.b16 %v3334
        %v3380 = vunpack.c.h.b16 %v3334
        %v3381 = vunpack.c.l.b16 %v3335
        %v3382 = vunpack.c.h.b16 %v3335
        %v3383 = vunpack.c.l.b16 %v3336
        %v3384 = vunpack.c.h.b16 %v3336
        %v3385 = vunpack.c.l.b16 %v3337
        %v3386 = vunpack.c.h.b16 %v3337
        %v3387 = vunpack.c.l.b16 %v3338
        %v3388 = vunpack.c.h.b16 %v3338
        %v3389 = vunpack.c.l.b16 %v3339
        %v3390 = vunpack.c.h.b16 %v3339
        %v3391 = vunpack.c.l.b16 %v3340
        %v3392 = vunpack.c.h.b16 %v3340
        %v3393 = vunpack.c.l.b16 %v3341
        %v3394 = vunpack.c.h.b16 %v3341
        %v3395 = vunpack.c.l.b16 %v3342
        %v3396 = vunpack.c.h.b16 %v3342
        %v3397 = vunpack.c.l.b16 %v3343
        %v3398 = vunpack.c.h.b16 %v3343
        %v3399 = vunpack.c.l.b16 %v3344
        %v3400 = vunpack.c.h.b16 %v3344
        %v3401 = vunpack.c.l.b16 %v3345
        %v3402 = vunpack.c.h.b16 %v3345
        %v3403 = vunpack.c.l.b16 %v3346
        %v3404 = vunpack.c.h.b16 %v3346
        %v3405 = vunpack.c.l.b16 %v3347
        %v3406 = vunpack.c.h.b16 %v3347
        %v3407 = vunpack.c.l.b16 %v3348
        %v3408 = vunpack.c.h.b16 %v3348
        %v3409 = vpack.c.b16 %v3379, %v3377
        %v3410 = vpack.c.b16 %v3380, %v3378
        %v3411 = vpack.c.b16 %v3383, %v3381
        %v3412 = vpack.c.b16 %v3384, %v3382
        %v3413 = vpack.c.b16 %v3387, %v3385
        %v3414 = vpack.c.b16 %v3388, %v3386
        %v3415 = vpack.c.b16 %v3391, %v3389
        %v3416 = vpack.c.b16 %v3392, %v3390
        %v3417 = vpack.c.b16 %v3395, %v3393
        %v3418 = vpack.c.b16 %v3396, %v3394
        %v3419 = vpack.c.b16 %v3399, %v3397
        %v3420 = vpack.c.b16 %v3400, %v3398
        %v3421 = vpack.c.b16 %v3403, %v3401
        %v3422 = vpack.c.b16 %v3404, %v3402
        %v3423 = vpack.c.b16 %v3407, %v3405
        %v3424 = vpack.c.b16 %v3408, %v3406
        %3441 = vmatprep.subr.bf16.mxu0 %v3424
        %3442 = vmatpush1.bf16.msra.mxu0 %v3423
        %3443 = vmatprep.subr.bf16.mxu0 %v3422
        %3444 = vmatpush1.bf16.msra.mxu0 %v3421
        %3445 = vmatprep.subr.bf16.mxu0 %v3420
        %3446 = vmatpush1.bf16.msra.mxu0 %v3419
        %3447 = vmatprep.subr.bf16.mxu0 %v3418
        %3448 = vmatpush1.bf16.msra.mxu0 %v3417
        %3449 = vmatprep.subr.bf16.mxu0 %v3416
        %3450 = vmatpush1.bf16.msra.mxu0 %v3415
        %3451 = vmatprep.subr.bf16.mxu0 %v3414
        %3452 = vmatpush1.bf16.msra.mxu0 %v3413
        %3453 = vmatprep.subr.bf16.mxu0 %v3412
        %3454 = vmatpush1.bf16.msra.mxu0 %v3411
        %3455 = vmatprep.subr.bf16.mxu0 %v3410
        %3456 = vmatpush1.bf16.msra.mxu0 %v3409
        %3457 = vmatprep.subr.bf16.mxu0 0
        %3458 = vmatpush2.bf16.msra.mxu0 0
        %3459 = vmatprep.subr.bf16.mxu0 0
        %3460 = vmatpush2.bf16.msra.mxu0 0
        %3461 = vmatprep.subr.bf16.mxu0 0
        %3462 = vmatpush2.bf16.msra.mxu0 0
        %3463 = vmatprep.subr.bf16.mxu0 0
        %3464 = vmatpush2.bf16.msra.mxu0 0
        %3465 = vmatprep.subr.bf16.mxu0 0
        %3466 = vmatpush2.bf16.msra.mxu0 0
        %3467 = vmatprep.subr.bf16.mxu0 0
        %3468 = vmatpush2.bf16.msra.mxu0 0
        %3469 = vmatprep.subr.bf16.mxu0 0
        %3470 = vmatpush2.bf16.msra.mxu0 0
        %3471 = vmatprep.subr.bf16.mxu0 0
        %3472 = vmatpush2.bf16.msra.mxu0 0
        %3473 = vmatprep.mubr.bf16.mxu0 0
        %3474 = vmatmul.mubr.bf16.gmra.mxu0 %v3331
        %v3475 = vpop.f32.mrf.mxu0
        %v3476 = vadd.f32 %v3354, %v3475
        %v3477 = vpop.f32.mrf.mxu0
        %v3478 = vadd.f32 %v3358, %v3477
        %v3479 = vpop.f32.mrf.mxu0
        %v3480 = vadd.f32 %v3354, %v3479
        %v3481 = vpop.f32.mrf.mxu0
        %v3482 = vadd.f32 %v3358, %v3481
        %3483 = vmatprep.mubr.bf16.mxu0 0
        %3484 = vmatmul.mubr.bf16.gmra.mxu0 %v3332
        %v3485 = vpop.f32.mrf.mxu0
        %v3486 = vadd.f32 %v3354, %v3485
        %v3487 = vpop.f32.mrf.mxu0
        %v3488 = vadd.f32 %v3358, %v3487
        %v3489 = vpop.f32.mrf.mxu0
        %v3490 = vadd.f32 %v3354, %v3489
        %v3491 = vpop.f32.mrf.mxu0
        %v3492 = vadd.f32 %v3358, %v3491
        %3493 = vdwg.mxu0
        %v3494 = vmul.f32 %v3478, 0.5
        %v3495 = vmul.f32 %v3482, 0.5
        %v3496 = vmul.f32 %v3488, 0.5
        %v3497 = vmul.f32 %v3492, 0.5
        %v3498 = vmul.f32 %v3494, 1.442695
        %v3499 = vpow.pop %v3498
        %v3500 = vmul.f32 %v3495, 1.442695
        %v3501 = vpow.pop %v3500
        %v3502 = vmul.f32 %v3496, 1.442695
        %v3503 = vpow.pop %v3502
        %v3504 = vmul.f32 %v3497, 1.442695
        %v3505 = vpow.pop %v3504
        %v3506 = vld [vmem:[%s785] sm:$0xff]
        %v3507 = vld [vmem:[%s785 + $0x8] sm:$0xff]
        %v3508 = vld [vmem:[%s785 + $0x10] sm:$0xff]
        %v3509 = vld [vmem:[%s785 + $0x18] sm:$0xff]
        %v3510 = vmul.f32 %v3499, %v3506
        %v3511 = vmul.f32 %v3501, %v3507
        %v3512 = vmul.f32 %v3503, %v3508
        %v3513 = vmul.f32 %v3505, %v3509
        %v3514 = vadd.f32 %v3476, %v3510
        %v3515 = vadd.f32 %v3480, %v3511
        %v3516 = vadd.f32 %v3486, %v3512
        %v3517 = vadd.f32 %v3490, %v3513
        %v3518 = vpack.c.bf16 %v3515, %v3514
        %v3519 = vpack.c.bf16 %v3517, %v3516
        %v3520 = vld [vmem:[#allocation7] sm:$0xff]
        %v3521 = vld [vmem:[#allocation7 + $0x8] sm:$0xff]
        %v3522 = vld [vmem:[#allocation7 + $0x10] sm:$0xff]
        %v3523 = vld [vmem:[#allocation7 + $0x18] sm:$0xff]
        %v3524 = vld [vmem:[#allocation7 + $0x20] sm:$0xff]
        %v3525 = vld [vmem:[#allocation7 + $0x28] sm:$0xff]
        %v3526 = vld [vmem:[#allocation7 + $0x30] sm:$0xff]
        %v3527 = vld [vmem:[#allocation7 + $0x38] sm:$0xff]
        %v3528 = vld [vmem:[#allocation7 + $0x40] sm:$0xff]
        %v3529 = vld [vmem:[#allocation7 + $0x48] sm:$0xff]
        %v3530 = vld [vmem:[#allocation7 + $0x50] sm:$0xff]
        %v3531 = vld [vmem:[#allocation7 + $0x58] sm:$0xff]
        %v3532 = vld [vmem:[#allocation7 + $0x60] sm:$0xff]
        %v3533 = vld [vmem:[#allocation7 + $0x68] sm:$0xff]
        %v3534 = vld [vmem:[#allocation7 + $0x70] sm:$0xff]
        %v3535 = vld [vmem:[#allocation7 + $0x78] sm:$0xff]
        %v3536 = vld [vmem:[#allocation7 + $0x80] sm:$0xff]
        %v3537 = vld [vmem:[#allocation7 + $0x88] sm:$0xff]
        %v3538 = vld [vmem:[#allocation7 + $0x90] sm:$0xff]
        %v3539 = vld [vmem:[#allocation7 + $0x98] sm:$0xff]
        %v3540 = vld [vmem:[#allocation7 + $0xa0] sm:$0xff]
        %v3541 = vld [vmem:[#allocation7 + $0xa8] sm:$0xff]
        %v3542 = vld [vmem:[#allocation7 + $0xb0] sm:$0xff]
        %v3543 = vld [vmem:[#allocation7 + $0xb8] sm:$0xff]
        %v3544 = vld [vmem:[#allocation7 + $0xc0] sm:$0xff]
        %v3545 = vld [vmem:[#allocation7 + $0xc8] sm:$0xff]
        %v3546 = vld [vmem:[#allocation7 + $0xd0] sm:$0xff]
        %v3547 = vld [vmem:[#allocation7 + $0xd8] sm:$0xff]
        %v3548 = vld [vmem:[#allocation7 + $0xe0] sm:$0xff]
        %v3549 = vld [vmem:[#allocation7 + $0xe8] sm:$0xff]
        %v3550 = vld [vmem:[#allocation7 + $0xf0] sm:$0xff]
        %v3551 = vld [vmem:[#allocation7 + $0xf8] sm:$0xff]
        %v3552 = vld [vmem:[#allocation7 + $0x100] sm:$0xff]
        %v3553 = vld [vmem:[#allocation7 + $0x108] sm:$0xff]
        %v3554 = vld [vmem:[#allocation7 + $0x110] sm:$0xff]
        %v3555 = vld [vmem:[#allocation7 + $0x118] sm:$0xff]
        %v3556 = vld [vmem:[#allocation7 + $0x120] sm:$0xff]
        %v3557 = vld [vmem:[#allocation7 + $0x128] sm:$0xff]
        %v3558 = vld [vmem:[#allocation7 + $0x130] sm:$0xff]
        %v3559 = vld [vmem:[#allocation7 + $0x138] sm:$0xff]
        %v3560 = vld [vmem:[#allocation7 + $0x140] sm:$0xff]
        %v3561 = vld [vmem:[#allocation7 + $0x148] sm:$0xff]
        %v3562 = vld [vmem:[#allocation7 + $0x150] sm:$0xff]
        %v3563 = vld [vmem:[#allocation7 + $0x158] sm:$0xff]
        %v3564 = vld [vmem:[#allocation7 + $0x160] sm:$0xff]
        %v3565 = vld [vmem:[#allocation7 + $0x168] sm:$0xff]
        %v3566 = vld [vmem:[#allocation7 + $0x170] sm:$0xff]
        %v3567 = vld [vmem:[#allocation7 + $0x178] sm:$0xff]
        %v3568 = vld [vmem:[%s13] sm:$0x3f]
        %v3570 = vlaneseq
        %v3571 = vshrl.u32 %v3570, 7
        %v3572 = vsub.s32 0, %v3571
        %v3573 = vrot.slane %v3568, %v3572
        %v3574 = vlaneseq
        %v3575 = vshrl.u32 %v3574, 7
        %v3576 = vsub.s32 1, %v3575
        %v3577 = vrot.slane %v3568, %v3576
        %v3578 = vlaneseq
        %v3579 = vshrl.u32 %v3578, 7
        %v3580 = vsub.s32 2, %v3579
        %v3581 = vrot.slane %v3568, %v3580
        %v3582 = vlaneseq
        %v3583 = vshrl.u32 %v3582, 7
        %v3584 = vsub.s32 3, %v3583
        %v3585 = vrot.slane %v3568, %v3584
        %v3586 = vlaneseq
        %v3587 = vshrl.u32 %v3586, 7
        %v3588 = vsub.s32 4, %v3587
        %v3589 = vrot.slane %v3568, %v3588
        %v3590 = vlaneseq
        %v3591 = vshrl.u32 %v3590, 7
        %v3592 = vsub.s32 5, %v3591
        %v3593 = vrot.slane %v3568, %v3592
        %v3648 = vunpack.c.l.b16 %v3520
        %v3649 = vunpack.c.h.b16 %v3520
        %v3650 = vunpack.c.l.b16 %v3521
        %v3651 = vunpack.c.h.b16 %v3521
        %v3652 = vunpack.c.l.b16 %v3522
        %v3653 = vunpack.c.h.b16 %v3522
        %v3654 = vunpack.c.l.b16 %v3523
        %v3655 = vunpack.c.h.b16 %v3523
        %v3656 = vunpack.c.l.b16 %v3524
        %v3657 = vunpack.c.h.b16 %v3524
        %v3658 = vunpack.c.l.b16 %v3525
        %v3659 = vunpack.c.h.b16 %v3525
        %v3660 = vunpack.c.l.b16 %v3526
        %v3661 = vunpack.c.h.b16 %v3526
        %v3662 = vunpack.c.l.b16 %v3527
        %v3663 = vunpack.c.h.b16 %v3527
        %v3664 = vunpack.c.l.b16 %v3528
        %v3665 = vunpack.c.h.b16 %v3528
        %v3666 = vunpack.c.l.b16 %v3529
        %v3667 = vunpack.c.h.b16 %v3529
        %v3668 = vunpack.c.l.b16 %v3530
        %v3669 = vunpack.c.h.b16 %v3530
        %v3670 = vunpack.c.l.b16 %v3531
        %v3671 = vunpack.c.h.b16 %v3531
        %v3672 = vunpack.c.l.b16 %v3532
        %v3673 = vunpack.c.h.b16 %v3532
        %v3674 = vunpack.c.l.b16 %v3533
        %v3675 = vunpack.c.h.b16 %v3533
        %v3676 = vunpack.c.l.b16 %v3534
        %v3677 = vunpack.c.h.b16 %v3534
        %v3678 = vunpack.c.l.b16 %v3535
        %v3679 = vunpack.c.h.b16 %v3535
        %v3680 = vunpack.c.l.b16 %v3536
        %v3681 = vunpack.c.h.b16 %v3536
        %v3682 = vunpack.c.l.b16 %v3537
        %v3683 = vunpack.c.h.b16 %v3537
        %v3684 = vunpack.c.l.b16 %v3538
        %v3685 = vunpack.c.h.b16 %v3538
        %v3686 = vunpack.c.l.b16 %v3539
        %v3687 = vunpack.c.h.b16 %v3539
        %v3688 = vunpack.c.l.b16 %v3540
        %v3689 = vunpack.c.h.b16 %v3540
        %v3690 = vunpack.c.l.b16 %v3541
        %v3691 = vunpack.c.h.b16 %v3541
        %v3692 = vunpack.c.l.b16 %v3542
        %v3693 = vunpack.c.h.b16 %v3542
        %v3694 = vunpack.c.l.b16 %v3543
        %v3695 = vunpack.c.h.b16 %v3543
        %v3696 = vunpack.c.l.b16 %v3544
        %v3697 = vunpack.c.h.b16 %v3544
        %v3698 = vunpack.c.l.b16 %v3545
        %v3699 = vunpack.c.h.b16 %v3545
        %v3700 = vunpack.c.l.b16 %v3546
        %v3701 = vunpack.c.h.b16 %v3546
        %v3702 = vunpack.c.l.b16 %v3547
        %v3703 = vunpack.c.h.b16 %v3547
        %v3704 = vunpack.c.l.b16 %v3548
        %v3705 = vunpack.c.h.b16 %v3548
        %v3706 = vunpack.c.l.b16 %v3549
        %v3707 = vunpack.c.h.b16 %v3549
        %v3708 = vunpack.c.l.b16 %v3550
        %v3709 = vunpack.c.h.b16 %v3550
        %v3710 = vunpack.c.l.b16 %v3551
        %v3711 = vunpack.c.h.b16 %v3551
        %v3712 = vunpack.c.l.b16 %v3552
        %v3713 = vunpack.c.h.b16 %v3552
        %v3714 = vunpack.c.l.b16 %v3553
        %v3715 = vunpack.c.h.b16 %v3553
        %v3716 = vunpack.c.l.b16 %v3554
        %v3717 = vunpack.c.h.b16 %v3554
        %v3718 = vunpack.c.l.b16 %v3555
        %v3719 = vunpack.c.h.b16 %v3555
        %v3720 = vunpack.c.l.b16 %v3556
        %v3721 = vunpack.c.h.b16 %v3556
        %v3722 = vunpack.c.l.b16 %v3557
        %v3723 = vunpack.c.h.b16 %v3557
        %v3724 = vunpack.c.l.b16 %v3558
        %v3725 = vunpack.c.h.b16 %v3558
        %v3726 = vunpack.c.l.b16 %v3559
        %v3727 = vunpack.c.h.b16 %v3559
        %v3728 = vunpack.c.l.b16 %v3560
        %v3729 = vunpack.c.h.b16 %v3560
        %v3730 = vunpack.c.l.b16 %v3561
        %v3731 = vunpack.c.h.b16 %v3561
        %v3732 = vunpack.c.l.b16 %v3562
        %v3733 = vunpack.c.h.b16 %v3562
        %v3734 = vunpack.c.l.b16 %v3563
        %v3735 = vunpack.c.h.b16 %v3563
        %v3736 = vunpack.c.l.b16 %v3564
        %v3737 = vunpack.c.h.b16 %v3564
        %v3738 = vunpack.c.l.b16 %v3565
        %v3739 = vunpack.c.h.b16 %v3565
        %v3740 = vunpack.c.l.b16 %v3566
        %v3741 = vunpack.c.h.b16 %v3566
        %v3742 = vunpack.c.l.b16 %v3567
        %v3743 = vunpack.c.h.b16 %v3567
        %v3744 = vpack.c.b16 %v3654, %v3648
        %v3745 = vpack.c.b16 %v3655, %v3649
        %v3746 = vpack.c.b16 %v3656, %v3650
        %v3747 = vpack.c.b16 %v3657, %v3651
        %v3748 = vpack.c.b16 %v3658, %v3652
        %v3749 = vpack.c.b16 %v3659, %v3653
        %v3750 = vpack.c.b16 %v3666, %v3660
        %v3751 = vpack.c.b16 %v3667, %v3661
        %v3752 = vpack.c.b16 %v3668, %v3662
        %v3753 = vpack.c.b16 %v3669, %v3663
        %v3754 = vpack.c.b16 %v3670, %v3664
        %v3755 = vpack.c.b16 %v3671, %v3665
        %v3756 = vpack.c.b16 %v3678, %v3672
        %v3757 = vpack.c.b16 %v3679, %v3673
        %v3758 = vpack.c.b16 %v3680, %v3674
        %v3759 = vpack.c.b16 %v3681, %v3675
        %v3760 = vpack.c.b16 %v3682, %v3676
        %v3761 = vpack.c.b16 %v3683, %v3677
        %v3762 = vpack.c.b16 %v3690, %v3684
        %v3763 = vpack.c.b16 %v3691, %v3685
        %v3764 = vpack.c.b16 %v3692, %v3686
        %v3765 = vpack.c.b16 %v3693, %v3687
        %v3766 = vpack.c.b16 %v3694, %v3688
        %v3767 = vpack.c.b16 %v3695, %v3689
        %v3768 = vpack.c.b16 %v3702, %v3696
        %v3769 = vpack.c.b16 %v3703, %v3697
        %v3770 = vpack.c.b16 %v3704, %v3698
        %v3771 = vpack.c.b16 %v3705, %v3699
        %v3772 = vpack.c.b16 %v3706, %v3700
        %v3773 = vpack.c.b16 %v3707, %v3701
        %v3774 = vpack.c.b16 %v3714, %v3708
        %v3775 = vpack.c.b16 %v3715, %v3709
        %v3776 = vpack.c.b16 %v3716, %v3710
        %v3777 = vpack.c.b16 %v3717, %v3711
        %v3778 = vpack.c.b16 %v3718, %v3712
        %v3779 = vpack.c.b16 %v3719, %v3713
        %v3780 = vpack.c.b16 %v3726, %v3720
        %v3781 = vpack.c.b16 %v3727, %v3721
        %v3782 = vpack.c.b16 %v3728, %v3722
        %v3783 = vpack.c.b16 %v3729, %v3723
        %v3784 = vpack.c.b16 %v3730, %v3724
        %v3785 = vpack.c.b16 %v3731, %v3725
        %v3786 = vpack.c.b16 %v3738, %v3732
        %v3787 = vpack.c.b16 %v3739, %v3733
        %v3788 = vpack.c.b16 %v3740, %v3734
        %v3789 = vpack.c.b16 %v3741, %v3735
        %v3790 = vpack.c.b16 %v3742, %v3736
        %v3791 = vpack.c.b16 %v3743, %v3737
        %3840 = vmatprep.subr.bf16.mxu0 %v3787
        %3841 = vmatpush1.bf16.msra.mxu0 %v3786
        %3842 = vmatprep.subr.bf16.mxu0 %v3781
        %3843 = vmatpush1.bf16.msra.mxu0 %v3780
        %3844 = vmatprep.subr.bf16.mxu0 %v3775
        %3845 = vmatpush1.bf16.msra.mxu0 %v3774
        %3846 = vmatprep.subr.bf16.mxu0 %v3769
        %3847 = vmatpush1.bf16.msra.mxu0 %v3768
        %3848 = vmatprep.subr.bf16.mxu0 %v3763
        %3849 = vmatpush1.bf16.msra.mxu0 %v3762
        %3850 = vmatprep.subr.bf16.mxu0 %v3757
        %3851 = vmatpush1.bf16.msra.mxu0 %v3756
        %3852 = vmatprep.subr.bf16.mxu0 %v3751
        %3853 = vmatpush1.bf16.msra.mxu0 %v3750
        %3854 = vmatprep.subr.bf16.mxu0 %v3745
        %3855 = vmatpush1.bf16.msra.mxu0 %v3744
        %3856 = vmatprep.subr.bf16.mxu0 0
        %3857 = vmatpush2.bf16.msra.mxu0 0
        %3858 = vmatprep.subr.bf16.mxu0 0
        %3859 = vmatpush2.bf16.msra.mxu0 0
        %3860 = vmatprep.subr.bf16.mxu0 0
        %3861 = vmatpush2.bf16.msra.mxu0 0
        %3862 = vmatprep.subr.bf16.mxu0 0
        %3863 = vmatpush2.bf16.msra.mxu0 0
        %3864 = vmatprep.subr.bf16.mxu0 0
        %3865 = vmatpush2.bf16.msra.mxu0 0
        %3866 = vmatprep.subr.bf16.mxu0 0
        %3867 = vmatpush2.bf16.msra.mxu0 0
        %3868 = vmatprep.subr.bf16.mxu0 0
        %3869 = vmatpush2.bf16.msra.mxu0 0
        %3870 = vmatprep.subr.bf16.mxu0 0
        %3871 = vmatpush2.bf16.msra.mxu0 0
        %3872 = vmatprep.mubr.bf16.mxu0 0
        %3873 = vmatmul.mubr.bf16.gmra.mxu0 %v3518
        %v3874 = vpop.f32.mrf.mxu0
        %v3875 = vadd.f32 %v3573, %v3874
        %v3876 = vpop.f32.mrf.mxu0
        %v3877 = vadd.f32 %v3577, %v3876
        %v3878 = vpop.f32.mrf.mxu0
        %v3879 = vadd.f32 %v3573, %v3878
        %v3880 = vpop.f32.mrf.mxu0
        %v3881 = vadd.f32 %v3577, %v3880
        %3882 = vmatprep.mubr.bf16.mxu0 0
        %3883 = vmatmul.mubr.bf16.gmra.mxu0 %v3519
        %v3884 = vpop.f32.mrf.mxu0
        %v3885 = vadd.f32 %v3573, %v3884
        %v3886 = vpop.f32.mrf.mxu0
        %v3887 = vadd.f32 %v3577, %v3886
        %v3888 = vpop.f32.mrf.mxu0
        %v3889 = vadd.f32 %v3573, %v3888
        %v3890 = vpop.f32.mrf.mxu0
        %v3891 = vadd.f32 %v3577, %v3890
        %3892 = vdwg.mxu0
        %3893 = vmatprep.subr.bf16.mxu0 %v3789
        %3894 = vmatpush1.bf16.msra.mxu0 %v3788
        %3895 = vmatprep.subr.bf16.mxu0 %v3783
        %3896 = vmatpush1.bf16.msra.mxu0 %v3782
        %3897 = vmatprep.subr.bf16.mxu0 %v3777
        %3898 = vmatpush1.bf16.msra.mxu0 %v3776
        %3899 = vmatprep.subr.bf16.mxu0 %v3771
        %3900 = vmatpush1.bf16.msra.mxu0 %v3770
        %3901 = vmatprep.subr.bf16.mxu0 %v3765
        %3902 = vmatpush1.bf16.msra.mxu0 %v3764
        %3903 = vmatprep.subr.bf16.mxu0 %v3759
        %3904 = vmatpush1.bf16.msra.mxu0 %v3758
        %3905 = vmatprep.subr.bf16.mxu0 %v3753
        %3906 = vmatpush1.bf16.msra.mxu0 %v3752
        %3907 = vmatprep.subr.bf16.mxu0 %v3747
        %3908 = vmatpush1.bf16.msra.mxu0 %v3746
        %3909 = vmatprep.subr.bf16.mxu0 0
        %3910 = vmatpush2.bf16.msra.mxu0 0
        %3911 = vmatprep.subr.bf16.mxu0 0
        %3912 = vmatpush2.bf16.msra.mxu0 0
        %3913 = vmatprep.subr.bf16.mxu0 0
        %3914 = vmatpush2.bf16.msra.mxu0 0
        %3915 = vmatprep.subr.bf16.mxu0 0
        %3916 = vmatpush2.bf16.msra.mxu0 0
        %3917 = vmatprep.subr.bf16.mxu0 0
        %3918 = vmatpush2.bf16.msra.mxu0 0
        %3919 = vmatprep.subr.bf16.mxu0 0
        %3920 = vmatpush2.bf16.msra.mxu0 0
        %3921 = vmatprep.subr.bf16.mxu0 0
        %3922 = vmatpush2.bf16.msra.mxu0 0
        %3923 = vmatprep.subr.bf16.mxu0 0
        %3924 = vmatpush2.bf16.msra.mxu0 0
        %3925 = vmatprep.mubr.bf16.mxu0 0
        %3926 = vmatmul.mubr.bf16.gmra.mxu0 %v3518
        %v3927 = vpop.f32.mrf.mxu0
        %v3928 = vadd.f32 %v3581, %v3927
        %v3929 = vpop.f32.mrf.mxu0
        %v3930 = vadd.f32 %v3585, %v3929
        %v3931 = vpop.f32.mrf.mxu0
        %v3932 = vadd.f32 %v3581, %v3931
        %v3933 = vpop.f32.mrf.mxu0
        %v3934 = vadd.f32 %v3585, %v3933
        %3935 = vmatprep.mubr.bf16.mxu0 0
        %3936 = vmatmul.mubr.bf16.gmra.mxu0 %v3519
        %v3937 = vpop.f32.mrf.mxu0
        %v3938 = vadd.f32 %v3581, %v3937
        %v3939 = vpop.f32.mrf.mxu0
        %v3940 = vadd.f32 %v3585, %v3939
        %v3941 = vpop.f32.mrf.mxu0
        %v3942 = vadd.f32 %v3581, %v3941
        %v3943 = vpop.f32.mrf.mxu0
        %v3944 = vadd.f32 %v3585, %v3943
        %3945 = vdwg.mxu0
        %3946 = vmatprep.subr.bf16.mxu0 %v3791
        %3947 = vmatpush1.bf16.msra.mxu0 %v3790
        %3948 = vmatprep.subr.bf16.mxu0 %v3785
        %3949 = vmatpush1.bf16.msra.mxu0 %v3784
        %3950 = vmatprep.subr.bf16.mxu0 %v3779
        %3951 = vmatpush1.bf16.msra.mxu0 %v3778
        %3952 = vmatprep.subr.bf16.mxu0 %v3773
        %3953 = vmatpush1.bf16.msra.mxu0 %v3772
        %3954 = vmatprep.subr.bf16.mxu0 %v3767
        %3955 = vmatpush1.bf16.msra.mxu0 %v3766
        %3956 = vmatprep.subr.bf16.mxu0 %v3761
        %3957 = vmatpush1.bf16.msra.mxu0 %v3760
        %3958 = vmatprep.subr.bf16.mxu0 %v3755
        %3959 = vmatpush1.bf16.msra.mxu0 %v3754
        %3960 = vmatprep.subr.bf16.mxu0 %v3749
        %3961 = vmatpush1.bf16.msra.mxu0 %v3748
        %3962 = vmatprep.subr.bf16.mxu0 0
        %3963 = vmatpush2.bf16.msra.mxu0 0
        %3964 = vmatprep.subr.bf16.mxu0 0
        %3965 = vmatpush2.bf16.msra.mxu0 0
        %3966 = vmatprep.subr.bf16.mxu0 0
        %3967 = vmatpush2.bf16.msra.mxu0 0
        %3968 = vmatprep.subr.bf16.mxu0 0
        %3969 = vmatpush2.bf16.msra.mxu0 0
        %3970 = vmatprep.subr.bf16.mxu0 0
        %3971 = vmatpush2.bf16.msra.mxu0 0
        %3972 = vmatprep.subr.bf16.mxu0 0
        %3973 = vmatpush2.bf16.msra.mxu0 0
        %3974 = vmatprep.subr.bf16.mxu0 0
        %3975 = vmatpush2.bf16.msra.mxu0 0
        %3976 = vmatprep.subr.bf16.mxu0 0
        %3977 = vmatpush2.bf16.msra.mxu0 0
        %3978 = vmatprep.mubr.bf16.mxu0 0
        %3979 = vmatmul.mubr.bf16.gmra.mxu0 %v3518
        %v3980 = vpop.f32.mrf.mxu0
        %v3981 = vadd.f32 %v3589, %v3980
        %v3982 = vpop.f32.mrf.mxu0
        %v3983 = vadd.f32 %v3593, %v3982
        %v3984 = vpop.f32.mrf.mxu0
        %v3985 = vadd.f32 %v3589, %v3984
        %v3986 = vpop.f32.mrf.mxu0
        %v3987 = vadd.f32 %v3593, %v3986
        %3988 = vmatprep.mubr.bf16.mxu0 0
        %3989 = vmatmul.mubr.bf16.gmra.mxu0 %v3519
        %v3990 = vpop.f32.mrf.mxu0
        %v3991 = vadd.f32 %v3589, %v3990
        %v3992 = vpop.f32.mrf.mxu0
        %v3993 = vadd.f32 %v3593, %v3992
        %v3994 = vpop.f32.mrf.mxu0
        %v3995 = vadd.f32 %v3589, %v3994
        %v3996 = vpop.f32.mrf.mxu0
        %v3997 = vadd.f32 %v3593, %v3996
        %3998 = vdwg.mxu0
        %v3999 = vmax.f32 %v3875, 0.0
        %v4000 = vmax.f32 %v3877, 0.0
        %v4001 = vmax.f32 %v3928, 0.0
        %v4002 = vmax.f32 %v3930, 0.0
        %v4003 = vmax.f32 %v3981, 0.0
        %v4004 = vmax.f32 %v3983, 0.0
        %v4005 = vmax.f32 %v3879, 0.0
        %v4006 = vmax.f32 %v3881, 0.0
        %v4007 = vmax.f32 %v3932, 0.0
        %v4008 = vmax.f32 %v3934, 0.0
        %v4009 = vmax.f32 %v3985, 0.0
        %v4010 = vmax.f32 %v3987, 0.0
        %v4011 = vmax.f32 %v3885, 0.0
        %v4012 = vmax.f32 %v3887, 0.0
        %v4013 = vmax.f32 %v3938, 0.0
        %v4014 = vmax.f32 %v3940, 0.0
        %v4015 = vmax.f32 %v3991, 0.0
        %v4016 = vmax.f32 %v3993, 0.0
        %v4017 = vmax.f32 %v3889, 0.0
        %v4018 = vmax.f32 %v3891, 0.0
        %v4019 = vmax.f32 %v3942, 0.0
        %v4020 = vmax.f32 %v3944, 0.0
        %v4021 = vmax.f32 %v3995, 0.0
        %v4022 = vmax.f32 %v3997, 0.0
        %v4023 = vpack.c.bf16 %v4005, %v3999
        %v4024 = vpack.c.bf16 %v4006, %v4000
        %v4025 = vpack.c.bf16 %v4007, %v4001
        %v4026 = vpack.c.bf16 %v4008, %v4002
        %v4027 = vpack.c.bf16 %v4009, %v4003
        %v4028 = vpack.c.bf16 %v4010, %v4004
        %v4029 = vpack.c.bf16 %v4017, %v4011
        %v4030 = vpack.c.bf16 %v4018, %v4012
        %v4031 = vpack.c.bf16 %v4019, %v4013
        %v4032 = vpack.c.bf16 %v4020, %v4014
        %v4033 = vpack.c.bf16 %v4021, %v4015
        %v4034 = vpack.c.bf16 %v4022, %v4016
        %v4035 = vld [vmem:[#allocation9] sm:$0xff]
        %v4036 = vld [vmem:[#allocation9 + $0x8] sm:$0xff]
        %v4037 = vld [vmem:[#allocation9 + $0x10] sm:$0xff]
        %v4038 = vld [vmem:[#allocation9 + $0x18] sm:$0xff]
        %v4039 = vld [vmem:[#allocation9 + $0x20] sm:$0xff]
        %v4040 = vld [vmem:[#allocation9 + $0x28] sm:$0xff]
        %v4041 = vld [vmem:[#allocation9 + $0x30] sm:$0xff]
        %v4042 = vld [vmem:[#allocation9 + $0x38] sm:$0xff]
        %v4043 = vld [vmem:[#allocation9 + $0x40] sm:$0xff]
        %v4044 = vld [vmem:[#allocation9 + $0x48] sm:$0xff]
        %v4045 = vld [vmem:[#allocation9 + $0x50] sm:$0xff]
        %v4046 = vld [vmem:[#allocation9 + $0x58] sm:$0xff]
        %v4047 = vld [vmem:[#allocation9 + $0x60] sm:$0xff]
        %v4048 = vld [vmem:[#allocation9 + $0x68] sm:$0xff]
        %v4049 = vld [vmem:[#allocation9 + $0x70] sm:$0xff]
        %v4050 = vld [vmem:[#allocation9 + $0x78] sm:$0xff]
        %v4051 = vld [vmem:[#allocation9 + $0x80] sm:$0xff]
        %v4052 = vld [vmem:[#allocation9 + $0x88] sm:$0xff]
        %v4053 = vld [vmem:[#allocation9 + $0x90] sm:$0xff]
        %v4054 = vld [vmem:[#allocation9 + $0x98] sm:$0xff]
        %v4055 = vld [vmem:[#allocation9 + $0xa0] sm:$0xff]
        %v4056 = vld [vmem:[#allocation9 + $0xa8] sm:$0xff]
        %v4057 = vld [vmem:[#allocation9 + $0xb0] sm:$0xff]
        %v4058 = vld [vmem:[#allocation9 + $0xb8] sm:$0xff]
        %v4059 = vld [vmem:[#allocation9 + $0xc0] sm:$0xff]
        %v4060 = vld [vmem:[#allocation9 + $0xc8] sm:$0xff]
        %v4061 = vld [vmem:[#allocation9 + $0xd0] sm:$0xff]
        %v4062 = vld [vmem:[#allocation9 + $0xd8] sm:$0xff]
        %v4063 = vld [vmem:[#allocation9 + $0xe0] sm:$0xff]
        %v4064 = vld [vmem:[#allocation9 + $0xe8] sm:$0xff]
        %v4065 = vld [vmem:[#allocation9 + $0xf0] sm:$0xff]
        %v4066 = vld [vmem:[#allocation9 + $0xf8] sm:$0xff]
        %v4067 = vld [vmem:[#allocation9 + $0x100] sm:$0xff]
        %v4068 = vld [vmem:[#allocation9 + $0x108] sm:$0xff]
        %v4069 = vld [vmem:[#allocation9 + $0x110] sm:$0xff]
        %v4070 = vld [vmem:[#allocation9 + $0x118] sm:$0xff]
        %v4071 = vld [vmem:[#allocation9 + $0x120] sm:$0xff]
        %v4072 = vld [vmem:[#allocation9 + $0x128] sm:$0xff]
        %v4073 = vld [vmem:[#allocation9 + $0x130] sm:$0xff]
        %v4074 = vld [vmem:[#allocation9 + $0x138] sm:$0xff]
        %v4075 = vld [vmem:[#allocation9 + $0x140] sm:$0xff]
        %v4076 = vld [vmem:[#allocation9 + $0x148] sm:$0xff]
        %v4077 = vld [vmem:[#allocation9 + $0x150] sm:$0xff]
        %v4078 = vld [vmem:[#allocation9 + $0x158] sm:$0xff]
        %v4079 = vld [vmem:[#allocation9 + $0x160] sm:$0xff]
        %v4080 = vld [vmem:[#allocation9 + $0x168] sm:$0xff]
        %v4081 = vld [vmem:[#allocation9 + $0x170] sm:$0xff]
        %v4082 = vld [vmem:[#allocation9 + $0x178] sm:$0xff]
        %v4083 = vld [vmem:[#allocation9 + $0x180] sm:$0xff]
        %v4084 = vld [vmem:[#allocation9 + $0x188] sm:$0xff]
        %v4085 = vld [vmem:[#allocation9 + $0x190] sm:$0xff]
        %v4086 = vld [vmem:[#allocation9 + $0x198] sm:$0xff]
        %v4087 = vld [vmem:[#allocation9 + $0x1a0] sm:$0xff]
        %v4088 = vld [vmem:[#allocation9 + $0x1a8] sm:$0xff]
        %v4089 = vld [vmem:[#allocation9 + $0x1b0] sm:$0xff]
        %v4090 = vld [vmem:[#allocation9 + $0x1b8] sm:$0xff]
        %v4091 = vld [vmem:[#allocation9 + $0x1c0] sm:$0xff]
        %v4092 = vld [vmem:[#allocation9 + $0x1c8] sm:$0xff]
        %v4093 = vld [vmem:[#allocation9 + $0x1d0] sm:$0xff]
        %v4094 = vld [vmem:[#allocation9 + $0x1d8] sm:$0xff]
        %v4095 = vld [vmem:[#allocation9 + $0x1e0] sm:$0xff]
        %v4096 = vld [vmem:[#allocation9 + $0x1e8] sm:$0xff]
        %v4097 = vld [vmem:[#allocation9 + $0x1f0] sm:$0xff]
        %v4098 = vld [vmem:[#allocation9 + $0x1f8] sm:$0xff]
        %v4099 = vld [vmem:[#allocation9 + $0x200] sm:$0xff]
        %v4100 = vld [vmem:[#allocation9 + $0x208] sm:$0xff]
        %v4101 = vld [vmem:[#allocation9 + $0x210] sm:$0xff]
        %v4102 = vld [vmem:[#allocation9 + $0x218] sm:$0xff]
        %v4103 = vld [vmem:[#allocation9 + $0x220] sm:$0xff]
        %v4104 = vld [vmem:[#allocation9 + $0x228] sm:$0xff]
        %v4105 = vld [vmem:[#allocation9 + $0x230] sm:$0xff]
        %v4106 = vld [vmem:[#allocation9 + $0x238] sm:$0xff]
        %v4107 = vld [vmem:[#allocation9 + $0x240] sm:$0xff]
        %v4108 = vld [vmem:[#allocation9 + $0x248] sm:$0xff]
        %v4109 = vld [vmem:[#allocation9 + $0x250] sm:$0xff]
        %v4110 = vld [vmem:[#allocation9 + $0x258] sm:$0xff]
        %v4111 = vld [vmem:[#allocation9 + $0x260] sm:$0xff]
        %v4112 = vld [vmem:[#allocation9 + $0x268] sm:$0xff]
        %v4113 = vld [vmem:[#allocation9 + $0x270] sm:$0xff]
        %v4114 = vld [vmem:[#allocation9 + $0x278] sm:$0xff]
        %v4115 = vld [vmem:[#allocation9 + $0x280] sm:$0xff]
        %v4116 = vld [vmem:[#allocation9 + $0x288] sm:$0xff]
        %v4117 = vld [vmem:[#allocation9 + $0x290] sm:$0xff]
        %v4118 = vld [vmem:[#allocation9 + $0x298] sm:$0xff]
        %v4119 = vld [vmem:[#allocation9 + $0x2a0] sm:$0xff]
        %v4120 = vld [vmem:[#allocation9 + $0x2a8] sm:$0xff]
        %v4121 = vld [vmem:[#allocation9 + $0x2b0] sm:$0xff]
        %v4122 = vld [vmem:[#allocation9 + $0x2b8] sm:$0xff]
        %v4123 = vld [vmem:[#allocation9 + $0x2c0] sm:$0xff]
        %v4124 = vld [vmem:[#allocation9 + $0x2c8] sm:$0xff]
        %v4125 = vld [vmem:[#allocation9 + $0x2d0] sm:$0xff]
        %v4126 = vld [vmem:[#allocation9 + $0x2d8] sm:$0xff]
        %v4127 = vld [vmem:[#allocation9 + $0x2e0] sm:$0xff]
        %v4128 = vld [vmem:[#allocation9 + $0x2e8] sm:$0xff]
        %v4129 = vld [vmem:[#allocation9 + $0x2f0] sm:$0xff]
        %v4130 = vld [vmem:[#allocation9 + $0x2f8] sm:$0xff]
        %v4131 = vld [vmem:[#allocation9 + $0x300] sm:$0xff]
        %v4132 = vld [vmem:[#allocation9 + $0x308] sm:$0xff]
        %v4133 = vld [vmem:[#allocation9 + $0x310] sm:$0xff]
        %v4134 = vld [vmem:[#allocation9 + $0x318] sm:$0xff]
        %v4135 = vld [vmem:[#allocation9 + $0x320] sm:$0xff]
        %v4136 = vld [vmem:[#allocation9 + $0x328] sm:$0xff]
        %v4137 = vld [vmem:[#allocation9 + $0x330] sm:$0xff]
        %v4138 = vld [vmem:[#allocation9 + $0x338] sm:$0xff]
        %v4139 = vld [vmem:[#allocation9 + $0x340] sm:$0xff]
        %v4140 = vld [vmem:[#allocation9 + $0x348] sm:$0xff]
        %v4141 = vld [vmem:[#allocation9 + $0x350] sm:$0xff]
        %v4142 = vld [vmem:[#allocation9 + $0x358] sm:$0xff]
        %v4143 = vld [vmem:[#allocation9 + $0x360] sm:$0xff]
        %v4144 = vld [vmem:[#allocation9 + $0x368] sm:$0xff]
        %v4145 = vld [vmem:[#allocation9 + $0x370] sm:$0xff]
        %v4146 = vld [vmem:[#allocation9 + $0x378] sm:$0xff]
        %v4147 = vld [vmem:[#allocation9 + $0x380] sm:$0xff]
        %v4148 = vld [vmem:[#allocation9 + $0x388] sm:$0xff]
        %v4149 = vld [vmem:[#allocation9 + $0x390] sm:$0xff]
        %v4150 = vld [vmem:[#allocation9 + $0x398] sm:$0xff]
        %v4151 = vld [vmem:[#allocation9 + $0x3a0] sm:$0xff]
        %v4152 = vld [vmem:[#allocation9 + $0x3a8] sm:$0xff]
        %v4153 = vld [vmem:[#allocation9 + $0x3b0] sm:$0xff]
        %v4154 = vld [vmem:[#allocation9 + $0x3b8] sm:$0xff]
        %v4155 = vld [vmem:[#allocation9 + $0x3c0] sm:$0xff]
        %v4156 = vld [vmem:[#allocation9 + $0x3c8] sm:$0xff]
        %v4157 = vld [vmem:[#allocation9 + $0x3d0] sm:$0xff]
        %v4158 = vld [vmem:[#allocation9 + $0x3d8] sm:$0xff]
        %v4159 = vld [vmem:[#allocation9 + $0x3e0] sm:$0xff]
        %v4160 = vld [vmem:[#allocation9 + $0x3e8] sm:$0xff]
        %v4161 = vld [vmem:[#allocation9 + $0x3f0] sm:$0xff]
        %v4162 = vld [vmem:[#allocation9 + $0x3f8] sm:$0xff]
        %v4163 = vld [vmem:[#allocation9 + $0x400] sm:$0xff]
        %v4164 = vld [vmem:[#allocation9 + $0x408] sm:$0xff]
        %v4165 = vld [vmem:[#allocation9 + $0x410] sm:$0xff]
        %v4166 = vld [vmem:[#allocation9 + $0x418] sm:$0xff]
        %v4167 = vld [vmem:[#allocation9 + $0x420] sm:$0xff]
        %v4168 = vld [vmem:[#allocation9 + $0x428] sm:$0xff]
        %v4169 = vld [vmem:[#allocation9 + $0x430] sm:$0xff]
        %v4170 = vld [vmem:[#allocation9 + $0x438] sm:$0xff]
        %v4171 = vld [vmem:[#allocation9 + $0x440] sm:$0xff]
        %v4172 = vld [vmem:[#allocation9 + $0x448] sm:$0xff]
        %v4173 = vld [vmem:[#allocation9 + $0x450] sm:$0xff]
        %v4174 = vld [vmem:[#allocation9 + $0x458] sm:$0xff]
        %v4175 = vld [vmem:[#allocation9 + $0x460] sm:$0xff]
        %v4176 = vld [vmem:[#allocation9 + $0x468] sm:$0xff]
        %v4177 = vld [vmem:[#allocation9 + $0x470] sm:$0xff]
        %v4178 = vld [vmem:[#allocation9 + $0x478] sm:$0xff]
        %v4179 = vld [vmem:[#allocation9 + $0x480] sm:$0xff]
        %v4180 = vld [vmem:[#allocation9 + $0x488] sm:$0xff]
        %v4181 = vld [vmem:[#allocation9 + $0x490] sm:$0xff]
        %v4182 = vld [vmem:[#allocation9 + $0x498] sm:$0xff]
        %v4183 = vld [vmem:[#allocation9 + $0x4a0] sm:$0xff]
        %v4184 = vld [vmem:[#allocation9 + $0x4a8] sm:$0xff]
        %v4185 = vld [vmem:[#allocation9 + $0x4b0] sm:$0xff]
        %v4186 = vld [vmem:[#allocation9 + $0x4b8] sm:$0xff]
        %v4187 = vld [vmem:[#allocation9 + $0x4c0] sm:$0xff]
        %v4188 = vld [vmem:[#allocation9 + $0x4c8] sm:$0xff]
        %v4189 = vld [vmem:[#allocation9 + $0x4d0] sm:$0xff]
        %v4190 = vld [vmem:[#allocation9 + $0x4d8] sm:$0xff]
        %v4191 = vld [vmem:[#allocation9 + $0x4e0] sm:$0xff]
        %v4192 = vld [vmem:[#allocation9 + $0x4e8] sm:$0xff]
        %v4193 = vld [vmem:[#allocation9 + $0x4f0] sm:$0xff]
        %v4194 = vld [vmem:[#allocation9 + $0x4f8] sm:$0xff]
        %v4195 = vld [vmem:[#allocation9 + $0x500] sm:$0xff]
        %v4196 = vld [vmem:[#allocation9 + $0x508] sm:$0xff]
        %v4197 = vld [vmem:[#allocation9 + $0x510] sm:$0xff]
        %v4198 = vld [vmem:[#allocation9 + $0x518] sm:$0xff]
        %v4199 = vld [vmem:[#allocation9 + $0x520] sm:$0xff]
        %v4200 = vld [vmem:[#allocation9 + $0x528] sm:$0xff]
        %v4201 = vld [vmem:[#allocation9 + $0x530] sm:$0xff]
        %v4202 = vld [vmem:[#allocation9 + $0x538] sm:$0xff]
        %v4203 = vld [vmem:[#allocation9 + $0x540] sm:$0xff]
        %v4204 = vld [vmem:[#allocation9 + $0x548] sm:$0xff]
        %v4205 = vld [vmem:[#allocation9 + $0x550] sm:$0xff]
        %v4206 = vld [vmem:[#allocation9 + $0x558] sm:$0xff]
        %v4207 = vld [vmem:[#allocation9 + $0x560] sm:$0xff]
        %v4208 = vld [vmem:[#allocation9 + $0x568] sm:$0xff]
        %v4209 = vld [vmem:[#allocation9 + $0x570] sm:$0xff]
        %v4210 = vld [vmem:[#allocation9 + $0x578] sm:$0xff]
        %v4211 = vld [vmem:[#allocation9 + $0x580] sm:$0xff]
        %v4212 = vld [vmem:[#allocation9 + $0x588] sm:$0xff]
        %v4213 = vld [vmem:[#allocation9 + $0x590] sm:$0xff]
        %v4214 = vld [vmem:[#allocation9 + $0x598] sm:$0xff]
        %v4215 = vld [vmem:[#allocation9 + $0x5a0] sm:$0xff]
        %v4216 = vld [vmem:[#allocation9 + $0x5a8] sm:$0xff]
        %v4217 = vld [vmem:[#allocation9 + $0x5b0] sm:$0xff]
        %v4218 = vld [vmem:[#allocation9 + $0x5b8] sm:$0xff]
        %v4219 = vld [vmem:[#allocation9 + $0x5c0] sm:$0xff]
        %v4220 = vld [vmem:[#allocation9 + $0x5c8] sm:$0xff]
        %v4221 = vld [vmem:[#allocation9 + $0x5d0] sm:$0xff]
        %v4222 = vld [vmem:[#allocation9 + $0x5d8] sm:$0xff]
        %v4223 = vld [vmem:[#allocation9 + $0x5e0] sm:$0xff]
        %v4224 = vld [vmem:[#allocation9 + $0x5e8] sm:$0xff]
        %v4225 = vld [vmem:[#allocation9 + $0x5f0] sm:$0xff]
        %v4226 = vld [vmem:[#allocation9 + $0x5f8] sm:$0xff]
        %v4227 = vld [vmem:[%s15] sm:$0xf]
        %v4229 = vlaneseq
        %v4230 = vshrl.u32 %v4229, 7
        %v4231 = vsub.s32 0, %v4230
        %v4232 = vrot.slane %v4227, %v4231
        %v4233 = vlaneseq
        %v4234 = vshrl.u32 %v4233, 7
        %v4235 = vsub.s32 1, %v4234
        %v4236 = vrot.slane %v4227, %v4235
        %v4237 = vlaneseq
        %v4238 = vshrl.u32 %v4237, 7
        %v4239 = vsub.s32 2, %v4238
        %v4240 = vrot.slane %v4227, %v4239
        %v4241 = vlaneseq
        %v4242 = vshrl.u32 %v4241, 7
        %v4243 = vsub.s32 3, %v4242
        %v4244 = vrot.slane %v4227, %v4243
        %v4441 = vunpack.c.l.b16 %v4035
        %v4442 = vunpack.c.h.b16 %v4035
        %v4443 = vunpack.c.l.b16 %v4036
        %v4444 = vunpack.c.h.b16 %v4036
        %v4445 = vunpack.c.l.b16 %v4037
        %v4446 = vunpack.c.h.b16 %v4037
        %v4447 = vunpack.c.l.b16 %v4038
        %v4448 = vunpack.c.h.b16 %v4038
        %v4449 = vunpack.c.l.b16 %v4039
        %v4450 = vunpack.c.h.b16 %v4039
        %v4451 = vunpack.c.l.b16 %v4040
        %v4452 = vunpack.c.h.b16 %v4040
        %v4453 = vunpack.c.l.b16 %v4041
        %v4454 = vunpack.c.h.b16 %v4041
        %v4455 = vunpack.c.l.b16 %v4042
        %v4456 = vunpack.c.h.b16 %v4042
        %v4457 = vunpack.c.l.b16 %v4043
        %v4458 = vunpack.c.h.b16 %v4043
        %v4459 = vunpack.c.l.b16 %v4044
        %v4460 = vunpack.c.h.b16 %v4044
        %v4461 = vunpack.c.l.b16 %v4045
        %v4462 = vunpack.c.h.b16 %v4045
        %v4463 = vunpack.c.l.b16 %v4046
        %v4464 = vunpack.c.h.b16 %v4046
        %v4465 = vunpack.c.l.b16 %v4047
        %v4466 = vunpack.c.h.b16 %v4047
        %v4467 = vunpack.c.l.b16 %v4048
        %v4468 = vunpack.c.h.b16 %v4048
        %v4469 = vunpack.c.l.b16 %v4049
        %v4470 = vunpack.c.h.b16 %v4049
        %v4471 = vunpack.c.l.b16 %v4050
        %v4472 = vunpack.c.h.b16 %v4050
        %v4473 = vunpack.c.l.b16 %v4051
        %v4474 = vunpack.c.h.b16 %v4051
        %v4475 = vunpack.c.l.b16 %v4052
        %v4476 = vunpack.c.h.b16 %v4052
        %v4477 = vunpack.c.l.b16 %v4053
        %v4478 = vunpack.c.h.b16 %v4053
        %v4479 = vunpack.c.l.b16 %v4054
        %v4480 = vunpack.c.h.b16 %v4054
        %v4481 = vunpack.c.l.b16 %v4055
        %v4482 = vunpack.c.h.b16 %v4055
        %v4483 = vunpack.c.l.b16 %v4056
        %v4484 = vunpack.c.h.b16 %v4056
        %v4485 = vunpack.c.l.b16 %v4057
        %v4486 = vunpack.c.h.b16 %v4057
        %v4487 = vunpack.c.l.b16 %v4058
        %v4488 = vunpack.c.h.b16 %v4058
        %v4489 = vunpack.c.l.b16 %v4059
        %v4490 = vunpack.c.h.b16 %v4059
        %v4491 = vunpack.c.l.b16 %v4060
        %v4492 = vunpack.c.h.b16 %v4060
        %v4493 = vunpack.c.l.b16 %v4061
        %v4494 = vunpack.c.h.b16 %v4061
        %v4495 = vunpack.c.l.b16 %v4062
        %v4496 = vunpack.c.h.b16 %v4062
        %v4497 = vunpack.c.l.b16 %v4063
        %v4498 = vunpack.c.h.b16 %v4063
        %v4499 = vunpack.c.l.b16 %v4064
        %v4500 = vunpack.c.h.b16 %v4064
        %v4501 = vunpack.c.l.b16 %v4065
        %v4502 = vunpack.c.h.b16 %v4065
        %v4503 = vunpack.c.l.b16 %v4066
        %v4504 = vunpack.c.h.b16 %v4066
        %v4505 = vunpack.c.l.b16 %v4067
        %v4506 = vunpack.c.h.b16 %v4067
        %v4507 = vunpack.c.l.b16 %v4068
        %v4508 = vunpack.c.h.b16 %v4068
        %v4509 = vunpack.c.l.b16 %v4069
        %v4510 = vunpack.c.h.b16 %v4069
        %v4511 = vunpack.c.l.b16 %v4070
        %v4512 = vunpack.c.h.b16 %v4070
        %v4513 = vunpack.c.l.b16 %v4071
        %v4514 = vunpack.c.h.b16 %v4071
        %v4515 = vunpack.c.l.b16 %v4072
        %v4516 = vunpack.c.h.b16 %v4072
        %v4517 = vunpack.c.l.b16 %v4073
        %v4518 = vunpack.c.h.b16 %v4073
        %v4519 = vunpack.c.l.b16 %v4074
        %v4520 = vunpack.c.h.b16 %v4074
        %v4521 = vunpack.c.l.b16 %v4075
        %v4522 = vunpack.c.h.b16 %v4075
        %v4523 = vunpack.c.l.b16 %v4076
        %v4524 = vunpack.c.h.b16 %v4076
        %v4525 = vunpack.c.l.b16 %v4077
        %v4526 = vunpack.c.h.b16 %v4077
        %v4527 = vunpack.c.l.b16 %v4078
        %v4528 = vunpack.c.h.b16 %v4078
        %v4529 = vunpack.c.l.b16 %v4079
        %v4530 = vunpack.c.h.b16 %v4079
        %v4531 = vunpack.c.l.b16 %v4080
        %v4532 = vunpack.c.h.b16 %v4080
        %v4533 = vunpack.c.l.b16 %v4081
        %v4534 = vunpack.c.h.b16 %v4081
        %v4535 = vunpack.c.l.b16 %v4082
        %v4536 = vunpack.c.h.b16 %v4082
        %v4537 = vunpack.c.l.b16 %v4083
        %v4538 = vunpack.c.h.b16 %v4083
        %v4539 = vunpack.c.l.b16 %v4084
        %v4540 = vunpack.c.h.b16 %v4084
        %v4541 = vunpack.c.l.b16 %v4085
        %v4542 = vunpack.c.h.b16 %v4085
        %v4543 = vunpack.c.l.b16 %v4086
        %v4544 = vunpack.c.h.b16 %v4086
        %v4545 = vunpack.c.l.b16 %v4087
        %v4546 = vunpack.c.h.b16 %v4087
        %v4547 = vunpack.c.l.b16 %v4088
        %v4548 = vunpack.c.h.b16 %v4088
        %v4549 = vunpack.c.l.b16 %v4089
        %v4550 = vunpack.c.h.b16 %v4089
        %v4551 = vunpack.c.l.b16 %v4090
        %v4552 = vunpack.c.h.b16 %v4090
        %v4553 = vunpack.c.l.b16 %v4091
        %v4554 = vunpack.c.h.b16 %v4091
        %v4555 = vunpack.c.l.b16 %v4092
        %v4556 = vunpack.c.h.b16 %v4092
        %v4557 = vunpack.c.l.b16 %v4093
        %v4558 = vunpack.c.h.b16 %v4093
        %v4559 = vunpack.c.l.b16 %v4094
        %v4560 = vunpack.c.h.b16 %v4094
        %v4561 = vunpack.c.l.b16 %v4095
        %v4562 = vunpack.c.h.b16 %v4095
        %v4563 = vunpack.c.l.b16 %v4096
        %v4564 = vunpack.c.h.b16 %v4096
        %v4565 = vunpack.c.l.b16 %v4097
        %v4566 = vunpack.c.h.b16 %v4097
        %v4567 = vunpack.c.l.b16 %v4098
        %v4568 = vunpack.c.h.b16 %v4098
        %v4569 = vunpack.c.l.b16 %v4099
        %v4570 = vunpack.c.h.b16 %v4099
        %v4571 = vunpack.c.l.b16 %v4100
        %v4572 = vunpack.c.h.b16 %v4100
        %v4573 = vunpack.c.l.b16 %v4101
        %v4574 = vunpack.c.h.b16 %v4101
        %v4575 = vunpack.c.l.b16 %v4102
        %v4576 = vunpack.c.h.b16 %v4102
        %v4577 = vunpack.c.l.b16 %v4103
        %v4578 = vunpack.c.h.b16 %v4103
        %v4579 = vunpack.c.l.b16 %v4104
        %v4580 = vunpack.c.h.b16 %v4104
        %v4581 = vunpack.c.l.b16 %v4105
        %v4582 = vunpack.c.h.b16 %v4105
        %v4583 = vunpack.c.l.b16 %v4106
        %v4584 = vunpack.c.h.b16 %v4106
        %v4585 = vunpack.c.l.b16 %v4107
        %v4586 = vunpack.c.h.b16 %v4107
        %v4587 = vunpack.c.l.b16 %v4108
        %v4588 = vunpack.c.h.b16 %v4108
        %v4589 = vunpack.c.l.b16 %v4109
        %v4590 = vunpack.c.h.b16 %v4109
        %v4591 = vunpack.c.l.b16 %v4110
        %v4592 = vunpack.c.h.b16 %v4110
        %v4593 = vunpack.c.l.b16 %v4111
        %v4594 = vunpack.c.h.b16 %v4111
        %v4595 = vunpack.c.l.b16 %v4112
        %v4596 = vunpack.c.h.b16 %v4112
        %v4597 = vunpack.c.l.b16 %v4113
        %v4598 = vunpack.c.h.b16 %v4113
        %v4599 = vunpack.c.l.b16 %v4114
        %v4600 = vunpack.c.h.b16 %v4114
        %v4601 = vunpack.c.l.b16 %v4115
        %v4602 = vunpack.c.h.b16 %v4115
        %v4603 = vunpack.c.l.b16 %v4116
        %v4604 = vunpack.c.h.b16 %v4116
        %v4605 = vunpack.c.l.b16 %v4117
        %v4606 = vunpack.c.h.b16 %v4117
        %v4607 = vunpack.c.l.b16 %v4118
        %v4608 = vunpack.c.h.b16 %v4118
        %v4609 = vunpack.c.l.b16 %v4119
        %v4610 = vunpack.c.h.b16 %v4119
        %v4611 = vunpack.c.l.b16 %v4120
        %v4612 = vunpack.c.h.b16 %v4120
        %v4613 = vunpack.c.l.b16 %v4121
        %v4614 = vunpack.c.h.b16 %v4121
        %v4615 = vunpack.c.l.b16 %v4122
        %v4616 = vunpack.c.h.b16 %v4122
        %v4617 = vunpack.c.l.b16 %v4123
        %v4618 = vunpack.c.h.b16 %v4123
        %v4619 = vunpack.c.l.b16 %v4124
        %v4620 = vunpack.c.h.b16 %v4124
        %v4621 = vunpack.c.l.b16 %v4125
        %v4622 = vunpack.c.h.b16 %v4125
        %v4623 = vunpack.c.l.b16 %v4126
        %v4624 = vunpack.c.h.b16 %v4126
        %v4625 = vunpack.c.l.b16 %v4127
        %v4626 = vunpack.c.h.b16 %v4127
        %v4627 = vunpack.c.l.b16 %v4128
        %v4628 = vunpack.c.h.b16 %v4128
        %v4629 = vunpack.c.l.b16 %v4129
        %v4630 = vunpack.c.h.b16 %v4129
        %v4631 = vunpack.c.l.b16 %v4130
        %v4632 = vunpack.c.h.b16 %v4130
        %v4633 = vunpack.c.l.b16 %v4131
        %v4634 = vunpack.c.h.b16 %v4131
        %v4635 = vunpack.c.l.b16 %v4132
        %v4636 = vunpack.c.h.b16 %v4132
        %v4637 = vunpack.c.l.b16 %v4133
        %v4638 = vunpack.c.h.b16 %v4133
        %v4639 = vunpack.c.l.b16 %v4134
        %v4640 = vunpack.c.h.b16 %v4134
        %v4641 = vunpack.c.l.b16 %v4135
        %v4642 = vunpack.c.h.b16 %v4135
        %v4643 = vunpack.c.l.b16 %v4136
        %v4644 = vunpack.c.h.b16 %v4136
        %v4645 = vunpack.c.l.b16 %v4137
        %v4646 = vunpack.c.h.b16 %v4137
        %v4647 = vunpack.c.l.b16 %v4138
        %v4648 = vunpack.c.h.b16 %v4138
        %v4649 = vunpack.c.l.b16 %v4139
        %v4650 = vunpack.c.h.b16 %v4139
        %v4651 = vunpack.c.l.b16 %v4140
        %v4652 = vunpack.c.h.b16 %v4140
        %v4653 = vunpack.c.l.b16 %v4141
        %v4654 = vunpack.c.h.b16 %v4141
        %v4655 = vunpack.c.l.b16 %v4142
        %v4656 = vunpack.c.h.b16 %v4142
        %v4657 = vunpack.c.l.b16 %v4143
        %v4658 = vunpack.c.h.b16 %v4143
        %v4659 = vunpack.c.l.b16 %v4144
        %v4660 = vunpack.c.h.b16 %v4144
        %v4661 = vunpack.c.l.b16 %v4145
        %v4662 = vunpack.c.h.b16 %v4145
        %v4663 = vunpack.c.l.b16 %v4146
        %v4664 = vunpack.c.h.b16 %v4146
        %v4665 = vunpack.c.l.b16 %v4147
        %v4666 = vunpack.c.h.b16 %v4147
        %v4667 = vunpack.c.l.b16 %v4148
        %v4668 = vunpack.c.h.b16 %v4148
        %v4669 = vunpack.c.l.b16 %v4149
        %v4670 = vunpack.c.h.b16 %v4149
        %v4671 = vunpack.c.l.b16 %v4150
        %v4672 = vunpack.c.h.b16 %v4150
        %v4673 = vunpack.c.l.b16 %v4151
        %v4674 = vunpack.c.h.b16 %v4151
        %v4675 = vunpack.c.l.b16 %v4152
        %v4676 = vunpack.c.h.b16 %v4152
        %v4677 = vunpack.c.l.b16 %v4153
        %v4678 = vunpack.c.h.b16 %v4153
        %v4679 = vunpack.c.l.b16 %v4154
        %v4680 = vunpack.c.h.b16 %v4154
        %v4681 = vunpack.c.l.b16 %v4155
        %v4682 = vunpack.c.h.b16 %v4155
        %v4683 = vunpack.c.l.b16 %v4156
        %v4684 = vunpack.c.h.b16 %v4156
        %v4685 = vunpack.c.l.b16 %v4157
        %v4686 = vunpack.c.h.b16 %v4157
        %v4687 = vunpack.c.l.b16 %v4158
        %v4688 = vunpack.c.h.b16 %v4158
        %v4689 = vunpack.c.l.b16 %v4159
        %v4690 = vunpack.c.h.b16 %v4159
        %v4691 = vunpack.c.l.b16 %v4160
        %v4692 = vunpack.c.h.b16 %v4160
        %v4693 = vunpack.c.l.b16 %v4161
        %v4694 = vunpack.c.h.b16 %v4161
        %v4695 = vunpack.c.l.b16 %v4162
        %v4696 = vunpack.c.h.b16 %v4162
        %v4697 = vunpack.c.l.b16 %v4163
        %v4698 = vunpack.c.h.b16 %v4163
        %v4699 = vunpack.c.l.b16 %v4164
        %v4700 = vunpack.c.h.b16 %v4164
        %v4701 = vunpack.c.l.b16 %v4165
        %v4702 = vunpack.c.h.b16 %v4165
        %v4703 = vunpack.c.l.b16 %v4166
        %v4704 = vunpack.c.h.b16 %v4166
        %v4705 = vunpack.c.l.b16 %v4167
        %v4706 = vunpack.c.h.b16 %v4167
        %v4707 = vunpack.c.l.b16 %v4168
        %v4708 = vunpack.c.h.b16 %v4168
        %v4709 = vunpack.c.l.b16 %v4169
        %v4710 = vunpack.c.h.b16 %v4169
        %v4711 = vunpack.c.l.b16 %v4170
        %v4712 = vunpack.c.h.b16 %v4170
        %v4713 = vunpack.c.l.b16 %v4171
        %v4714 = vunpack.c.h.b16 %v4171
        %v4715 = vunpack.c.l.b16 %v4172
        %v4716 = vunpack.c.h.b16 %v4172
        %v4717 = vunpack.c.l.b16 %v4173
        %v4718 = vunpack.c.h.b16 %v4173
        %v4719 = vunpack.c.l.b16 %v4174
        %v4720 = vunpack.c.h.b16 %v4174
        %v4721 = vunpack.c.l.b16 %v4175
        %v4722 = vunpack.c.h.b16 %v4175
        %v4723 = vunpack.c.l.b16 %v4176
        %v4724 = vunpack.c.h.b16 %v4176
        %v4725 = vunpack.c.l.b16 %v4177
        %v4726 = vunpack.c.h.b16 %v4177
        %v4727 = vunpack.c.l.b16 %v4178
        %v4728 = vunpack.c.h.b16 %v4178
        %v4729 = vunpack.c.l.b16 %v4179
        %v4730 = vunpack.c.h.b16 %v4179
        %v4731 = vunpack.c.l.b16 %v4180
        %v4732 = vunpack.c.h.b16 %v4180
        %v4733 = vunpack.c.l.b16 %v4181
        %v4734 = vunpack.c.h.b16 %v4181
        %v4735 = vunpack.c.l.b16 %v4182
        %v4736 = vunpack.c.h.b16 %v4182
        %v4737 = vunpack.c.l.b16 %v4183
        %v4738 = vunpack.c.h.b16 %v4183
        %v4739 = vunpack.c.l.b16 %v4184
        %v4740 = vunpack.c.h.b16 %v4184
        %v4741 = vunpack.c.l.b16 %v4185
        %v4742 = vunpack.c.h.b16 %v4185
        %v4743 = vunpack.c.l.b16 %v4186
        %v4744 = vunpack.c.h.b16 %v4186
        %v4745 = vunpack.c.l.b16 %v4187
        %v4746 = vunpack.c.h.b16 %v4187
        %v4747 = vunpack.c.l.b16 %v4188
        %v4748 = vunpack.c.h.b16 %v4188
        %v4749 = vunpack.c.l.b16 %v4189
        %v4750 = vunpack.c.h.b16 %v4189
        %v4751 = vunpack.c.l.b16 %v4190
        %v4752 = vunpack.c.h.b16 %v4190
        %v4753 = vunpack.c.l.b16 %v4191
        %v4754 = vunpack.c.h.b16 %v4191
        %v4755 = vunpack.c.l.b16 %v4192
        %v4756 = vunpack.c.h.b16 %v4192
        %v4757 = vunpack.c.l.b16 %v4193
        %v4758 = vunpack.c.h.b16 %v4193
        %v4759 = vunpack.c.l.b16 %v4194
        %v4760 = vunpack.c.h.b16 %v4194
        %v4761 = vunpack.c.l.b16 %v4195
        %v4762 = vunpack.c.h.b16 %v4195
        %v4763 = vunpack.c.l.b16 %v4196
        %v4764 = vunpack.c.h.b16 %v4196
        %v4765 = vunpack.c.l.b16 %v4197
        %v4766 = vunpack.c.h.b16 %v4197
        %v4767 = vunpack.c.l.b16 %v4198
        %v4768 = vunpack.c.h.b16 %v4198
        %v4769 = vunpack.c.l.b16 %v4199
        %v4770 = vunpack.c.h.b16 %v4199
        %v4771 = vunpack.c.l.b16 %v4200
        %v4772 = vunpack.c.h.b16 %v4200
        %v4773 = vunpack.c.l.b16 %v4201
        %v4774 = vunpack.c.h.b16 %v4201
        %v4775 = vunpack.c.l.b16 %v4202
        %v4776 = vunpack.c.h.b16 %v4202
        %v4777 = vunpack.c.l.b16 %v4203
        %v4778 = vunpack.c.h.b16 %v4203
        %v4779 = vunpack.c.l.b16 %v4204
        %v4780 = vunpack.c.h.b16 %v4204
        %v4781 = vunpack.c.l.b16 %v4205
        %v4782 = vunpack.c.h.b16 %v4205
        %v4783 = vunpack.c.l.b16 %v4206
        %v4784 = vunpack.c.h.b16 %v4206
        %v4785 = vunpack.c.l.b16 %v4207
        %v4786 = vunpack.c.h.b16 %v4207
        %v4787 = vunpack.c.l.b16 %v4208
        %v4788 = vunpack.c.h.b16 %v4208
        %v4789 = vunpack.c.l.b16 %v4209
        %v4790 = vunpack.c.h.b16 %v4209
        %v4791 = vunpack.c.l.b16 %v4210
        %v4792 = vunpack.c.h.b16 %v4210
        %v4793 = vunpack.c.l.b16 %v4211
        %v4794 = vunpack.c.h.b16 %v4211
        %v4795 = vunpack.c.l.b16 %v4212
        %v4796 = vunpack.c.h.b16 %v4212
        %v4797 = vunpack.c.l.b16 %v4213
        %v4798 = vunpack.c.h.b16 %v4213
        %v4799 = vunpack.c.l.b16 %v4214
        %v4800 = vunpack.c.h.b16 %v4214
        %v4801 = vunpack.c.l.b16 %v4215
        %v4802 = vunpack.c.h.b16 %v4215
        %v4803 = vunpack.c.l.b16 %v4216
        %v4804 = vunpack.c.h.b16 %v4216
        %v4805 = vunpack.c.l.b16 %v4217
        %v4806 = vunpack.c.h.b16 %v4217
        %v4807 = vunpack.c.l.b16 %v4218
        %v4808 = vunpack.c.h.b16 %v4218
        %v4809 = vunpack.c.l.b16 %v4219
        %v4810 = vunpack.c.h.b16 %v4219
        %v4811 = vunpack.c.l.b16 %v4220
        %v4812 = vunpack.c.h.b16 %v4220
        %v4813 = vunpack.c.l.b16 %v4221
        %v4814 = vunpack.c.h.b16 %v4221
        %v4815 = vunpack.c.l.b16 %v4222
        %v4816 = vunpack.c.h.b16 %v4222
        %v4817 = vunpack.c.l.b16 %v4223
        %v4818 = vunpack.c.h.b16 %v4223
        %v4819 = vunpack.c.l.b16 %v4224
        %v4820 = vunpack.c.h.b16 %v4224
        %v4821 = vunpack.c.l.b16 %v4225
        %v4822 = vunpack.c.h.b16 %v4225
        %v4823 = vunpack.c.l.b16 %v4226
        %v4824 = vunpack.c.h.b16 %v4226
        %v4825 = vpack.c.b16 %v4445, %v4441
        %v4826 = vpack.c.b16 %v4446, %v4442
        %v4827 = vpack.c.b16 %v4447, %v4443
        %v4828 = vpack.c.b16 %v4448, %v4444
        %v4829 = vpack.c.b16 %v4453, %v4449
        %v4830 = vpack.c.b16 %v4454, %v4450
        %v4831 = vpack.c.b16 %v4455, %v4451
        %v4832 = vpack.c.b16 %v4456, %v4452
        %v4833 = vpack.c.b16 %v4461, %v4457
        %v4834 = vpack.c.b16 %v4462, %v4458
        %v4835 = vpack.c.b16 %v4463, %v4459
        %v4836 = vpack.c.b16 %v4464, %v4460
        %v4837 = vpack.c.b16 %v4469, %v4465
        %v4838 = vpack.c.b16 %v4470, %v4466
        %v4839 = vpack.c.b16 %v4471, %v4467
        %v4840 = vpack.c.b16 %v4472, %v4468
        %v4841 = vpack.c.b16 %v4477, %v4473
        %v4842 = vpack.c.b16 %v4478, %v4474
        %v4843 = vpack.c.b16 %v4479, %v4475
        %v4844 = vpack.c.b16 %v4480, %v4476
        %v4845 = vpack.c.b16 %v4485, %v4481
        %v4846 = vpack.c.b16 %v4486, %v4482
        %v4847 = vpack.c.b16 %v4487, %v4483
        %v4848 = vpack.c.b16 %v4488, %v4484
        %v4849 = vpack.c.b16 %v4493, %v4489
        %v4850 = vpack.c.b16 %v4494, %v4490
        %v4851 = vpack.c.b16 %v4495, %v4491
        %v4852 = vpack.c.b16 %v4496, %v4492
        %v4853 = vpack.c.b16 %v4501, %v4497
        %v4854 = vpack.c.b16 %v4502, %v4498
        %v4855 = vpack.c.b16 %v4503, %v4499
        %v4856 = vpack.c.b16 %v4504, %v4500
        %v4857 = vpack.c.b16 %v4509, %v4505
        %v4858 = vpack.c.b16 %v4510, %v4506
        %v4859 = vpack.c.b16 %v4511, %v4507
        %v4860 = vpack.c.b16 %v4512, %v4508
        %v4861 = vpack.c.b16 %v4517, %v4513
        %v4862 = vpack.c.b16 %v4518, %v4514
        %v4863 = vpack.c.b16 %v4519, %v4515
        %v4864 = vpack.c.b16 %v4520, %v4516
        %v4865 = vpack.c.b16 %v4525, %v4521
        %v4866 = vpack.c.b16 %v4526, %v4522
        %v4867 = vpack.c.b16 %v4527, %v4523
        %v4868 = vpack.c.b16 %v4528, %v4524
        %v4869 = vpack.c.b16 %v4533, %v4529
        %v4870 = vpack.c.b16 %v4534, %v4530
        %v4871 = vpack.c.b16 %v4535, %v4531
        %v4872 = vpack.c.b16 %v4536, %v4532
        %v4873 = vpack.c.b16 %v4541, %v4537
        %v4874 = vpack.c.b16 %v4542, %v4538
        %v4875 = vpack.c.b16 %v4543, %v4539
        %v4876 = vpack.c.b16 %v4544, %v4540
        %v4877 = vpack.c.b16 %v4549, %v4545
        %v4878 = vpack.c.b16 %v4550, %v4546
        %v4879 = vpack.c.b16 %v4551, %v4547
        %v4880 = vpack.c.b16 %v4552, %v4548
        %v4881 = vpack.c.b16 %v4557, %v4553
        %v4882 = vpack.c.b16 %v4558, %v4554
        %v4883 = vpack.c.b16 %v4559, %v4555
        %v4884 = vpack.c.b16 %v4560, %v4556
        %v4885 = vpack.c.b16 %v4565, %v4561
        %v4886 = vpack.c.b16 %v4566, %v4562
        %v4887 = vpack.c.b16 %v4567, %v4563
        %v4888 = vpack.c.b16 %v4568, %v4564
        %v4889 = vpack.c.b16 %v4573, %v4569
        %v4890 = vpack.c.b16 %v4574, %v4570
        %v4891 = vpack.c.b16 %v4575, %v4571
        %v4892 = vpack.c.b16 %v4576, %v4572
        %v4893 = vpack.c.b16 %v4581, %v4577
        %v4894 = vpack.c.b16 %v4582, %v4578
        %v4895 = vpack.c.b16 %v4583, %v4579
        %v4896 = vpack.c.b16 %v4584, %v4580
        %v4897 = vpack.c.b16 %v4589, %v4585
        %v4898 = vpack.c.b16 %v4590, %v4586
        %v4899 = vpack.c.b16 %v4591, %v4587
        %v4900 = vpack.c.b16 %v4592, %v4588
        %v4901 = vpack.c.b16 %v4597, %v4593
        %v4902 = vpack.c.b16 %v4598, %v4594
        %v4903 = vpack.c.b16 %v4599, %v4595
        %v4904 = vpack.c.b16 %v4600, %v4596
        %v4905 = vpack.c.b16 %v4605, %v4601
        %v4906 = vpack.c.b16 %v4606, %v4602
        %v4907 = vpack.c.b16 %v4607, %v4603
        %v4908 = vpack.c.b16 %v4608, %v4604
        %v4909 = vpack.c.b16 %v4613, %v4609
        %v4910 = vpack.c.b16 %v4614, %v4610
        %v4911 = vpack.c.b16 %v4615, %v4611
        %v4912 = vpack.c.b16 %v4616, %v4612
        %v4913 = vpack.c.b16 %v4621, %v4617
        %v4914 = vpack.c.b16 %v4622, %v4618
        %v4915 = vpack.c.b16 %v4623, %v4619
        %v4916 = vpack.c.b16 %v4624, %v4620
        %v4917 = vpack.c.b16 %v4629, %v4625
        %v4918 = vpack.c.b16 %v4630, %v4626
        %v4919 = vpack.c.b16 %v4631, %v4627
        %v4920 = vpack.c.b16 %v4632, %v4628
        %v4921 = vpack.c.b16 %v4637, %v4633
        %v4922 = vpack.c.b16 %v4638, %v4634
        %v4923 = vpack.c.b16 %v4639, %v4635
        %v4924 = vpack.c.b16 %v4640, %v4636
        %v4925 = vpack.c.b16 %v4645, %v4641
        %v4926 = vpack.c.b16 %v4646, %v4642
        %v4927 = vpack.c.b16 %v4647, %v4643
        %v4928 = vpack.c.b16 %v4648, %v4644
        %v4929 = vpack.c.b16 %v4653, %v4649
        %v4930 = vpack.c.b16 %v4654, %v4650
        %v4931 = vpack.c.b16 %v4655, %v4651
        %v4932 = vpack.c.b16 %v4656, %v4652
        %v4933 = vpack.c.b16 %v4661, %v4657
        %v4934 = vpack.c.b16 %v4662, %v4658
        %v4935 = vpack.c.b16 %v4663, %v4659
        %v4936 = vpack.c.b16 %v4664, %v4660
        %v4937 = vpack.c.b16 %v4669, %v4665
        %v4938 = vpack.c.b16 %v4670, %v4666
        %v4939 = vpack.c.b16 %v4671, %v4667
        %v4940 = vpack.c.b16 %v4672, %v4668
        %v4941 = vpack.c.b16 %v4677, %v4673
        %v4942 = vpack.c.b16 %v4678, %v4674
        %v4943 = vpack.c.b16 %v4679, %v4675
        %v4944 = vpack.c.b16 %v4680, %v4676
        %v4945 = vpack.c.b16 %v4685, %v4681
        %v4946 = vpack.c.b16 %v4686, %v4682
        %v4947 = vpack.c.b16 %v4687, %v4683
        %v4948 = vpack.c.b16 %v4688, %v4684
        %v4949 = vpack.c.b16 %v4693, %v4689
        %v4950 = vpack.c.b16 %v4694, %v4690
        %v4951 = vpack.c.b16 %v4695, %v4691
        %v4952 = vpack.c.b16 %v4696, %v4692
        %v4953 = vpack.c.b16 %v4701, %v4697
        %v4954 = vpack.c.b16 %v4702, %v4698
        %v4955 = vpack.c.b16 %v4703, %v4699
        %v4956 = vpack.c.b16 %v4704, %v4700
        %v4957 = vpack.c.b16 %v4709, %v4705
        %v4958 = vpack.c.b16 %v4710, %v4706
        %v4959 = vpack.c.b16 %v4711, %v4707
        %v4960 = vpack.c.b16 %v4712, %v4708
        %v4961 = vpack.c.b16 %v4717, %v4713
        %v4962 = vpack.c.b16 %v4718, %v4714
        %v4963 = vpack.c.b16 %v4719, %v4715
        %v4964 = vpack.c.b16 %v4720, %v4716
        %v4965 = vpack.c.b16 %v4725, %v4721
        %v4966 = vpack.c.b16 %v4726, %v4722
        %v4967 = vpack.c.b16 %v4727, %v4723
        %v4968 = vpack.c.b16 %v4728, %v4724
        %v4969 = vpack.c.b16 %v4733, %v4729
        %v4970 = vpack.c.b16 %v4734, %v4730
        %v4971 = vpack.c.b16 %v4735, %v4731
        %v4972 = vpack.c.b16 %v4736, %v4732
        %v4973 = vpack.c.b16 %v4741, %v4737
        %v4974 = vpack.c.b16 %v4742, %v4738
        %v4975 = vpack.c.b16 %v4743, %v4739
        %v4976 = vpack.c.b16 %v4744, %v4740
        %v4977 = vpack.c.b16 %v4749, %v4745
        %v4978 = vpack.c.b16 %v4750, %v4746
        %v4979 = vpack.c.b16 %v4751, %v4747
        %v4980 = vpack.c.b16 %v4752, %v4748
        %v4981 = vpack.c.b16 %v4757, %v4753
        %v4982 = vpack.c.b16 %v4758, %v4754
        %v4983 = vpack.c.b16 %v4759, %v4755
        %v4984 = vpack.c.b16 %v4760, %v4756
        %v4985 = vpack.c.b16 %v4765, %v4761
        %v4986 = vpack.c.b16 %v4766, %v4762
        %v4987 = vpack.c.b16 %v4767, %v4763
        %v4988 = vpack.c.b16 %v4768, %v4764
        %v4989 = vpack.c.b16 %v4773, %v4769
        %v4990 = vpack.c.b16 %v4774, %v4770
        %v4991 = vpack.c.b16 %v4775, %v4771
        %v4992 = vpack.c.b16 %v4776, %v4772
        %v4993 = vpack.c.b16 %v4781, %v4777
        %v4994 = vpack.c.b16 %v4782, %v4778
        %v4995 = vpack.c.b16 %v4783, %v4779
        %v4996 = vpack.c.b16 %v4784, %v4780
        %v4997 = vpack.c.b16 %v4789, %v4785
        %v4998 = vpack.c.b16 %v4790, %v4786
        %v4999 = vpack.c.b16 %v4791, %v4787
        %v5000 = vpack.c.b16 %v4792, %v4788
        %v5001 = vpack.c.b16 %v4797, %v4793
        %v5002 = vpack.c.b16 %v4798, %v4794
        %v5003 = vpack.c.b16 %v4799, %v4795
        %v5004 = vpack.c.b16 %v4800, %v4796
        %v5005 = vpack.c.b16 %v4805, %v4801
        %v5006 = vpack.c.b16 %v4806, %v4802
        %v5007 = vpack.c.b16 %v4807, %v4803
        %v5008 = vpack.c.b16 %v4808, %v4804
        %v5009 = vpack.c.b16 %v4813, %v4809
        %v5010 = vpack.c.b16 %v4814, %v4810
        %v5011 = vpack.c.b16 %v4815, %v4811
        %v5012 = vpack.c.b16 %v4816, %v4812
        %v5013 = vpack.c.b16 %v4821, %v4817
        %v5014 = vpack.c.b16 %v4822, %v4818
        %v5015 = vpack.c.b16 %v4823, %v4819
        %v5016 = vpack.c.b16 %v4824, %v4820
        %5209 = vmatprep.subr.bf16.mxu0 %v4854
        %5210 = vmatpush1.bf16.msra.mxu0 %v4853
        %5211 = vmatprep.subr.bf16.mxu0 %v4850
        %5212 = vmatpush1.bf16.msra.mxu0 %v4849
        %5213 = vmatprep.subr.bf16.mxu0 %v4846
        %5214 = vmatpush1.bf16.msra.mxu0 %v4845
        %5215 = vmatprep.subr.bf16.mxu0 %v4842
        %5216 = vmatpush1.bf16.msra.mxu0 %v4841
        %5217 = vmatprep.subr.bf16.mxu0 %v4838
        %5218 = vmatpush1.bf16.msra.mxu0 %v4837
        %5219 = vmatprep.subr.bf16.mxu0 %v4834
        %5220 = vmatpush1.bf16.msra.mxu0 %v4833
        %5221 = vmatprep.subr.bf16.mxu0 %v4830
        %5222 = vmatpush1.bf16.msra.mxu0 %v4829
        %5223 = vmatprep.subr.bf16.mxu0 %v4826
        %5224 = vmatpush1.bf16.msra.mxu0 %v4825
        %5225 = vmatprep.subr.bf16.mxu0 %v4886
        %5226 = vmatpush2.bf16.msra.mxu0 %v4885
        %5227 = vmatprep.subr.bf16.mxu0 %v4882
        %5228 = vmatpush2.bf16.msra.mxu0 %v4881
        %5229 = vmatprep.subr.bf16.mxu0 %v4878
        %5230 = vmatpush2.bf16.msra.mxu0 %v4877
        %5231 = vmatprep.subr.bf16.mxu0 %v4874
        %5232 = vmatpush2.bf16.msra.mxu0 %v4873
        %5233 = vmatprep.subr.bf16.mxu0 %v4870
        %5234 = vmatpush2.bf16.msra.mxu0 %v4869
        %5235 = vmatprep.subr.bf16.mxu0 %v4866
        %5236 = vmatpush2.bf16.msra.mxu0 %v4865
        %5237 = vmatprep.subr.bf16.mxu0 %v4862
        %5238 = vmatpush2.bf16.msra.mxu0 %v4861
        %5239 = vmatprep.subr.bf16.mxu0 %v4858
        %5240 = vmatpush2.bf16.msra.mxu0 %v4857
        %5241 = vmatprep.mubr.bf16.mxu0 %v4024
        %5242 = vmatmul.mubr.bf16.gmra.mxu0 %v4023
        %v5243 = vpop.f32.mrf.mxu0
        %v5244 = vadd.f32 %v4232, %v5243
        %v5245 = vpop.f32.mrf.mxu0
        %v5246 = vadd.f32 %v4236, %v5245
        %v5247 = vpop.f32.mrf.mxu0
        %v5248 = vadd.f32 %v4232, %v5247
        %v5249 = vpop.f32.mrf.mxu0
        %v5250 = vadd.f32 %v4236, %v5249
        %5251 = vmatprep.mubr.bf16.mxu0 %v4030
        %5252 = vmatmul.mubr.bf16.gmra.mxu0 %v4029
        %v5253 = vpop.f32.mrf.mxu0
        %v5254 = vadd.f32 %v4232, %v5253
        %v5255 = vpop.f32.mrf.mxu0
        %v5256 = vadd.f32 %v4236, %v5255
        %v5257 = vpop.f32.mrf.mxu0
        %v5258 = vadd.f32 %v4232, %v5257
        %v5259 = vpop.f32.mrf.mxu0
        %v5260 = vadd.f32 %v4236, %v5259
        %5261 = vdwg.mxu0
        %5262 = vmatprep.subr.bf16.mxu0 %v4918
        %5263 = vmatpush1.bf16.msra.mxu0 %v4917
        %5264 = vmatprep.subr.bf16.mxu0 %v4914
        %5265 = vmatpush1.bf16.msra.mxu0 %v4913
        %5266 = vmatprep.subr.bf16.mxu0 %v4910
        %5267 = vmatpush1.bf16.msra.mxu0 %v4909
        %5268 = vmatprep.subr.bf16.mxu0 %v4906
        %5269 = vmatpush1.bf16.msra.mxu0 %v4905
        %5270 = vmatprep.subr.bf16.mxu0 %v4902
        %5271 = vmatpush1.bf16.msra.mxu0 %v4901
        %5272 = vmatprep.subr.bf16.mxu0 %v4898
        %5273 = vmatpush1.bf16.msra.mxu0 %v4897
        %5274 = vmatprep.subr.bf16.mxu0 %v4894
        %5275 = vmatpush1.bf16.msra.mxu0 %v4893
        %5276 = vmatprep.subr.bf16.mxu0 %v4890
        %5277 = vmatpush1.bf16.msra.mxu0 %v4889
        %5278 = vmatprep.subr.bf16.mxu0 %v4950
        %5279 = vmatpush2.bf16.msra.mxu0 %v4949
        %5280 = vmatprep.subr.bf16.mxu0 %v4946
        %5281 = vmatpush2.bf16.msra.mxu0 %v4945
        %5282 = vmatprep.subr.bf16.mxu0 %v4942
        %5283 = vmatpush2.bf16.msra.mxu0 %v4941
        %5284 = vmatprep.subr.bf16.mxu0 %v4938
        %5285 = vmatpush2.bf16.msra.mxu0 %v4937
        %5286 = vmatprep.subr.bf16.mxu0 %v4934
        %5287 = vmatpush2.bf16.msra.mxu0 %v4933
        %5288 = vmatprep.subr.bf16.mxu0 %v4930
        %5289 = vmatpush2.bf16.msra.mxu0 %v4929
        %5290 = vmatprep.subr.bf16.mxu0 %v4926
        %5291 = vmatpush2.bf16.msra.mxu0 %v4925
        %5292 = vmatprep.subr.bf16.mxu0 %v4922
        %5293 = vmatpush2.bf16.msra.mxu0 %v4921
        %5294 = vmatprep.mubr.bf16.mxu0 %v4026
        %5295 = vmatmul.mubr.bf16.gmra.mxu0 %v4025
        %v5296 = vpop.f32.mrf.mxu0
        %v5297 = vadd.f32 %v5244, %v5296
        %v5298 = vpop.f32.mrf.mxu0
        %v5299 = vadd.f32 %v5246, %v5298
        %v5300 = vpop.f32.mrf.mxu0
        %v5301 = vadd.f32 %v5248, %v5300
        %v5302 = vpop.f32.mrf.mxu0
        %v5303 = vadd.f32 %v5250, %v5302
        %5304 = vmatprep.mubr.bf16.mxu0 %v4032
        %5305 = vmatmul.mubr.bf16.gmra.mxu0 %v4031
        %v5306 = vpop.f32.mrf.mxu0
        %v5307 = vadd.f32 %v5254, %v5306
        %v5308 = vpop.f32.mrf.mxu0
        %v5309 = vadd.f32 %v5256, %v5308
        %v5310 = vpop.f32.mrf.mxu0
        %v5311 = vadd.f32 %v5258, %v5310
        %v5312 = vpop.f32.mrf.mxu0
        %v5313 = vadd.f32 %v5260, %v5312
        %5314 = vdwg.mxu0
        %5315 = vmatprep.subr.bf16.mxu0 %v4982
        %5316 = vmatpush1.bf16.msra.mxu0 %v4981
        %5317 = vmatprep.subr.bf16.mxu0 %v4978
        %5318 = vmatpush1.bf16.msra.mxu0 %v4977
        %5319 = vmatprep.subr.bf16.mxu0 %v4974
        %5320 = vmatpush1.bf16.msra.mxu0 %v4973
        %5321 = vmatprep.subr.bf16.mxu0 %v4970
        %5322 = vmatpush1.bf16.msra.mxu0 %v4969
        %5323 = vmatprep.subr.bf16.mxu0 %v4966
        %5324 = vmatpush1.bf16.msra.mxu0 %v4965
        %5325 = vmatprep.subr.bf16.mxu0 %v4962
        %5326 = vmatpush1.bf16.msra.mxu0 %v4961
        %5327 = vmatprep.subr.bf16.mxu0 %v4958
        %5328 = vmatpush1.bf16.msra.mxu0 %v4957
        %5329 = vmatprep.subr.bf16.mxu0 %v4954
        %5330 = vmatpush1.bf16.msra.mxu0 %v4953
        %5331 = vmatprep.subr.bf16.mxu0 %v5014
        %5332 = vmatpush2.bf16.msra.mxu0 %v5013
        %5333 = vmatprep.subr.bf16.mxu0 %v5010
        %5334 = vmatpush2.bf16.msra.mxu0 %v5009
        %5335 = vmatprep.subr.bf16.mxu0 %v5006
        %5336 = vmatpush2.bf16.msra.mxu0 %v5005
        %5337 = vmatprep.subr.bf16.mxu0 %v5002
        %5338 = vmatpush2.bf16.msra.mxu0 %v5001
        %5339 = vmatprep.subr.bf16.mxu0 %v4998
        %5340 = vmatpush2.bf16.msra.mxu0 %v4997
        %5341 = vmatprep.subr.bf16.mxu0 %v4994
        %5342 = vmatpush2.bf16.msra.mxu0 %v4993
        %5343 = vmatprep.subr.bf16.mxu0 %v4990
        %5344 = vmatpush2.bf16.msra.mxu0 %v4989
        %5345 = vmatprep.subr.bf16.mxu0 %v4986
        %5346 = vmatpush2.bf16.msra.mxu0 %v4985
        %5347 = vmatprep.mubr.bf16.mxu0 %v4028
        %5348 = vmatmul.mubr.bf16.gmra.mxu0 %v4027
        %v5349 = vpop.f32.mrf.mxu0
        %v5350 = vadd.f32 %v5297, %v5349
        %v5351 = vpop.f32.mrf.mxu0
        %v5352 = vadd.f32 %v5299, %v5351
        %v5353 = vpop.f32.mrf.mxu0
        %v5354 = vadd.f32 %v5301, %v5353
        %v5355 = vpop.f32.mrf.mxu0
        %v5356 = vadd.f32 %v5303, %v5355
        %5357 = vmatprep.mubr.bf16.mxu0 %v4034
        %5358 = vmatmul.mubr.bf16.gmra.mxu0 %v4033
        %v5359 = vpop.f32.mrf.mxu0
        %v5360 = vadd.f32 %v5307, %v5359
        %v5361 = vpop.f32.mrf.mxu0
        %v5362 = vadd.f32 %v5309, %v5361
        %v5363 = vpop.f32.mrf.mxu0
        %v5364 = vadd.f32 %v5311, %v5363
        %v5365 = vpop.f32.mrf.mxu0
        %v5366 = vadd.f32 %v5313, %v5365
        %5367 = vdwg.mxu0
        %5368 = vmatprep.subr.bf16.mxu0 %v4856
        %5369 = vmatpush1.bf16.msra.mxu0 %v4855
        %5370 = vmatprep.subr.bf16.mxu0 %v4852
        %5371 = vmatpush1.bf16.msra.mxu0 %v4851
        %5372 = vmatprep.subr.bf16.mxu0 %v4848
        %5373 = vmatpush1.bf16.msra.mxu0 %v4847
        %5374 = vmatprep.subr.bf16.mxu0 %v4844
        %5375 = vmatpush1.bf16.msra.mxu0 %v4843
        %5376 = vmatprep.subr.bf16.mxu0 %v4840
        %5377 = vmatpush1.bf16.msra.mxu0 %v4839
        %5378 = vmatprep.subr.bf16.mxu0 %v4836
        %5379 = vmatpush1.bf16.msra.mxu0 %v4835
        %5380 = vmatprep.subr.bf16.mxu0 %v4832
        %5381 = vmatpush1.bf16.msra.mxu0 %v4831
        %5382 = vmatprep.subr.bf16.mxu0 %v4828
        %5383 = vmatpush1.bf16.msra.mxu0 %v4827
        %5384 = vmatprep.subr.bf16.mxu0 %v4888
        %5385 = vmatpush2.bf16.msra.mxu0 %v4887
        %5386 = vmatprep.subr.bf16.mxu0 %v4884
        %5387 = vmatpush2.bf16.msra.mxu0 %v4883
        %5388 = vmatprep.subr.bf16.mxu0 %v4880
        %5389 = vmatpush2.bf16.msra.mxu0 %v4879
        %5390 = vmatprep.subr.bf16.mxu0 %v4876
        %5391 = vmatpush2.bf16.msra.mxu0 %v4875
        %5392 = vmatprep.subr.bf16.mxu0 %v4872
        %5393 = vmatpush2.bf16.msra.mxu0 %v4871
        %5394 = vmatprep.subr.bf16.mxu0 %v4868
        %5395 = vmatpush2.bf16.msra.mxu0 %v4867
        %5396 = vmatprep.subr.bf16.mxu0 %v4864
        %5397 = vmatpush2.bf16.msra.mxu0 %v4863
        %5398 = vmatprep.subr.bf16.mxu0 %v4860
        %5399 = vmatpush2.bf16.msra.mxu0 %v4859
        %5400 = vmatprep.mubr.bf16.mxu0 %v4024
        %5401 = vmatmul.mubr.bf16.gmra.mxu0 %v4023
        %v5402 = vpop.f32.mrf.mxu0
        %v5403 = vadd.f32 %v4240, %v5402
        %v5404 = vpop.f32.mrf.mxu0
        %v5405 = vadd.f32 %v4244, %v5404
        %v5406 = vpop.f32.mrf.mxu0
        %v5407 = vadd.f32 %v4240, %v5406
        %v5408 = vpop.f32.mrf.mxu0
        %v5409 = vadd.f32 %v4244, %v5408
        %5410 = vmatprep.mubr.bf16.mxu0 %v4030
        %5411 = vmatmul.mubr.bf16.gmra.mxu0 %v4029
        %v5412 = vpop.f32.mrf.mxu0
        %v5413 = vadd.f32 %v4240, %v5412
        %v5414 = vpop.f32.mrf.mxu0
        %v5415 = vadd.f32 %v4244, %v5414
        %v5416 = vpop.f32.mrf.mxu0
        %v5417 = vadd.f32 %v4240, %v5416
        %v5418 = vpop.f32.mrf.mxu0
        %v5419 = vadd.f32 %v4244, %v5418
        %5420 = vdwg.mxu0
        %5421 = vmatprep.subr.bf16.mxu0 %v4920
        %5422 = vmatpush1.bf16.msra.mxu0 %v4919
        %5423 = vmatprep.subr.bf16.mxu0 %v4916
        %5424 = vmatpush1.bf16.msra.mxu0 %v4915
        %5425 = vmatprep.subr.bf16.mxu0 %v4912
        %5426 = vmatpush1.bf16.msra.mxu0 %v4911
        %5427 = vmatprep.subr.bf16.mxu0 %v4908
        %5428 = vmatpush1.bf16.msra.mxu0 %v4907
        %5429 = vmatprep.subr.bf16.mxu0 %v4904
        %5430 = vmatpush1.bf16.msra.mxu0 %v4903
        %5431 = vmatprep.subr.bf16.mxu0 %v4900
        %5432 = vmatpush1.bf16.msra.mxu0 %v4899
        %5433 = vmatprep.subr.bf16.mxu0 %v4896
        %5434 = vmatpush1.bf16.msra.mxu0 %v4895
        %5435 = vmatprep.subr.bf16.mxu0 %v4892
        %5436 = vmatpush1.bf16.msra.mxu0 %v4891
        %5437 = vmatprep.subr.bf16.mxu0 %v4952
        %5438 = vmatpush2.bf16.msra.mxu0 %v4951
        %5439 = vmatprep.subr.bf16.mxu0 %v4948
        %5440 = vmatpush2.bf16.msra.mxu0 %v4947
        %5441 = vmatprep.subr.bf16.mxu0 %v4944
        %5442 = vmatpush2.bf16.msra.mxu0 %v4943
        %5443 = vmatprep.subr.bf16.mxu0 %v4940
        %5444 = vmatpush2.bf16.msra.mxu0 %v4939
        %5445 = vmatprep.subr.bf16.mxu0 %v4936
        %5446 = vmatpush2.bf16.msra.mxu0 %v4935
        %5447 = vmatprep.subr.bf16.mxu0 %v4932
        %5448 = vmatpush2.bf16.msra.mxu0 %v4931
        %5449 = vmatprep.subr.bf16.mxu0 %v4928
        %5450 = vmatpush2.bf16.msra.mxu0 %v4927
        %5451 = vmatprep.subr.bf16.mxu0 %v4924
        %5452 = vmatpush2.bf16.msra.mxu0 %v4923
        %5453 = vmatprep.mubr.bf16.mxu0 %v4026
        %5454 = vmatmul.mubr.bf16.gmra.mxu0 %v4025
        %v5455 = vpop.f32.mrf.mxu0
        %v5456 = vadd.f32 %v5403, %v5455
        %v5457 = vpop.f32.mrf.mxu0
        %v5458 = vadd.f32 %v5405, %v5457
        %v5459 = vpop.f32.mrf.mxu0
        %v5460 = vadd.f32 %v5407, %v5459
        %v5461 = vpop.f32.mrf.mxu0
        %v5462 = vadd.f32 %v5409, %v5461
        %5463 = vmatprep.mubr.bf16.mxu0 %v4032
        %5464 = vmatmul.mubr.bf16.gmra.mxu0 %v4031
        %v5465 = vpop.f32.mrf.mxu0
        %v5466 = vadd.f32 %v5413, %v5465
        %v5467 = vpop.f32.mrf.mxu0
        %v5468 = vadd.f32 %v5415, %v5467
        %v5469 = vpop.f32.mrf.mxu0
        %v5470 = vadd.f32 %v5417, %v5469
        %v5471 = vpop.f32.mrf.mxu0
        %v5472 = vadd.f32 %v5419, %v5471
        %5473 = vdwg.mxu0
        %5474 = vmatprep.subr.bf16.mxu0 %v4984
        %5475 = vmatpush1.bf16.msra.mxu0 %v4983
        %5476 = vmatprep.subr.bf16.mxu0 %v4980
        %5477 = vmatpush1.bf16.msra.mxu0 %v4979
        %5478 = vmatprep.subr.bf16.mxu0 %v4976
        %5479 = vmatpush1.bf16.msra.mxu0 %v4975
        %5480 = vmatprep.subr.bf16.mxu0 %v4972
        %5481 = vmatpush1.bf16.msra.mxu0 %v4971
        %5482 = vmatprep.subr.bf16.mxu0 %v4968
        %5483 = vmatpush1.bf16.msra.mxu0 %v4967
        %5484 = vmatprep.subr.bf16.mxu0 %v4964
        %5485 = vmatpush1.bf16.msra.mxu0 %v4963
        %5486 = vmatprep.subr.bf16.mxu0 %v4960
        %5487 = vmatpush1.bf16.msra.mxu0 %v4959
        %5488 = vmatprep.subr.bf16.mxu0 %v4956
        %5489 = vmatpush1.bf16.msra.mxu0 %v4955
        %5490 = vmatprep.subr.bf16.mxu0 %v5016
        %5491 = vmatpush2.bf16.msra.mxu0 %v5015
        %5492 = vmatprep.subr.bf16.mxu0 %v5012
        %5493 = vmatpush2.bf16.msra.mxu0 %v5011
        %5494 = vmatprep.subr.bf16.mxu0 %v5008
        %5495 = vmatpush2.bf16.msra.mxu0 %v5007
        %5496 = vmatprep.subr.bf16.mxu0 %v5004
        %5497 = vmatpush2.bf16.msra.mxu0 %v5003
        %5498 = vmatprep.subr.bf16.mxu0 %v5000
        %5499 = vmatpush2.bf16.msra.mxu0 %v4999
        %5500 = vmatprep.subr.bf16.mxu0 %v4996
        %5501 = vmatpush2.bf16.msra.mxu0 %v4995
        %5502 = vmatprep.subr.bf16.mxu0 %v4992
        %5503 = vmatpush2.bf16.msra.mxu0 %v4991
        %5504 = vmatprep.subr.bf16.mxu0 %v4988
        %5505 = vmatpush2.bf16.msra.mxu0 %v4987
        %5506 = vmatprep.mubr.bf16.mxu0 %v4028
        %5507 = vmatmul.mubr.bf16.gmra.mxu0 %v4027
        %v5508 = vpop.f32.mrf.mxu0
        %v5509 = vadd.f32 %v5456, %v5508
        %v5510 = vpop.f32.mrf.mxu0
        %v5511 = vadd.f32 %v5458, %v5510
        %v5512 = vpop.f32.mrf.mxu0
        %v5513 = vadd.f32 %v5460, %v5512
        %v5514 = vpop.f32.mrf.mxu0
        %v5515 = vadd.f32 %v5462, %v5514
        %5516 = vmatprep.mubr.bf16.mxu0 %v4034
        %5517 = vmatmul.mubr.bf16.gmra.mxu0 %v4033
        %v5518 = vpop.f32.mrf.mxu0
        %v5519 = vadd.f32 %v5466, %v5518
        %v5520 = vpop.f32.mrf.mxu0
        %v5521 = vadd.f32 %v5468, %v5520
        %v5522 = vpop.f32.mrf.mxu0
        %v5523 = vadd.f32 %v5470, %v5522
        %v5524 = vpop.f32.mrf.mxu0
        %v5525 = vadd.f32 %v5472, %v5524
        %5526 = vdwg.mxu0
        %v5527 = vmax.f32 %v5350, 0.0
        %v5528 = vmax.f32 %v5352, 0.0
        %v5529 = vmax.f32 %v5509, 0.0
        %v5530 = vmax.f32 %v5511, 0.0
        %v5531 = vmax.f32 %v5354, 0.0
        %v5532 = vmax.f32 %v5356, 0.0
        %v5533 = vmax.f32 %v5513, 0.0
        %v5534 = vmax.f32 %v5515, 0.0
        %v5535 = vmax.f32 %v5360, 0.0
        %v5536 = vmax.f32 %v5362, 0.0
        %v5537 = vmax.f32 %v5519, 0.0
        %v5538 = vmax.f32 %v5521, 0.0
        %v5539 = vmax.f32 %v5364, 0.0
        %v5540 = vmax.f32 %v5366, 0.0
        %v5541 = vmax.f32 %v5523, 0.0
        %v5542 = vmax.f32 %v5525, 0.0
        %v5543 = vpack.c.bf16 %v5531, %v5527
        %v5544 = vpack.c.bf16 %v5532, %v5528
        %v5545 = vpack.c.bf16 %v5533, %v5529
        %v5546 = vpack.c.bf16 %v5534, %v5530
        %v5547 = vpack.c.bf16 %v5539, %v5535
        %v5548 = vpack.c.bf16 %v5540, %v5536
        %v5549 = vpack.c.bf16 %v5541, %v5537
        %v5550 = vpack.c.bf16 %v5542, %v5538
        %v5551 = vld [vmem:[#allocation10] sm:$0xff]
        %v5552 = vld [vmem:[#allocation10 + $0x8] sm:$0xff]
        %v5553 = vld [vmem:[#allocation10 + $0x10] sm:$0xff]
        %v5554 = vld [vmem:[#allocation10 + $0x18] sm:$0xff]
        %v5555 = vld [vmem:[#allocation10 + $0x20] sm:$0xff]
        %v5556 = vld [vmem:[#allocation10 + $0x28] sm:$0xff]
        %v5557 = vld [vmem:[#allocation10 + $0x30] sm:$0xff]
        %v5558 = vld [vmem:[#allocation10 + $0x38] sm:$0xff]
        %v5559 = vld [vmem:[#allocation10 + $0x40] sm:$0xff]
        %v5560 = vld [vmem:[#allocation10 + $0x48] sm:$0xff]
        %v5561 = vld [vmem:[#allocation10 + $0x50] sm:$0xff]
        %v5562 = vld [vmem:[#allocation10 + $0x58] sm:$0xff]
        %v5563 = vld [vmem:[#allocation10 + $0x60] sm:$0xff]
        %v5564 = vld [vmem:[#allocation10 + $0x68] sm:$0xff]
        %v5565 = vld [vmem:[#allocation10 + $0x70] sm:$0xff]
        %v5566 = vld [vmem:[#allocation10 + $0x78] sm:$0xff]
        %v5567 = vld [vmem:[#allocation10 + $0x80] sm:$0xff]
        %v5568 = vld [vmem:[#allocation10 + $0x88] sm:$0xff]
        %v5569 = vld [vmem:[#allocation10 + $0x90] sm:$0xff]
        %v5570 = vld [vmem:[#allocation10 + $0x98] sm:$0xff]
        %v5571 = vld [vmem:[#allocation10 + $0xa0] sm:$0xff]
        %v5572 = vld [vmem:[#allocation10 + $0xa8] sm:$0xff]
        %v5573 = vld [vmem:[#allocation10 + $0xb0] sm:$0xff]
        %v5574 = vld [vmem:[#allocation10 + $0xb8] sm:$0xff]
        %v5575 = vld [vmem:[#allocation10 + $0xc0] sm:$0xff]
        %v5576 = vld [vmem:[#allocation10 + $0xc8] sm:$0xff]
        %v5577 = vld [vmem:[#allocation10 + $0xd0] sm:$0xff]
        %v5578 = vld [vmem:[#allocation10 + $0xd8] sm:$0xff]
        %v5579 = vld [vmem:[#allocation10 + $0xe0] sm:$0xff]
        %v5580 = vld [vmem:[#allocation10 + $0xe8] sm:$0xff]
        %v5581 = vld [vmem:[#allocation10 + $0xf0] sm:$0xff]
        %v5582 = vld [vmem:[#allocation10 + $0xf8] sm:$0xff]
        %v5583 = vld [vmem:[#allocation10 + $0x100] sm:$0xff]
        %v5584 = vld [vmem:[#allocation10 + $0x108] sm:$0xff]
        %v5585 = vld [vmem:[#allocation10 + $0x110] sm:$0xff]
        %v5586 = vld [vmem:[#allocation10 + $0x118] sm:$0xff]
        %v5587 = vld [vmem:[#allocation10 + $0x120] sm:$0xff]
        %v5588 = vld [vmem:[#allocation10 + $0x128] sm:$0xff]
        %v5589 = vld [vmem:[#allocation10 + $0x130] sm:$0xff]
        %v5590 = vld [vmem:[#allocation10 + $0x138] sm:$0xff]
        %v5591 = vld [vmem:[#allocation10 + $0x140] sm:$0xff]
        %v5592 = vld [vmem:[#allocation10 + $0x148] sm:$0xff]
        %v5593 = vld [vmem:[#allocation10 + $0x150] sm:$0xff]
        %v5594 = vld [vmem:[#allocation10 + $0x158] sm:$0xff]
        %v5595 = vld [vmem:[#allocation10 + $0x160] sm:$0xff]
        %v5596 = vld [vmem:[#allocation10 + $0x168] sm:$0xff]
        %v5597 = vld [vmem:[#allocation10 + $0x170] sm:$0xff]
        %v5598 = vld [vmem:[#allocation10 + $0x178] sm:$0xff]
        %v5599 = vld [vmem:[#allocation10 + $0x180] sm:$0xff]
        %v5600 = vld [vmem:[#allocation10 + $0x188] sm:$0xff]
        %v5601 = vld [vmem:[#allocation10 + $0x190] sm:$0xff]
        %v5602 = vld [vmem:[#allocation10 + $0x198] sm:$0xff]
        %v5603 = vld [vmem:[#allocation10 + $0x1a0] sm:$0xff]
        %v5604 = vld [vmem:[#allocation10 + $0x1a8] sm:$0xff]
        %v5605 = vld [vmem:[#allocation10 + $0x1b0] sm:$0xff]
        %v5606 = vld [vmem:[#allocation10 + $0x1b8] sm:$0xff]
        %v5607 = vld [vmem:[#allocation10 + $0x1c0] sm:$0xff]
        %v5608 = vld [vmem:[#allocation10 + $0x1c8] sm:$0xff]
        %v5609 = vld [vmem:[#allocation10 + $0x1d0] sm:$0xff]
        %v5610 = vld [vmem:[#allocation10 + $0x1d8] sm:$0xff]
        %v5611 = vld [vmem:[#allocation10 + $0x1e0] sm:$0xff]
        %v5612 = vld [vmem:[#allocation10 + $0x1e8] sm:$0xff]
        %v5613 = vld [vmem:[#allocation10 + $0x1f0] sm:$0xff]
        %v5614 = vld [vmem:[#allocation10 + $0x1f8] sm:$0xff]
        %v5615 = vld [vmem:[%s17] sm:$0x3]
        %v5617 = vlaneseq
        %v5618 = vshrl.u32 %v5617, 7
        %v5619 = vsub.s32 0, %v5618
        %v5620 = vrot.slane %v5615, %v5619
        %v5621 = vlaneseq
        %v5622 = vshrl.u32 %v5621, 7
        %v5623 = vsub.s32 1, %v5622
        %v5624 = vrot.slane %v5615, %v5623
        %v5691 = vunpack.c.l.b16 %v5551
        %v5692 = vunpack.c.h.b16 %v5551
        %v5693 = vunpack.c.l.b16 %v5552
        %v5694 = vunpack.c.h.b16 %v5552
        %v5695 = vunpack.c.l.b16 %v5553
        %v5696 = vunpack.c.h.b16 %v5553
        %v5697 = vunpack.c.l.b16 %v5554
        %v5698 = vunpack.c.h.b16 %v5554
        %v5699 = vunpack.c.l.b16 %v5555
        %v5700 = vunpack.c.h.b16 %v5555
        %v5701 = vunpack.c.l.b16 %v5556
        %v5702 = vunpack.c.h.b16 %v5556
        %v5703 = vunpack.c.l.b16 %v5557
        %v5704 = vunpack.c.h.b16 %v5557
        %v5705 = vunpack.c.l.b16 %v5558
        %v5706 = vunpack.c.h.b16 %v5558
        %v5707 = vunpack.c.l.b16 %v5559
        %v5708 = vunpack.c.h.b16 %v5559
        %v5709 = vunpack.c.l.b16 %v5560
        %v5710 = vunpack.c.h.b16 %v5560
        %v5711 = vunpack.c.l.b16 %v5561
        %v5712 = vunpack.c.h.b16 %v5561
        %v5713 = vunpack.c.l.b16 %v5562
        %v5714 = vunpack.c.h.b16 %v5562
        %v5715 = vunpack.c.l.b16 %v5563
        %v5716 = vunpack.c.h.b16 %v5563
        %v5717 = vunpack.c.l.b16 %v5564
        %v5718 = vunpack.c.h.b16 %v5564
        %v5719 = vunpack.c.l.b16 %v5565
        %v5720 = vunpack.c.h.b16 %v5565
        %v5721 = vunpack.c.l.b16 %v5566
        %v5722 = vunpack.c.h.b16 %v5566
        %v5723 = vunpack.c.l.b16 %v5567
        %v5724 = vunpack.c.h.b16 %v5567
        %v5725 = vunpack.c.l.b16 %v5568
        %v5726 = vunpack.c.h.b16 %v5568
        %v5727 = vunpack.c.l.b16 %v5569
        %v5728 = vunpack.c.h.b16 %v5569
        %v5729 = vunpack.c.l.b16 %v5570
        %v5730 = vunpack.c.h.b16 %v5570
        %v5731 = vunpack.c.l.b16 %v5571
        %v5732 = vunpack.c.h.b16 %v5571
        %v5733 = vunpack.c.l.b16 %v5572
        %v5734 = vunpack.c.h.b16 %v5572
        %v5735 = vunpack.c.l.b16 %v5573
        %v5736 = vunpack.c.h.b16 %v5573
        %v5737 = vunpack.c.l.b16 %v5574
        %v5738 = vunpack.c.h.b16 %v5574
        %v5739 = vunpack.c.l.b16 %v5575
        %v5740 = vunpack.c.h.b16 %v5575
        %v5741 = vunpack.c.l.b16 %v5576
        %v5742 = vunpack.c.h.b16 %v5576
        %v5743 = vunpack.c.l.b16 %v5577
        %v5744 = vunpack.c.h.b16 %v5577
        %v5745 = vunpack.c.l.b16 %v5578
        %v5746 = vunpack.c.h.b16 %v5578
        %v5747 = vunpack.c.l.b16 %v5579
        %v5748 = vunpack.c.h.b16 %v5579
        %v5749 = vunpack.c.l.b16 %v5580
        %v5750 = vunpack.c.h.b16 %v5580
        %v5751 = vunpack.c.l.b16 %v5581
        %v5752 = vunpack.c.h.b16 %v5581
        %v5753 = vunpack.c.l.b16 %v5582
        %v5754 = vunpack.c.h.b16 %v5582
        %v5755 = vunpack.c.l.b16 %v5583
        %v5756 = vunpack.c.h.b16 %v5583
        %v5757 = vunpack.c.l.b16 %v5584
        %v5758 = vunpack.c.h.b16 %v5584
        %v5759 = vunpack.c.l.b16 %v5585
        %v5760 = vunpack.c.h.b16 %v5585
        %v5761 = vunpack.c.l.b16 %v5586
        %v5762 = vunpack.c.h.b16 %v5586
        %v5763 = vunpack.c.l.b16 %v5587
        %v5764 = vunpack.c.h.b16 %v5587
        %v5765 = vunpack.c.l.b16 %v5588
        %v5766 = vunpack.c.h.b16 %v5588
        %v5767 = vunpack.c.l.b16 %v5589
        %v5768 = vunpack.c.h.b16 %v5589
        %v5769 = vunpack.c.l.b16 %v5590
        %v5770 = vunpack.c.h.b16 %v5590
        %v5771 = vunpack.c.l.b16 %v5591
        %v5772 = vunpack.c.h.b16 %v5591
        %v5773 = vunpack.c.l.b16 %v5592
        %v5774 = vunpack.c.h.b16 %v5592
        %v5775 = vunpack.c.l.b16 %v5593
        %v5776 = vunpack.c.h.b16 %v5593
        %v5777 = vunpack.c.l.b16 %v5594
        %v5778 = vunpack.c.h.b16 %v5594
        %v5779 = vunpack.c.l.b16 %v5595
        %v5780 = vunpack.c.h.b16 %v5595
        %v5781 = vunpack.c.l.b16 %v5596
        %v5782 = vunpack.c.h.b16 %v5596
        %v5783 = vunpack.c.l.b16 %v5597
        %v5784 = vunpack.c.h.b16 %v5597
        %v5785 = vunpack.c.l.b16 %v5598
        %v5786 = vunpack.c.h.b16 %v5598
        %v5787 = vunpack.c.l.b16 %v5599
        %v5788 = vunpack.c.h.b16 %v5599
        %v5789 = vunpack.c.l.b16 %v5600
        %v5790 = vunpack.c.h.b16 %v5600
        %v5791 = vunpack.c.l.b16 %v5601
        %v5792 = vunpack.c.h.b16 %v5601
        %v5793 = vunpack.c.l.b16 %v5602
        %v5794 = vunpack.c.h.b16 %v5602
        %v5795 = vunpack.c.l.b16 %v5603
        %v5796 = vunpack.c.h.b16 %v5603
        %v5797 = vunpack.c.l.b16 %v5604
        %v5798 = vunpack.c.h.b16 %v5604
        %v5799 = vunpack.c.l.b16 %v5605
        %v5800 = vunpack.c.h.b16 %v5605
        %v5801 = vunpack.c.l.b16 %v5606
        %v5802 = vunpack.c.h.b16 %v5606
        %v5803 = vunpack.c.l.b16 %v5607
        %v5804 = vunpack.c.h.b16 %v5607
        %v5805 = vunpack.c.l.b16 %v5608
        %v5806 = vunpack.c.h.b16 %v5608
        %v5807 = vunpack.c.l.b16 %v5609
        %v5808 = vunpack.c.h.b16 %v5609
        %v5809 = vunpack.c.l.b16 %v5610
        %v5810 = vunpack.c.h.b16 %v5610
        %v5811 = vunpack.c.l.b16 %v5611
        %v5812 = vunpack.c.h.b16 %v5611
        %v5813 = vunpack.c.l.b16 %v5612
        %v5814 = vunpack.c.h.b16 %v5612
        %v5815 = vunpack.c.l.b16 %v5613
        %v5816 = vunpack.c.h.b16 %v5613
        %v5817 = vunpack.c.l.b16 %v5614
        %v5818 = vunpack.c.h.b16 %v5614
        %v5819 = vpack.c.b16 %v5693, %v5691
        %v5820 = vpack.c.b16 %v5694, %v5692
        %v5821 = vpack.c.b16 %v5697, %v5695
        %v5822 = vpack.c.b16 %v5698, %v5696
        %v5823 = vpack.c.b16 %v5701, %v5699
        %v5824 = vpack.c.b16 %v5702, %v5700
        %v5825 = vpack.c.b16 %v5705, %v5703
        %v5826 = vpack.c.b16 %v5706, %v5704
        %v5827 = vpack.c.b16 %v5709, %v5707
        %v5828 = vpack.c.b16 %v5710, %v5708
        %v5829 = vpack.c.b16 %v5713, %v5711
        %v5830 = vpack.c.b16 %v5714, %v5712
        %v5831 = vpack.c.b16 %v5717, %v5715
        %v5832 = vpack.c.b16 %v5718, %v5716
        %v5833 = vpack.c.b16 %v5721, %v5719
        %v5834 = vpack.c.b16 %v5722, %v5720
        %v5835 = vpack.c.b16 %v5725, %v5723
        %v5836 = vpack.c.b16 %v5726, %v5724
        %v5837 = vpack.c.b16 %v5729, %v5727
        %v5838 = vpack.c.b16 %v5730, %v5728
        %v5839 = vpack.c.b16 %v5733, %v5731
        %v5840 = vpack.c.b16 %v5734, %v5732
        %v5841 = vpack.c.b16 %v5737, %v5735
        %v5842 = vpack.c.b16 %v5738, %v5736
        %v5843 = vpack.c.b16 %v5741, %v5739
        %v5844 = vpack.c.b16 %v5742, %v5740
        %v5845 = vpack.c.b16 %v5745, %v5743
        %v5846 = vpack.c.b16 %v5746, %v5744
        %v5847 = vpack.c.b16 %v5749, %v5747
        %v5848 = vpack.c.b16 %v5750, %v5748
        %v5849 = vpack.c.b16 %v5753, %v5751
        %v5850 = vpack.c.b16 %v5754, %v5752
        %v5851 = vpack.c.b16 %v5757, %v5755
        %v5852 = vpack.c.b16 %v5758, %v5756
        %v5853 = vpack.c.b16 %v5761, %v5759
        %v5854 = vpack.c.b16 %v5762, %v5760
        %v5855 = vpack.c.b16 %v5765, %v5763
        %v5856 = vpack.c.b16 %v5766, %v5764
        %v5857 = vpack.c.b16 %v5769, %v5767
        %v5858 = vpack.c.b16 %v5770, %v5768
        %v5859 = vpack.c.b16 %v5773, %v5771
        %v5860 = vpack.c.b16 %v5774, %v5772
        %v5861 = vpack.c.b16 %v5777, %v5775
        %v5862 = vpack.c.b16 %v5778, %v5776
        %v5863 = vpack.c.b16 %v5781, %v5779
        %v5864 = vpack.c.b16 %v5782, %v5780
        %v5865 = vpack.c.b16 %v5785, %v5783
        %v5866 = vpack.c.b16 %v5786, %v5784
        %v5867 = vpack.c.b16 %v5789, %v5787
        %v5868 = vpack.c.b16 %v5790, %v5788
        %v5869 = vpack.c.b16 %v5793, %v5791
        %v5870 = vpack.c.b16 %v5794, %v5792
        %v5871 = vpack.c.b16 %v5797, %v5795
        %v5872 = vpack.c.b16 %v5798, %v5796
        %v5873 = vpack.c.b16 %v5801, %v5799
        %v5874 = vpack.c.b16 %v5802, %v5800
        %v5875 = vpack.c.b16 %v5805, %v5803
        %v5876 = vpack.c.b16 %v5806, %v5804
        %v5877 = vpack.c.b16 %v5809, %v5807
        %v5878 = vpack.c.b16 %v5810, %v5808
        %v5879 = vpack.c.b16 %v5813, %v5811
        %v5880 = vpack.c.b16 %v5814, %v5812
        %v5881 = vpack.c.b16 %v5817, %v5815
        %v5882 = vpack.c.b16 %v5818, %v5816
        %5947 = vmatprep.subr.bf16.mxu0 %v5834
        %5948 = vmatpush1.bf16.msra.mxu0 %v5833
        %5949 = vmatprep.subr.bf16.mxu0 %v5832
        %5950 = vmatpush1.bf16.msra.mxu0 %v5831
        %5951 = vmatprep.subr.bf16.mxu0 %v5830
        %5952 = vmatpush1.bf16.msra.mxu0 %v5829
        %5953 = vmatprep.subr.bf16.mxu0 %v5828
        %5954 = vmatpush1.bf16.msra.mxu0 %v5827
        %5955 = vmatprep.subr.bf16.mxu0 %v5826
        %5956 = vmatpush1.bf16.msra.mxu0 %v5825
        %5957 = vmatprep.subr.bf16.mxu0 %v5824
        %5958 = vmatpush1.bf16.msra.mxu0 %v5823
        %5959 = vmatprep.subr.bf16.mxu0 %v5822
        %5960 = vmatpush1.bf16.msra.mxu0 %v5821
        %5961 = vmatprep.subr.bf16.mxu0 %v5820
        %5962 = vmatpush1.bf16.msra.mxu0 %v5819
        %5963 = vmatprep.subr.bf16.mxu0 %v5850
        %5964 = vmatpush2.bf16.msra.mxu0 %v5849
        %5965 = vmatprep.subr.bf16.mxu0 %v5848
        %5966 = vmatpush2.bf16.msra.mxu0 %v5847
        %5967 = vmatprep.subr.bf16.mxu0 %v5846
        %5968 = vmatpush2.bf16.msra.mxu0 %v5845
        %5969 = vmatprep.subr.bf16.mxu0 %v5844
        %5970 = vmatpush2.bf16.msra.mxu0 %v5843
        %5971 = vmatprep.subr.bf16.mxu0 %v5842
        %5972 = vmatpush2.bf16.msra.mxu0 %v5841
        %5973 = vmatprep.subr.bf16.mxu0 %v5840
        %5974 = vmatpush2.bf16.msra.mxu0 %v5839
        %5975 = vmatprep.subr.bf16.mxu0 %v5838
        %5976 = vmatpush2.bf16.msra.mxu0 %v5837
        %5977 = vmatprep.subr.bf16.mxu0 %v5836
        %5978 = vmatpush2.bf16.msra.mxu0 %v5835
        %5979 = vmatprep.mubr.bf16.mxu0 %v5544
        %5980 = vmatmul.mubr.bf16.gmra.mxu0 %v5543
        %v5981 = vpop.f32.mrf.mxu0
        %v5982 = vadd.f32 %v5620, %v5981
        %v5983 = vpop.f32.mrf.mxu0
        %v5984 = vadd.f32 %v5624, %v5983
        %v5985 = vpop.f32.mrf.mxu0
        %v5986 = vadd.f32 %v5620, %v5985
        %v5987 = vpop.f32.mrf.mxu0
        %v5988 = vadd.f32 %v5624, %v5987
        %5989 = vmatprep.mubr.bf16.mxu0 %v5548
        %5990 = vmatmul.mubr.bf16.gmra.mxu0 %v5547
        %v5991 = vpop.f32.mrf.mxu0
        %v5992 = vadd.f32 %v5620, %v5991
        %v5993 = vpop.f32.mrf.mxu0
        %v5994 = vadd.f32 %v5624, %v5993
        %v5995 = vpop.f32.mrf.mxu0
        %v5996 = vadd.f32 %v5620, %v5995
        %v5997 = vpop.f32.mrf.mxu0
        %v5998 = vadd.f32 %v5624, %v5997
        %5999 = vdwg.mxu0
        %6000 = vmatprep.subr.bf16.mxu0 %v5866
        %6001 = vmatpush1.bf16.msra.mxu0 %v5865
        %6002 = vmatprep.subr.bf16.mxu0 %v5864
        %6003 = vmatpush1.bf16.msra.mxu0 %v5863
        %6004 = vmatprep.subr.bf16.mxu0 %v5862
        %6005 = vmatpush1.bf16.msra.mxu0 %v5861
        %6006 = vmatprep.subr.bf16.mxu0 %v5860
        %6007 = vmatpush1.bf16.msra.mxu0 %v5859
        %6008 = vmatprep.subr.bf16.mxu0 %v5858
        %6009 = vmatpush1.bf16.msra.mxu0 %v5857
        %6010 = vmatprep.subr.bf16.mxu0 %v5856
        %6011 = vmatpush1.bf16.msra.mxu0 %v5855
        %6012 = vmatprep.subr.bf16.mxu0 %v5854
        %6013 = vmatpush1.bf16.msra.mxu0 %v5853
        %6014 = vmatprep.subr.bf16.mxu0 %v5852
        %6015 = vmatpush1.bf16.msra.mxu0 %v5851
        %6016 = vmatprep.subr.bf16.mxu0 %v5882
        %6017 = vmatpush2.bf16.msra.mxu0 %v5881
        %6018 = vmatprep.subr.bf16.mxu0 %v5880
        %6019 = vmatpush2.bf16.msra.mxu0 %v5879
        %6020 = vmatprep.subr.bf16.mxu0 %v5878
        %6021 = vmatpush2.bf16.msra.mxu0 %v5877
        %6022 = vmatprep.subr.bf16.mxu0 %v5876
        %6023 = vmatpush2.bf16.msra.mxu0 %v5875
        %6024 = vmatprep.subr.bf16.mxu0 %v5874
        %6025 = vmatpush2.bf16.msra.mxu0 %v5873
        %6026 = vmatprep.subr.bf16.mxu0 %v5872
        %6027 = vmatpush2.bf16.msra.mxu0 %v5871
        %6028 = vmatprep.subr.bf16.mxu0 %v5870
        %6029 = vmatpush2.bf16.msra.mxu0 %v5869
        %6030 = vmatprep.subr.bf16.mxu0 %v5868
        %6031 = vmatpush2.bf16.msra.mxu0 %v5867
        %6032 = vmatprep.mubr.bf16.mxu0 %v5546
        %6033 = vmatmul.mubr.bf16.gmra.mxu0 %v5545
        %v6034 = vpop.f32.mrf.mxu0
        %v6035 = vadd.f32 %v5982, %v6034
        %v6036 = vpop.f32.mrf.mxu0
        %v6037 = vadd.f32 %v5984, %v6036
        %v6038 = vpop.f32.mrf.mxu0
        %v6039 = vadd.f32 %v5986, %v6038
        %v6040 = vpop.f32.mrf.mxu0
        %v6041 = vadd.f32 %v5988, %v6040
        %6042 = vmatprep.mubr.bf16.mxu0 %v5550
        %6043 = vmatmul.mubr.bf16.gmra.mxu0 %v5549
        %v6044 = vpop.f32.mrf.mxu0
        %v6045 = vadd.f32 %v5992, %v6044
        %v6046 = vpop.f32.mrf.mxu0
        %v6047 = vadd.f32 %v5994, %v6046
        %v6048 = vpop.f32.mrf.mxu0
        %v6049 = vadd.f32 %v5996, %v6048
        %v6050 = vpop.f32.mrf.mxu0
        %v6051 = vadd.f32 %v5998, %v6050
        %6052 = vdwg.mxu0
        %v6053 = vmax.f32 %v6035, 0.0
        %v6054 = vmax.f32 %v6037, 0.0
        %v6055 = vmax.f32 %v6039, 0.0
        %v6056 = vmax.f32 %v6041, 0.0
        %v6057 = vmax.f32 %v6045, 0.0
        %v6058 = vmax.f32 %v6047, 0.0
        %v6059 = vmax.f32 %v6049, 0.0
        %v6060 = vmax.f32 %v6051, 0.0
        %v6061 = vpack.c.bf16 %v6055, %v6053
        %v6062 = vpack.c.bf16 %v6056, %v6054
        %v6063 = vpack.c.bf16 %v6059, %v6057
        %v6064 = vpack.c.bf16 %v6060, %v6058
        %v6065 = vld [vmem:[#allocation12] sm:$0xf]
        %v6066 = vld [vmem:[#allocation12 + $0x4] sm:$0xf]
        %v6067 = vld [vmem:[#allocation12 + $0x8] sm:$0xf]
        %v6068 = vld [vmem:[#allocation12 + $0xc] sm:$0xf]
        %v6069 = vld [vmem:[#allocation12 + $0x10] sm:$0xf]
        %v6070 = vld [vmem:[#allocation12 + $0x14] sm:$0xf]
        %v6071 = vld [vmem:[#allocation12 + $0x18] sm:$0xf]
        %v6072 = vld [vmem:[#allocation12 + $0x1c] sm:$0xf]
        %v6073 = vld [vmem:[#allocation12 + $0x20] sm:$0xf]
        %v6074 = vld [vmem:[#allocation12 + $0x24] sm:$0xf]
        %v6075 = vld [vmem:[#allocation12 + $0x28] sm:$0xf]
        %v6076 = vld [vmem:[#allocation12 + $0x2c] sm:$0xf]
        %v6077 = vld [vmem:[#allocation12 + $0x30] sm:$0xf]
        %v6078 = vld [vmem:[#allocation12 + $0x34] sm:$0xf]
        %v6079 = vld [vmem:[#allocation12 + $0x38] sm:$0xf]
        %v6080 = vld [vmem:[#allocation12 + $0x3c] sm:$0xf]
        %v6081 = vld [vmem:[#allocation12 + $0x40] sm:$0xf]
        %v6082 = vld [vmem:[#allocation12 + $0x44] sm:$0xf]
        %v6083 = vld [vmem:[#allocation12 + $0x48] sm:$0xf]
        %v6084 = vld [vmem:[#allocation12 + $0x4c] sm:$0xf]
        %v6085 = vld [vmem:[#allocation12 + $0x50] sm:$0xf]
        %v6086 = vld [vmem:[#allocation12 + $0x54] sm:$0xf]
        %v6087 = vld [vmem:[#allocation12 + $0x58] sm:$0xf]
        %v6088 = vld [vmem:[#allocation12 + $0x5c] sm:$0xf]
        %v6089 = vld [vmem:[#allocation12 + $0x60] sm:$0xf]
        %v6090 = vld [vmem:[#allocation12 + $0x64] sm:$0xf]
        %v6091 = vld [vmem:[#allocation12 + $0x68] sm:$0xf]
        %v6092 = vld [vmem:[#allocation12 + $0x6c] sm:$0xf]
        %v6093 = vld [vmem:[#allocation12 + $0x70] sm:$0xf]
        %v6094 = vld [vmem:[#allocation12 + $0x74] sm:$0xf]
        %v6095 = vld [vmem:[#allocation12 + $0x78] sm:$0xf]
        %v6096 = vld [vmem:[#allocation12 + $0x7c] sm:$0xf]
        %v6097 = vld [vmem:[%s19] sm:$0x1]
        %v6099 = vlaneseq
        %v6100 = vshrl.u32 %v6099, 7
        %v6101 = vsub.s32 0, %v6100
        %v6102 = vrot.slane %v6097, %v6101
        %v6136 = vunpack.c.l.b16 %v6065
        %v6137 = vunpack.c.l.b16 %v6066
        %v6138 = vunpack.c.l.b16 %v6067
        %v6139 = vunpack.c.l.b16 %v6068
        %v6140 = vunpack.c.l.b16 %v6069
        %v6141 = vunpack.c.l.b16 %v6070
        %v6142 = vunpack.c.l.b16 %v6071
        %v6143 = vunpack.c.l.b16 %v6072
        %v6144 = vunpack.c.l.b16 %v6073
        %v6145 = vunpack.c.l.b16 %v6074
        %v6146 = vunpack.c.l.b16 %v6075
        %v6147 = vunpack.c.l.b16 %v6076
        %v6148 = vunpack.c.l.b16 %v6077
        %v6149 = vunpack.c.l.b16 %v6078
        %v6150 = vunpack.c.l.b16 %v6079
        %v6151 = vunpack.c.l.b16 %v6080
        %v6152 = vunpack.c.l.b16 %v6081
        %v6153 = vunpack.c.l.b16 %v6082
        %v6154 = vunpack.c.l.b16 %v6083
        %v6155 = vunpack.c.l.b16 %v6084
        %v6156 = vunpack.c.l.b16 %v6085
        %v6157 = vunpack.c.l.b16 %v6086
        %v6158 = vunpack.c.l.b16 %v6087
        %v6159 = vunpack.c.l.b16 %v6088
        %v6160 = vunpack.c.l.b16 %v6089
        %v6161 = vunpack.c.l.b16 %v6090
        %v6162 = vunpack.c.l.b16 %v6091
        %v6163 = vunpack.c.l.b16 %v6092
        %v6164 = vunpack.c.l.b16 %v6093
        %v6165 = vunpack.c.l.b16 %v6094
        %v6166 = vunpack.c.l.b16 %v6095
        %v6167 = vunpack.c.l.b16 %v6096
        %v6168 = vpack.c.b16 %v6137, %v6136
        %v6169 = vpack.c.b16 %v6139, %v6138
        %v6170 = vpack.c.b16 %v6141, %v6140
        %v6171 = vpack.c.b16 %v6143, %v6142
        %v6172 = vpack.c.b16 %v6145, %v6144
        %v6173 = vpack.c.b16 %v6147, %v6146
        %v6174 = vpack.c.b16 %v6149, %v6148
        %v6175 = vpack.c.b16 %v6151, %v6150
        %v6176 = vpack.c.b16 %v6153, %v6152
        %v6177 = vpack.c.b16 %v6155, %v6154
        %v6178 = vpack.c.b16 %v6157, %v6156
        %v6179 = vpack.c.b16 %v6159, %v6158
        %v6180 = vpack.c.b16 %v6161, %v6160
        %v6181 = vpack.c.b16 %v6163, %v6162
        %v6182 = vpack.c.b16 %v6165, %v6164
        %v6183 = vpack.c.b16 %v6167, %v6166
        %6200 = vmatprep.subr.bf16.mxu0 0
        %6201 = vmatpush1.bf16.msra.mxu0 %v6175
        %6202 = vmatprep.subr.bf16.mxu0 0
        %6203 = vmatpush1.bf16.msra.mxu0 %v6174
        %6204 = vmatprep.subr.bf16.mxu0 0
        %6205 = vmatpush1.bf16.msra.mxu0 %v6173
        %6206 = vmatprep.subr.bf16.mxu0 0
        %6207 = vmatpush1.bf16.msra.mxu0 %v6172
        %6208 = vmatprep.subr.bf16.mxu0 0
        %6209 = vmatpush1.bf16.msra.mxu0 %v6171
        %6210 = vmatprep.subr.bf16.mxu0 0
        %6211 = vmatpush1.bf16.msra.mxu0 %v6170
        %6212 = vmatprep.subr.bf16.mxu0 0
        %6213 = vmatpush1.bf16.msra.mxu0 %v6169
        %6214 = vmatprep.subr.bf16.mxu0 0
        %6215 = vmatpush1.bf16.msra.mxu0 %v6168
        %6216 = vmatprep.subr.bf16.mxu0 0
        %6217 = vmatpush2.bf16.msra.mxu0 %v6183
        %6218 = vmatprep.subr.bf16.mxu0 0
        %6219 = vmatpush2.bf16.msra.mxu0 %v6182
        %6220 = vmatprep.subr.bf16.mxu0 0
        %6221 = vmatpush2.bf16.msra.mxu0 %v6181
        %6222 = vmatprep.subr.bf16.mxu0 0
        %6223 = vmatpush2.bf16.msra.mxu0 %v6180
        %6224 = vmatprep.subr.bf16.mxu0 0
        %6225 = vmatpush2.bf16.msra.mxu0 %v6179
        %6226 = vmatprep.subr.bf16.mxu0 0
        %6227 = vmatpush2.bf16.msra.mxu0 %v6178
        %6228 = vmatprep.subr.bf16.mxu0 0
        %6229 = vmatpush2.bf16.msra.mxu0 %v6177
        %6230 = vmatprep.subr.bf16.mxu0 0
        %6231 = vmatpush2.bf16.msra.mxu0 %v6176
        %6232 = vmatprep.mubr.bf16.mxu0 %v6062
        %6233 = vmatmul.mubr.bf16.gmra.mxu0 %v6061
        %v6234 = vpop.f32.mrf.mxu0
        %v6235 = vadd.f32 %v6102, %v6234
        %v6236 = vpop.f32.mrf.mxu0
        %v6237 = vpop.f32.mrf.mxu0
        %v6238 = vadd.f32 %v6102, %v6237
        %v6239 = vpop.f32.mrf.mxu0
        %6240 = vmatprep.mubr.bf16.mxu0 %v6064
        %6241 = vmatmul.mubr.bf16.gmra.mxu0 %v6063
        %v6242 = vpop.f32.mrf.mxu0
        %v6243 = vadd.f32 %v6102, %v6242
        %v6244 = vpop.f32.mrf.mxu0
        %v6245 = vpop.f32.mrf.mxu0
        %v6246 = vadd.f32 %v6102, %v6245
        %v6247 = vpop.f32.mrf.mxu0
        %6248 = vdwg.mxu0
        %v6249 = vtanh.pop %v6235
        %v6250 = vtanh.pop %v6238
        %v6251 = vtanh.pop %v6243
        %v6252 = vtanh.pop %v6246
        %6253 = vst [vmem:[%s791] sm:$0xff] %v6249
        %6254 = vst [vmem:[%s791 + $0x8] sm:$0xff] %v6250
        %6255 = vst [vmem:[%s791 + $0x10] sm:$0xff] %v6251
        %6256 = vst [vmem:[%s791 + $0x18] sm:$0xff] %v6252
        %6257 = vst [vmem:[%s798] sm:$0xff] %v3476
        %6258 = vst [vmem:[%s798 + $0x8] sm:$0xff] %v3478
        %6259 = vst [vmem:[%s798 + $0x10] sm:$0xff] %v3480
        %6260 = vst [vmem:[%s798 + $0x18] sm:$0xff] %v3482
        %6261 = vst [vmem:[%s798 + $0x20] sm:$0xff] %v3486
        %6262 = vst [vmem:[%s798 + $0x28] sm:$0xff] %v3488
        %6263 = vst [vmem:[%s798 + $0x30] sm:$0xff] %v3490
        %6264 = vst [vmem:[%s798 + $0x38] sm:$0xff] %v3492
        %s6265 = smul.u32 4, %s37
        %p6266 = scmp.lt.s32.totalorder %s6265, 7
        %s6267 = scalar_select %p6266, %s6265, 7
        %s6268 = smul.addr %s6267, 8
        %s6269 = scalar_lea.vmem %s20, %s6268
        %s6270 = smul.u32 4, %s37
        %p6271 = scmp.lt.s32.totalorder %s6270, 7
        %s6272 = scalar_select %p6271, %s6270, 7
        %s6273 = smul.addr %s6272, 2
        %s6274 = smul.addr %s6273, 8
        %s6275 = scalar_lea.vmem %s21, %s6274
        // Predicated region
        $region129: #{vae_forward.1} parent=99 // pred_check
          %p6276 = pneg %p485
        $region130: #{vae_forward.1} parent=99 // pred_check_branch
          %6278 = sbr.rel (%p6276) target = $region132
        $region131: #{vae_forward.1} parent=99 // pred_region
          %s6279 = smul.u32 4, %s37
        $region132: #{vae_forward.1} parent=99 // pred_fallthru
          _
        // Predicated region
        $region133: #{vae_forward.1} parent=99 // pred_check
          %p6280 = pneg %p511
        $region134: #{vae_forward.1} parent=99 // pred_check_branch
          %6282 = sbr.rel (%p6280) target = $region136
        $region135: #{vae_forward.1} parent=99 // pred_region
          %s6283 = smul.u32 4, %s37
        $region136: #{vae_forward.1} parent=99 // pred_fallthru
          _
      $region100: #{vae_forward.1} parent=5 // pred_fallthru
        _
      %p6284 = scmp.le.s32.totalorder 2, %s32
      // Predicated region
      $region137: #{vae_forward.1} parent=5 // pred_check
        %p6285 = pneg %p6284
      $region138: #{vae_forward.1} parent=5 // pred_check_branch
        %6287 = sbr.rel (%p6285) target = $region140
      $region139: #{vae_forward.1} parent=5 // pred_region
        %s6288 = ssub.s32 %s32, 2
        // Predicated region
        $region141: #{vae_forward.1} parent=139 // pred_check
          %p6289 = pneg %p491
        $region142: #{vae_forward.1} parent=139 // pred_check_branch
          %6291 = sbr.rel (%p6289) target = $region144
        $region143: #{vae_forward.1} parent=139 // pred_region
          %s6292 = smul.u32 4, %s38
          %p6293 = scmp.lt.s32.totalorder %s6292, 7
          %s6294 = scalar_select %p6293, %s6292, 7
          %s6295 = smul.addr %s6294, 8
          %s6296 = scalar_lea.vmem %s20, %s6295
        $region144: #{vae_forward.1} parent=139 // pred_fallthru
          _
        // Predicated region
        $region145: #{vae_forward.1} parent=139 // pred_check
          %p6297 = pneg %p517
        $region146: #{vae_forward.1} parent=139 // pred_check_branch
          %6299 = sbr.rel (%p6297) target = $region148
        $region147: #{vae_forward.1} parent=139 // pred_region
          %s6300 = smul.u32 4, %s38
          %p6301 = scmp.lt.s32.totalorder %s6300, 7
          %s6302 = scalar_select %p6301, %s6300, 7
          %s6303 = smul.addr %s6302, 2
          %s6304 = smul.addr %s6303, 8
          %s6305 = scalar_lea.vmem %s21, %s6304
        $region148: #{vae_forward.1} parent=139 // pred_fallthru
          _
      $region140: #{vae_forward.1} parent=5 // pred_fallthru
        _
    $region6: #{vae_forward.1} parent=1 // loop_footer
      %s36 = sadd.s32 1, %s32
    $region7: #{vae_forward.1} parent=1 // loop_footer_branch
      %31 = sbr.rel target = $region3
    $region8: #{vae_forward.1} parent=1 // loop_exit
      _
    %6306 = vsyncpa [#allocation3], 1
    %s6307 = scalar_lea.sflag [#allocation3], 1
    %6308 = vsyncpa %s6307, 1
    %6309 = vsyncpa [#allocation5], 1
    %6310 = vsyncpa [#allocation8], 1
    %6311 = vsyncpa [#allocation11], 1

</llo_original>
